<compile_context>
chip_gen: v7x
topology: tpu7x:2x2x1
jax: 0.10.0
libtpu: 0.0.40
codegen_flags: <defaults>
</compile_context>

<pallas_src>
import math
import functools

import jax
import jax.numpy as jnp
from jax.experimental import pallas as pl
from jax.experimental.pallas import tpu as pltpu


_ATTN_EPS = 1e-6   # CausalLinearAttention eps
_LN_EPS = 1e-5     # nn.LayerNorm default eps


def _elu_plus_one(x):
    # elu_feature_map: elu(x) + 1.  exp() is clamped so the unselected branch
    # never produces inf (addresses the review's gradient-poisoning concern).
    return jnp.where(x > 0, x + 1.0, jnp.exp(jnp.minimum(x, 0.0)))


def _gelu_tanh(x):
    # TODO(synk): F.gelu defaults to exact erf; tanh approximation used here.
    c = math.sqrt(2.0 / math.pi)
    return 0.5 * x * (1.0 + jnp.tanh(c * (x + 0.044715 * x * x * x)))


def _layer_norm(x, g, b, eps):
    mu = jnp.mean(x, axis=-1, keepdims=True)
    xc = x - mu
    var = jnp.mean(xc * xc, axis=-1, keepdims=True)
    return xc * jax.lax.rsqrt(var + eps) * g + b


# ----------------------------------------------------------------------------
# Fused encoder-layer kernel.
# grid = (batch, L/C); one grid step == one (C, D) chunk of one sequence.
# Chunked prefix-state causal linear attention:
#   out_l = (phi(q_l)·KV_prefix + sum_{s<=l, same chunk} (phi(q_l)·phi(k_s)) v_s)
#           / (phi(q_l)·Ksum_prefix + row-sum of masked intra-chunk scores + eps)
# which is mathematically identical to the PyTorch cumulative-sum formulation.
# ----------------------------------------------------------------------------
def _encoder_layer_kernel(x_ref,
                          wqkv_ref, bqkv_ref, wo_ref, bo_ref,
                          g1_ref, be1_ref,
                          w1_ref, b1_ref, w2_ref, b2_ref,
                          g2_ref, be2_ref,
                          o_ref,
                          kv_ref, ksum_ref, attn_ref,
                          *, n_heads, d_head, eps, ln_eps,
                          compute_dtype, approx_recip):
    C, D = x_ref.shape
    H, dh = n_heads, d_head
    HD = H * dh

    # Reset the carried prefix state at the first chunk of every sequence.
    @pl.when(pl.program_id(1) == 0)
    def _():
        kv_ref[...] = jnp.zeros_like(kv_ref)
        ksum_ref[...] = jnp.zeros_like(ksum_ref)

    x = x_ref[...].astype(jnp.float32)                      # (C, D) f32 residual path

    # Fused Q/K/V projection: one lane-dense (C, D) x (D, 3D) MXU matmul.
    qkv = jnp.dot(x.astype(compute_dtype), wqkv_ref[...],
                  preferred_element_type=jnp.float32) + bqkv_ref[...]
    q = _elu_plus_one(qkv[:, :HD])                          # phi(Q), f32
    k = _elu_plus_one(qkv[:, HD:2 * HD])                    # phi(K), f32
    v = qkv[:, 2 * HD:]                                     # V,      f32

    # Intra-chunk causal mask (chunk boundaries align with global positions).
    row = jax.lax.broadcasted_iota(jnp.int32, (C, C), 0)
    col = jax.lax.broadcasted_iota(jnp.int32, (C, C), 1)
    causal = col <= row

    # Per-head causal linear attention.  H is small; each head's intermediates
    # are retired into the VMEM slab `attn_ref`, bounding register live ranges.
    # TODO(synk): for large H, promote heads to a grid axis.
    for h in range(H):
        qh = q[:, h * dh:(h + 1) * dh]                      # (C, dh)
        kh = k[:, h * dh:(h + 1) * dh]
        vh = v[:, h * dh:(h + 1) * dh]

        # Intra-chunk scores phi(Q) phi(K)^T (no transpose materialized).
        s = jax.lax.dot_general(qh.astype(compute_dtype), kh.astype(compute_dtype),
                                (((1,), (1,)), ((), ())),
                                preferred_element_type=jnp.float32)   # (C, C)
        s = jnp.where(causal, s, 0.0)

        # Numerator: intra-chunk part + carried prefix KV state (f32).
        num = jnp.dot(s.astype(compute_dtype), vh.astype(compute_dtype),
                      preferred_element_type=jnp.float32)             # (C, dh)
        num = num + jnp.dot(qh, kv_ref[h], preferred_element_type=jnp.float32)

        # Denominator: intra-chunk row-sum + carried key-sum prefix (f32).
        z = jnp.sum(s, axis=-1, keepdims=True)
        z = z + jnp.sum(qh * ksum_ref[h], axis=-1, keepdims=True)
        oh = num * pl.reciprocal(z + eps, approx=approx_recip)

        # Lane-dense per-head output slab -> single wide output projection.
        attn_ref[:, h * dh:(h + 1) * dh] = oh

        # Update the carried prefix state with this chunk's keys / values.
        kv_ref[h] = kv_ref[h] + jax.lax.dot_general(
            kh, vh, (((0,), (0,)), ((), ())), preferred_element_type=jnp.float32)
        ksum_ref[h] = ksum_ref[h] + jnp.sum(kh, axis=0, keepdims=True)

    # Output projection: one lane-dense (C, D) x (D, D) matmul.
    attn = jnp.dot(attn_ref[...].astype(compute_dtype), wo_ref[...],
                   preferred_element_type=jnp.float32) + bo_ref[...]

    # Residual + LayerNorm1 (f32).
    x1 = _layer_norm(x + attn, g1_ref[...], be1_ref[...], ln_eps)

    # FFN (gelu) + residual + LayerNorm2.
    h1 = jnp.dot(x1.astype(compute_dtype), w1_ref[...],
                 preferred_element_type=jnp.float32) + b1_ref[...]
    h1 = _gelu_tanh(h1)
    h2 = jnp.dot(h1.astype(compute_dtype), w2_ref[...],
                 preferred_element_type=jnp.float32) + b2_ref[...]
    o_ref[...] = _layer_norm(x1 + h2, g2_ref[...], be2_ref[...],
                             ln_eps).astype(o_ref.dtype)


def _resident_spec(shape):
    nd = len(shape)
    return pl.BlockSpec(shape, lambda n, c, _nd=nd: (0,) * _nd)


def encoder_layer_forward(p, x, *, n_heads, compute_dtype=jnp.bfloat16,
                          seq_chunk=256):
    """One fused TransformerEncoderLayer.  x: (N, L, D) -> (N, L, D)."""
    N, L, D = x.shape
    H = n_heads
    assert D % H == 0
    dh = D // H
    Dff = p["w1"].shape[1]

    # Sequence-chunk size: multiple of 8 dividing L (else fall back to full L).
    C = min(seq_chunk, L)
    if L % C != 0 or C % 8 != 0:
        C = L
    n_chunks = L // C

    # Matmul weights in compute dtype (bf16 by default) at the call boundary;
    # biases / LayerNorm params stay f32 (applied after f32 accumulation).
    consts = (p["wqkv"].astype(compute_dtype), p["bqkv"],
              p["wo"].astype(compute_dtype), p["bo"],
              p["g1"], p["be1"],
              p["w1"].astype(compute_dtype), p["b1"],
              p["w2"].astype(compute_dtype), p["b2"],
              p["g2"], p["be2"])

    approx_recip = jnp.dtype(compute_dtype) != jnp.dtype(jnp.float32)
    kernel = functools.partial(
        _encoder_layer_kernel, n_heads=H, d_head=dh,
        eps=_ATTN_EPS, ln_eps=_LN_EPS,
        compute_dtype=compute_dtype, approx_recip=approx_recip)

    in_specs = [pl.BlockSpec((None, C, D), lambda n, c: (n, c, 0))]
    in_specs += [_resident_spec(w.shape) for w in consts]

    # Explicit VMEM budget: resident weights (BlockSpec may double-buffer),
    # pipelined x/out chunks, largest per-chunk intermediate, plus headroom.
    weight_bytes = sum(int(w.size) * w.dtype.itemsize for w in consts)
    chunk_bytes = C * max(3 * D, Dff) * 4
    vmem_limit = int(min(max(2 * weight_bytes + 8 * chunk_bytes + (8 << 20),
                             32 << 20),
                         64 << 20))   # stay within v7x's 64 MiB physical VMEM

    return pl.pallas_call(
        kernel,
        out_shape=jax.ShapeDtypeStruct((N, L, D), x.dtype),
        grid=(N, n_chunks),
        in_specs=in_specs,
        out_specs=pl.BlockSpec((None, C, D), lambda n, c: (n, c, 0)),
        scratch_shapes=[
            pltpu.VMEM((H, dh, dh), jnp.float32),   # per-head KV prefix state
            pltpu.VMEM((H, 1, dh), jnp.float32),    # per-head key-sum prefix
            pltpu.VMEM((C, H * dh), jnp.float32),   # per-head output slab
        ],
        compiler_params=pltpu.CompilerParams(
            dimension_semantics=("parallel", "arbitrary"),
            vmem_limit_bytes=vmem_limit),
    )(x, *consts)


def causal_linear_transformer_encoder(params, x, *, compute_dtype=jnp.bfloat16,
                                      seq_chunk=256):
    for p in params["layers"]:
        x = encoder_layer_forward(p, x, n_heads=params["n_heads"],
                                  compute_dtype=compute_dtype,
                                  seq_chunk=seq_chunk)
    return x


# ----------------------------------------------------------------------------
# Parameter init (mimics nn.Linear / nn.LayerNorm defaults; Q/K/V are packed
# column-wise into one (D, 3D) matrix, matching torch's head layout).
# ----------------------------------------------------------------------------
def init_encoder_params(key, hidden_channels, filter_channels, n_heads, n_layers,
                        dtype=jnp.float32):
    D, Dff, H = hidden_channels, filter_channels, n_heads
    assert D % H == 0

    def unif(k, shape, fan_in):
        bound = 1.0 / math.sqrt(fan_in)
        return jax.random.uniform(k, shape, dtype, -bound, bound)

    layers = []
    for _ in range(n_layers):
        key, sub = jax.random.split(key)
        ks = jax.random.split(sub, 8)
        layers.append({
            "wqkv": unif(ks[0], (D, 3 * D), D),
            "bqkv": unif(ks[1], (1, 3 * D), D),
            "wo": unif(ks[2], (D, D), D),
            "bo": unif(ks[3], (1, D), D),
            "g1": jnp.ones((1, D), dtype), "be1": jnp.zeros((1, D), dtype),
            "w1": unif(ks[4], (D, Dff), D), "b1": unif(ks[5], (1, Dff), D),
            "w2": unif(ks[6], (Dff, D), Dff), "b2": unif(ks[7], (1, D), Dff),
            "g2": jnp.ones((1, D), dtype), "be2": jnp.zeros((1, D), dtype),
        })
    return {"layers": layers, "n_heads": n_heads}


# ----------------------------------------------------------------------------
# Pure-JAX reference (mirrors the PyTorch cumulative-sum formulation).
# ----------------------------------------------------------------------------
def _reference_layer(p, x, n_heads):
    N, L, D = x.shape
    H = n_heads
    dh = D // H
    qkv = x @ p["wqkv"] + p["bqkv"]
    Q = _elu_plus_one(qkv[..., :D]).reshape(N, L, H, dh)
    K = _elu_plus_one(qkv[..., D:2 * D]).reshape(N, L, H, dh)
    V = qkv[..., 2 * D:].reshape(N, L, H, dh)
    Kcum = jnp.cumsum(K, axis=1)
    Z = 1.0 / (jnp.einsum("nlhi,nlhi->nlh", Q, Kcum) + _ATTN_EPS)
    kv = jnp.cumsum(K[..., :, None] * V[..., None, :], axis=1)   # (N,L,H,dh,dh)
    out = jnp.einsum("nlhi,nlhid->nlhd", Q, kv) * Z[..., None]
    attn = out.reshape(N, L, D) @ p["wo"] + p["bo"]
    x1 = _layer_norm(x + attn, p["g1"], p["be1"], _LN_EPS)
    h1 = _gelu_tanh(x1 @ p["w1"] + p["b1"])
    x2 = x1 + h1 @ p["w2"] + p["b2"]
    return _layer_norm(x2, p["g2"], p["be2"], _LN_EPS)


def reference_forward(params, x):
    with jax.default_matmul_precision("float32"):
        for p in params["layers"]:
            x = _reference_layer(p, x, params["n_heads"])
    return x


# ----------------------------------------------------------------------------
if __name__ == "__main__":
    # Small shapes consistent with the module; L=64 with seq_chunk=16 exercises
    # the carried prefix-state path (4 chunks per sequence).
    N, L = 2, 64
    hidden_channels = 32     # d_model
    filter_channels = 128    # d_ff
    n_heads = 4
    n_layers = 2

    root = jax.random.PRNGKey(0)
    k_params, k_x = jax.random.split(root)

    params = init_encoder_params(k_params, hidden_channels, filter_channels,
                                 n_heads, n_layers)
    x = jax.random.normal(k_x, (N, L, hidden_channels), jnp.float32)

    ref = reference_forward(params, x)

    # Exact-semantics check: f32 MXU operands + exact reciprocal.
    out_f32 = causal_linear_transformer_encoder(
        params, x, compute_dtype=jnp.float32, seq_chunk=16)
    out_f32 = jax.block_until_ready(out_f32)
    assert out_f32.shape == (N, L, hidden_channels), out_f32.shape
    err_f32 = float(jnp.max(jnp.abs(out_f32 - ref)))
    assert err_f32 < 5e-4, err_f32

    # Performance configuration: bf16 MXU operands + approx reciprocal (EUP).
    out_bf16 = causal_linear_transformer_encoder(
        params, x, compute_dtype=jnp.bfloat16, seq_chunk=16)
    out_bf16 = jax.block_until_ready(out_bf16)
    assert out_bf16.shape == (N, L, hidden_channels), out_bf16.shape
    err_bf16 = float(jnp.max(jnp.abs(out_bf16 - ref)))
    assert err_bf16 < 0.25, err_bf16

    print("KERNEL_OK")
</pallas_src>

<mosaic_0001>
module attributes {stable_mosaic.version = 11 : i64} {
  func.func @_encoder_layer_kernel(%arg0: i32, %arg1: i32, %arg2: memref<1x16x32xf32, #tpu.memory_space<vmem>>, %arg3: memref<32x96xf32, #tpu.memory_space<vmem>>, %arg4: memref<1x96xf32, #tpu.memory_space<vmem>>, %arg5: memref<32x32xf32, #tpu.memory_space<vmem>>, %arg6: memref<1x32xf32, #tpu.memory_space<vmem>>, %arg7: memref<1x32xf32, #tpu.memory_space<vmem>>, %arg8: memref<1x32xf32, #tpu.memory_space<vmem>>, %arg9: memref<32x128xf32, #tpu.memory_space<vmem>>, %arg10: memref<1x128xf32, #tpu.memory_space<vmem>>, %arg11: memref<128x32xf32, #tpu.memory_space<vmem>>, %arg12: memref<1x32xf32, #tpu.memory_space<vmem>>, %arg13: memref<1x32xf32, #tpu.memory_space<vmem>>, %arg14: memref<1x32xf32, #tpu.memory_space<vmem>>, %arg15: memref<1x16x32xf32, #tpu.memory_space<vmem>>, %arg16: memref<4x8x8xf32, #tpu.memory_space<vmem>>, %arg17: memref<4x1x8xf32, #tpu.memory_space<vmem>>, %arg18: memref<16x32xf32, #tpu.memory_space<vmem>>) attributes {dimension_semantics = [#tpu.dimension_semantics<parallel>, #tpu.dimension_semantics<arbitrary>], iteration_bounds = array<i64: 2, 4>, scalar_prefetch = 0 : i64, scratch_operands = 3 : i64, tpu.core_type = #tpu.core_type<tc>, window_params = [{transform_indices = @transform_0, window_bounds = array<i64: 1, 16, 32>}, {pipeline_mode = #tpu.pipeline_mode<synchronous>, transform_indices = @transform_1, window_bounds = array<i64: 32, 96>}, {pipeline_mode = #tpu.pipeline_mode<synchronous>, transform_indices = @transform_2, window_bounds = array<i64: 1, 96>}, {pipeline_mode = #tpu.pipeline_mode<synchronous>, transform_indices = @transform_3, window_bounds = array<i64: 32, 32>}, {pipeline_mode = #tpu.pipeline_mode<synchronous>, transform_indices = @transform_4, window_bounds = array<i64: 1, 32>}, {pipeline_mode = #tpu.pipeline_mode<synchronous>, transform_indices = @transform_5, window_bounds = array<i64: 1, 32>}, {pipeline_mode = #tpu.pipeline_mode<synchronous>, transform_indices = @transform_6, window_bounds = array<i64: 1, 32>}, {pipeline_mode = #tpu.pipeline_mode<synchronous>, transform_indices = @transform_7, window_bounds = array<i64: 32, 128>}, {pipeline_mode = #tpu.pipeline_mode<synchronous>, transform_indices = @transform_8, window_bounds = array<i64: 1, 128>}, {pipeline_mode = #tpu.pipeline_mode<synchronous>, transform_indices = @transform_9, window_bounds = array<i64: 128, 32>}, {pipeline_mode = #tpu.pipeline_mode<synchronous>, transform_indices = @transform_10, window_bounds = array<i64: 1, 32>}, {pipeline_mode = #tpu.pipeline_mode<synchronous>, transform_indices = @transform_11, window_bounds = array<i64: 1, 32>}, {pipeline_mode = #tpu.pipeline_mode<synchronous>, transform_indices = @transform_12, window_bounds = array<i64: 1, 32>}, {transform_indices = @transform_13, window_bounds = array<i64: 1, 16, 32>}]} {
    %c0_i32 = arith.constant 0 : i32
    %0 = arith.cmpi eq, %arg1, %c0_i32 : i32
    %1 = arith.extui %0 : i1 to i32
    %c0_i32_0 = arith.constant 0 : i32
    %2 = arith.cmpi ne, %1, %c0_i32_0 : i32
    scf.if %2 {
      %cst_165 = arith.constant 0.000000e+00 : f32
      %274 = vector.broadcast %cst_165 : f32 to vector<4x8x8xf32>
      %c0_166 = arith.constant 0 : index
      %c0_167 = arith.constant 0 : index
      %c0_168 = arith.constant 0 : index
      %275 = vector.load %arg16[%c0_166, %c0_167, %c0_168] : memref<4x8x8xf32, #tpu.memory_space<vmem>>, vector<4x8x8xf32>
      tpu.vector_store %arg16[%c0_166, %c0_167, %c0_168], %274 {strides = array<i32>} : memref<4x8x8xf32, #tpu.memory_space<vmem>>, vector<4x8x8xf32>,
      %cst_169 = arith.constant 0.000000e+00 : f32
      %276 = vector.broadcast %cst_169 : f32 to vector<4x1x8xf32>
      %c0_170 = arith.constant 0 : index
      %c0_171 = arith.constant 0 : index
      %c0_172 = arith.constant 0 : index
      %277 = vector.load %arg17[%c0_170, %c0_171, %c0_172] : memref<4x1x8xf32, #tpu.memory_space<vmem>>, vector<4x1x8xf32>
      tpu.vector_store %arg17[%c0_170, %c0_171, %c0_172], %276 {strides = array<i32>} : memref<4x1x8xf32, #tpu.memory_space<vmem>>, vector<4x1x8xf32>,
    } else {
    }
    %c0 = arith.constant 0 : index
    %c0_1 = arith.constant 0 : index
    %c0_2 = arith.constant 0 : index
    %3 = vector.load %arg2[%c0, %c0_1, %c0_2] : memref<1x16x32xf32, #tpu.memory_space<vmem>>, vector<1x16x32xf32>
    %4 = vector.shape_cast %3 : vector<1x16x32xf32> to vector<16x32xf32>
    %c0_3 = arith.constant 0 : index
    %c0_4 = arith.constant 0 : index
    %5 = vector.load %arg3[%c0_3, %c0_4] : memref<32x96xf32, #tpu.memory_space<vmem>>, vector<32x96xf32>
    %cst = arith.constant dense<0.000000e+00> : vector<16x96xf32>
    %6 = tpu.matmul %4, %5, %cst {dimension_numbers = #tpu.dot_dimension_numbers<[1], [0], [0], [1], [0, 0, 1, 1], [], []>} : vector<16x32xf32>, vector<32x96xf32>, vector<16x96xf32> -> vector<16x96xf32>
    %c0_5 = arith.constant 0 : index
    %c0_6 = arith.constant 0 : index
    %7 = vector.load %arg4[%c0_5, %c0_6] : memref<1x96xf32, #tpu.memory_space<vmem>>, vector<1x96xf32>
    %8 = vector.broadcast %7 : vector<1x96xf32> to vector<16x96xf32>
    %9 = arith.addf %6, %8 : vector<16x96xf32>
    %10 = vector.extract_strided_slice %9 {offsets = [0, 0], sizes = [16, 32], strides = [1, 1]} : vector<16x96xf32> to vector<16x32xf32>
    %cst_7 = arith.constant 0.000000e+00 : f32
    %11 = vector.broadcast %cst_7 : f32 to vector<16x32xf32>
    %12 = arith.cmpf ogt, %10, %11 : vector<16x32xf32>
    %cst_8 = arith.constant 1.000000e+00 : f32
    %13 = vector.broadcast %cst_8 : f32 to vector<16x32xf32>
    %14 = arith.addf %10, %13 : vector<16x32xf32>
    %cst_9 = arith.constant 0.000000e+00 : f32
    %15 = vector.broadcast %cst_9 : f32 to vector<16x32xf32>
    %16 = arith.minimumf %10, %15 : vector<16x32xf32>
    %17 = math.exp %16 : vector<16x32xf32>
    %18 = arith.select %12, %14, %17 : vector<16x32xi1>, vector<16x32xf32>
    %19 = vector.extract_strided_slice %9 {offsets = [0, 32], sizes = [16, 32], strides = [1, 1]} : vector<16x96xf32> to vector<16x32xf32>
    %cst_10 = arith.constant 0.000000e+00 : f32
    %20 = vector.broadcast %cst_10 : f32 to vector<16x32xf32>
    %21 = arith.cmpf ogt, %19, %20 : vector<16x32xf32>
    %cst_11 = arith.constant 1.000000e+00 : f32
    %22 = vector.broadcast %cst_11 : f32 to vector<16x32xf32>
    %23 = arith.addf %19, %22 : vector<16x32xf32>
    %cst_12 = arith.constant 0.000000e+00 : f32
    %24 = vector.broadcast %cst_12 : f32 to vector<16x32xf32>
    %25 = arith.minimumf %19, %24 : vector<16x32xf32>
    %26 = math.exp %25 : vector<16x32xf32>
    %27 = arith.select %21, %23, %26 : vector<16x32xi1>, vector<16x32xf32>
    %28 = vector.extract_strided_slice %9 {offsets = [0, 64], sizes = [16, 32], strides = [1, 1]} : vector<16x96xf32> to vector<16x32xf32>
    %29 = tpu.iota {dimensions = array<i32: 0>} : vector<16x16xi32>
    %30 = tpu.iota {dimensions = array<i32: 1>} : vector<16x16xi32>
    %31 = arith.cmpi sle, %30, %29 : vector<16x16xi32>
    %32 = vector.extract_strided_slice %18 {offsets = [0, 0], sizes = [16, 8], strides = [1, 1]} : vector<16x32xf32> to vector<16x8xf32>
    %33 = vector.extract_strided_slice %27 {offsets = [0, 0], sizes = [16, 8], strides = [1, 1]} : vector<16x32xf32> to vector<16x8xf32>
    %34 = vector.extract_strided_slice %28 {offsets = [0, 0], sizes = [16, 8], strides = [1, 1]} : vector<16x32xf32> to vector<16x8xf32>
    %cst_13 = arith.constant dense<0.000000e+00> : vector<16x16xf32>
    %35 = tpu.matmul %32, %33, %cst_13 {dimension_numbers = #tpu.dot_dimension_numbers<[1], [1], [0], [0], [0, 0, 1, 0], [], []>} : vector<16x8xf32>, vector<16x8xf32>, vector<16x16xf32> -> vector<16x16xf32>
    %cst_14 = arith.constant 0.000000e+00 : f32
    %36 = vector.broadcast %cst_14 : f32 to vector<16x16xf32>
    %37 = arith.select %31, %35, %36 : vector<16x16xi1>, vector<16x16xf32>
    %cst_15 = arith.constant dense<0.000000e+00> : vector<16x8xf32>
    %38 = tpu.matmul %37, %34, %cst_15 {dimension_numbers = #tpu.dot_dimension_numbers<[1], [0], [0], [1], [0, 0, 1, 1], [], []>} : vector<16x16xf32>, vector<16x8xf32>, vector<16x8xf32> -> vector<16x8xf32>
    %c0_16 = arith.constant 0 : index
    %c0_17 = arith.constant 0 : index
    %c0_18 = arith.constant 0 : index
    %39 = vector.load %arg16[%c0_16, %c0_17, %c0_18] : memref<4x8x8xf32, #tpu.memory_space<vmem>>, vector<1x8x8xf32>
    %40 = vector.shape_cast %39 : vector<1x8x8xf32> to vector<8x8xf32>
    %cst_19 = arith.constant dense<0.000000e+00> : vector<16x8xf32>
    %41 = tpu.matmul %32, %40, %cst_19 {dimension_numbers = #tpu.dot_dimension_numbers<[1], [0], [0], [1], [0, 0, 1, 1], [], []>} : vector<16x8xf32>, vector<8x8xf32>, vector<16x8xf32> -> vector<16x8xf32>
    %42 = arith.addf %38, %41 : vector<16x8xf32>
    %cst_20 = arith.constant dense<0.000000e+00> : vector<16xf32>
    %43 = vector.multi_reduction <add>, %37, %cst_20 [1] : vector<16x16xf32> to vector<16xf32>
    %44 = vector.shape_cast %43 : vector<16xf32> to vector<16x1xf32>
    %c0_21 = arith.constant 0 : index
    %c0_22 = arith.constant 0 : index
    %c0_23 = arith.constant 0 : index
    %45 = vector.load %arg17[%c0_21, %c0_22, %c0_23] : memref<4x1x8xf32, #tpu.memory_space<vmem>>, vector<1x1x8xf32>
    %46 = vector.shape_cast %45 : vector<1x1x8xf32> to vector<1x8xf32>
    %47 = vector.broadcast %46 : vector<1x8xf32> to vector<16x8xf32>
    %48 = arith.mulf %32, %47 : vector<16x8xf32>
    %cst_24 = arith.constant dense<0.000000e+00> : vector<16xf32>
    %49 = vector.multi_reduction <add>, %48, %cst_24 [1] : vector<16x8xf32> to vector<16xf32>
    %50 = vector.shape_cast %49 : vector<16xf32> to vector<16x1xf32>
    %51 = arith.addf %44, %50 : vector<16x1xf32>
    %cst_25 = arith.constant 9.99999997E-7 : f32
    %52 = vector.broadcast %cst_25 : f32 to vector<16x1xf32>
    %53 = arith.addf %51, %52 : vector<16x1xf32>
    %54 = tpu.reciprocal %53 : vector<16x1xf32> -> vector<16x1xf32>
    %55 = vector.broadcast %54 : vector<16x1xf32> to vector<16x8xf32>
    %56 = arith.mulf %42, %55 : vector<16x8xf32>
    %c0_26 = arith.constant 0 : index
    %c0_27 = arith.constant 0 : index
    %57 = vector.load %arg18[%c0_26, %c0_27] : memref<16x32xf32, #tpu.memory_space<vmem>>, vector<16x8xf32>
    tpu.vector_store %arg18[%c0_26, %c0_27], %56 {strides = array<i32>} : memref<16x32xf32, #tpu.memory_space<vmem>>, vector<16x8xf32>,
    %c0_28 = arith.constant 0 : index
    %c0_29 = arith.constant 0 : index
    %c0_30 = arith.constant 0 : index
    %58 = vector.load %arg16[%c0_28, %c0_29, %c0_30] : memref<4x8x8xf32, #tpu.memory_space<vmem>>, vector<1x8x8xf32>
    %59 = vector.shape_cast %58 : vector<1x8x8xf32> to vector<8x8xf32>
    %cst_31 = arith.constant dense<0.000000e+00> : vector<8x8xf32>
    %60 = tpu.matmul %33, %34, %cst_31 {dimension_numbers = #tpu.dot_dimension_numbers<[0], [0], [1], [1], [0, 1, 1, 1], [], []>} : vector<16x8xf32>, vector<16x8xf32>, vector<8x8xf32> -> vector<8x8xf32>
    %61 = arith.addf %59, %60 : vector<8x8xf32>
    %c0_32 = arith.constant 0 : index
    %c0_33 = arith.constant 0 : index
    %c0_34 = arith.constant 0 : index
    %62 = vector.load %arg16[%c0_32, %c0_33, %c0_34] : memref<4x8x8xf32, #tpu.memory_space<vmem>>, vector<1x8x8xf32>
    %63 = vector.shape_cast %62 : vector<1x8x8xf32> to vector<8x8xf32>
    %64 = vector.shape_cast %61 : vector<8x8xf32> to vector<1x8x8xf32>
    tpu.vector_store %arg16[%c0_32, %c0_33, %c0_34], %64 {strides = array<i32>} : memref<4x8x8xf32, #tpu.memory_space<vmem>>, vector<1x8x8xf32>,
    %c0_35 = arith.constant 0 : index
    %c0_36 = arith.constant 0 : index
    %c0_37 = arith.constant 0 : index
    %65 = vector.load %arg17[%c0_35, %c0_36, %c0_37] : memref<4x1x8xf32, #tpu.memory_space<vmem>>, vector<1x1x8xf32>
    %66 = vector.shape_cast %65 : vector<1x1x8xf32> to vector<1x8xf32>
    %cst_38 = arith.constant dense<0.000000e+00> : vector<8xf32>
    %67 = vector.multi_reduction <add>, %33, %cst_38 [0] : vector<16x8xf32> to vector<8xf32>
    %68 = vector.shape_cast %67 : vector<8xf32> to vector<1x8xf32>
    %69 = arith.addf %66, %68 : vector<1x8xf32>
    %c0_39 = arith.constant 0 : index
    %c0_40 = arith.constant 0 : index
    %c0_41 = arith.constant 0 : index
    %70 = vector.load %arg17[%c0_39, %c0_40, %c0_41] : memref<4x1x8xf32, #tpu.memory_space<vmem>>, vector<1x1x8xf32>
    %71 = vector.shape_cast %70 : vector<1x1x8xf32> to vector<1x8xf32>
    %72 = vector.shape_cast %69 : vector<1x8xf32> to vector<1x1x8xf32>
    tpu.vector_store %arg17[%c0_39, %c0_40, %c0_41], %72 {strides = array<i32>} : memref<4x1x8xf32, #tpu.memory_space<vmem>>, vector<1x1x8xf32>,
    %73 = vector.extract_strided_slice %18 {offsets = [0, 8], sizes = [16, 8], strides = [1, 1]} : vector<16x32xf32> to vector<16x8xf32>
    %74 = vector.extract_strided_slice %27 {offsets = [0, 8], sizes = [16, 8], strides = [1, 1]} : vector<16x32xf32> to vector<16x8xf32>
    %75 = vector.extract_strided_slice %28 {offsets = [0, 8], sizes = [16, 8], strides = [1, 1]} : vector<16x32xf32> to vector<16x8xf32>
    %cst_42 = arith.constant dense<0.000000e+00> : vector<16x16xf32>
    %76 = tpu.matmul %73, %74, %cst_42 {dimension_numbers = #tpu.dot_dimension_numbers<[1], [1], [0], [0], [0, 0, 1, 0], [], []>} : vector<16x8xf32>, vector<16x8xf32>, vector<16x16xf32> -> vector<16x16xf32>
    %cst_43 = arith.constant 0.000000e+00 : f32
    %77 = vector.broadcast %cst_43 : f32 to vector<16x16xf32>
    %78 = arith.select %31, %76, %77 : vector<16x16xi1>, vector<16x16xf32>
    %cst_44 = arith.constant dense<0.000000e+00> : vector<16x8xf32>
    %79 = tpu.matmul %78, %75, %cst_44 {dimension_numbers = #tpu.dot_dimension_numbers<[1], [0], [0], [1], [0, 0, 1, 1], [], []>} : vector<16x16xf32>, vector<16x8xf32>, vector<16x8xf32> -> vector<16x8xf32>
    %c1 = arith.constant 1 : index
    %c0_45 = arith.constant 0 : index
    %c0_46 = arith.constant 0 : index
    %80 = vector.load %arg16[%c1, %c0_45, %c0_46] : memref<4x8x8xf32, #tpu.memory_space<vmem>>, vector<1x8x8xf32>
    %81 = vector.shape_cast %80 : vector<1x8x8xf32> to vector<8x8xf32>
    %cst_47 = arith.constant dense<0.000000e+00> : vector<16x8xf32>
    %82 = tpu.matmul %73, %81, %cst_47 {dimension_numbers = #tpu.dot_dimension_numbers<[1], [0], [0], [1], [0, 0, 1, 1], [], []>} : vector<16x8xf32>, vector<8x8xf32>, vector<16x8xf32> -> vector<16x8xf32>
    %83 = arith.addf %79, %82 : vector<16x8xf32>
    %cst_48 = arith.constant dense<0.000000e+00> : vector<16xf32>
    %84 = vector.multi_reduction <add>, %78, %cst_48 [1] : vector<16x16xf32> to vector<16xf32>
    %85 = vector.shape_cast %84 : vector<16xf32> to vector<16x1xf32>
    %c1_49 = arith.constant 1 : index
    %c0_50 = arith.constant 0 : index
    %c0_51 = arith.constant 0 : index
    %86 = vector.load %arg17[%c1_49, %c0_50, %c0_51] : memref<4x1x8xf32, #tpu.memory_space<vmem>>, vector<1x1x8xf32>
    %87 = vector.shape_cast %86 : vector<1x1x8xf32> to vector<1x8xf32>
    %88 = vector.broadcast %87 : vector<1x8xf32> to vector<16x8xf32>
    %89 = arith.mulf %73, %88 : vector<16x8xf32>
    %cst_52 = arith.constant dense<0.000000e+00> : vector<16xf32>
    %90 = vector.multi_reduction <add>, %89, %cst_52 [1] : vector<16x8xf32> to vector<16xf32>
    %91 = vector.shape_cast %90 : vector<16xf32> to vector<16x1xf32>
    %92 = arith.addf %85, %91 : vector<16x1xf32>
    %cst_53 = arith.constant 9.99999997E-7 : f32
    %93 = vector.broadcast %cst_53 : f32 to vector<16x1xf32>
    %94 = arith.addf %92, %93 : vector<16x1xf32>
    %95 = tpu.reciprocal %94 : vector<16x1xf32> -> vector<16x1xf32>
    %96 = vector.broadcast %95 : vector<16x1xf32> to vector<16x8xf32>
    %97 = arith.mulf %83, %96 : vector<16x8xf32>
    %c0_54 = arith.constant 0 : index
    %c8 = arith.constant 8 : index
    %98 = vector.load %arg18[%c0_54, %c8] : memref<16x32xf32, #tpu.memory_space<vmem>>, vector<16x8xf32>
    tpu.vector_store %arg18[%c0_54, %c8], %97 {strides = array<i32>} : memref<16x32xf32, #tpu.memory_space<vmem>>, vector<16x8xf32>,
    %c1_55 = arith.constant 1 : index
    %c0_56 = arith.constant 0 : index
    %c0_57 = arith.constant 0 : index
    %99 = vector.load %arg16[%c1_55, %c0_56, %c0_57] : memref<4x8x8xf32, #tpu.memory_space<vmem>>, vector<1x8x8xf32>
    %100 = vector.shape_cast %99 : vector<1x8x8xf32> to vector<8x8xf32>
    %cst_58 = arith.constant dense<0.000000e+00> : vector<8x8xf32>
    %101 = tpu.matmul %74, %75, %cst_58 {dimension_numbers = #tpu.dot_dimension_numbers<[0], [0], [1], [1], [0, 1, 1, 1], [], []>} : vector<16x8xf32>, vector<16x8xf32>, vector<8x8xf32> -> vector<8x8xf32>
    %102 = arith.addf %100, %101 : vector<8x8xf32>
    %c1_59 = arith.constant 1 : index
    %c0_60 = arith.constant 0 : index
    %c0_61 = arith.constant 0 : index
    %103 = vector.load %arg16[%c1_59, %c0_60, %c0_61] : memref<4x8x8xf32, #tpu.memory_space<vmem>>, vector<1x8x8xf32>
    %104 = vector.shape_cast %103 : vector<1x8x8xf32> to vector<8x8xf32>
    %105 = vector.shape_cast %102 : vector<8x8xf32> to vector<1x8x8xf32>
    tpu.vector_store %arg16[%c1_59, %c0_60, %c0_61], %105 {strides = array<i32>} : memref<4x8x8xf32, #tpu.memory_space<vmem>>, vector<1x8x8xf32>,
    %c1_62 = arith.constant 1 : index
    %c0_63 = arith.constant 0 : index
    %c0_64 = arith.constant 0 : index
    %106 = vector.load %arg17[%c1_62, %c0_63, %c0_64] : memref<4x1x8xf32, #tpu.memory_space<vmem>>, vector<1x1x8xf32>
    %107 = vector.shape_cast %106 : vector<1x1x8xf32> to vector<1x8xf32>
    %cst_65 = arith.constant dense<0.000000e+00> : vector<8xf32>
    %108 = vector.multi_reduction <add>, %74, %cst_65 [0] : vector<16x8xf32> to vector<8xf32>
    %109 = vector.shape_cast %108 : vector<8xf32> to vector<1x8xf32>
    %110 = arith.addf %107, %109 : vector<1x8xf32>
    %c1_66 = arith.constant 1 : index
    %c0_67 = arith.constant 0 : index
    %c0_68 = arith.constant 0 : index
    %111 = vector.load %arg17[%c1_66, %c0_67, %c0_68] : memref<4x1x8xf32, #tpu.memory_space<vmem>>, vector<1x1x8xf32>
    %112 = vector.shape_cast %111 : vector<1x1x8xf32> to vector<1x8xf32>
    %113 = vector.shape_cast %110 : vector<1x8xf32> to vector<1x1x8xf32>
    tpu.vector_store %arg17[%c1_66, %c0_67, %c0_68], %113 {strides = array<i32>} : memref<4x1x8xf32, #tpu.memory_space<vmem>>, vector<1x1x8xf32>,
    %114 = vector.extract_strided_slice %18 {offsets = [0, 16], sizes = [16, 8], strides = [1, 1]} : vector<16x32xf32> to vector<16x8xf32>
    %115 = vector.extract_strided_slice %27 {offsets = [0, 16], sizes = [16, 8], strides = [1, 1]} : vector<16x32xf32> to vector<16x8xf32>
    %116 = vector.extract_strided_slice %28 {offsets = [0, 16], sizes = [16, 8], strides = [1, 1]} : vector<16x32xf32> to vector<16x8xf32>
    %cst_69 = arith.constant dense<0.000000e+00> : vector<16x16xf32>
    %117 = tpu.matmul %114, %115, %cst_69 {dimension_numbers = #tpu.dot_dimension_numbers<[1], [1], [0], [0], [0, 0, 1, 0], [], []>} : vector<16x8xf32>, vector<16x8xf32>, vector<16x16xf32> -> vector<16x16xf32>
    %cst_70 = arith.constant 0.000000e+00 : f32
    %118 = vector.broadcast %cst_70 : f32 to vector<16x16xf32>
    %119 = arith.select %31, %117, %118 : vector<16x16xi1>, vector<16x16xf32>
    %cst_71 = arith.constant dense<0.000000e+00> : vector<16x8xf32>
    %120 = tpu.matmul %119, %116, %cst_71 {dimension_numbers = #tpu.dot_dimension_numbers<[1], [0], [0], [1], [0, 0, 1, 1], [], []>} : vector<16x16xf32>, vector<16x8xf32>, vector<16x8xf32> -> vector<16x8xf32>
    %c2 = arith.constant 2 : index
    %c0_72 = arith.constant 0 : index
    %c0_73 = arith.constant 0 : index
    %121 = vector.load %arg16[%c2, %c0_72, %c0_73] : memref<4x8x8xf32, #tpu.memory_space<vmem>>, vector<1x8x8xf32>
    %122 = vector.shape_cast %121 : vector<1x8x8xf32> to vector<8x8xf32>
    %cst_74 = arith.constant dense<0.000000e+00> : vector<16x8xf32>
    %123 = tpu.matmul %114, %122, %cst_74 {dimension_numbers = #tpu.dot_dimension_numbers<[1], [0], [0], [1], [0, 0, 1, 1], [], []>} : vector<16x8xf32>, vector<8x8xf32>, vector<16x8xf32> -> vector<16x8xf32>
    %124 = arith.addf %120, %123 : vector<16x8xf32>
    %cst_75 = arith.constant dense<0.000000e+00> : vector<16xf32>
    %125 = vector.multi_reduction <add>, %119, %cst_75 [1] : vector<16x16xf32> to vector<16xf32>
    %126 = vector.shape_cast %125 : vector<16xf32> to vector<16x1xf32>
    %c2_76 = arith.constant 2 : index
    %c0_77 = arith.constant 0 : index
    %c0_78 = arith.constant 0 : index
    %127 = vector.load %arg17[%c2_76, %c0_77, %c0_78] : memref<4x1x8xf32, #tpu.memory_space<vmem>>, vector<1x1x8xf32>
    %128 = vector.shape_cast %127 : vector<1x1x8xf32> to vector<1x8xf32>
    %129 = vector.broadcast %128 : vector<1x8xf32> to vector<16x8xf32>
    %130 = arith.mulf %114, %129 : vector<16x8xf32>
    %cst_79 = arith.constant dense<0.000000e+00> : vector<16xf32>
    %131 = vector.multi_reduction <add>, %130, %cst_79 [1] : vector<16x8xf32> to vector<16xf32>
    %132 = vector.shape_cast %131 : vector<16xf32> to vector<16x1xf32>
    %133 = arith.addf %126, %132 : vector<16x1xf32>
    %cst_80 = arith.constant 9.99999997E-7 : f32
    %134 = vector.broadcast %cst_80 : f32 to vector<16x1xf32>
    %135 = arith.addf %133, %134 : vector<16x1xf32>
    %136 = tpu.reciprocal %135 : vector<16x1xf32> -> vector<16x1xf32>
    %137 = vector.broadcast %136 : vector<16x1xf32> to vector<16x8xf32>
    %138 = arith.mulf %124, %137 : vector<16x8xf32>
    %c0_81 = arith.constant 0 : index
    %c16 = arith.constant 16 : index
    %139 = vector.load %arg18[%c0_81, %c16] : memref<16x32xf32, #tpu.memory_space<vmem>>, vector<16x8xf32>
    tpu.vector_store %arg18[%c0_81, %c16], %138 {strides = array<i32>} : memref<16x32xf32, #tpu.memory_space<vmem>>, vector<16x8xf32>,
    %c2_82 = arith.constant 2 : index
    %c0_83 = arith.constant 0 : index
    %c0_84 = arith.constant 0 : index
    %140 = vector.load %arg16[%c2_82, %c0_83, %c0_84] : memref<4x8x8xf32, #tpu.memory_space<vmem>>, vector<1x8x8xf32>
    %141 = vector.shape_cast %140 : vector<1x8x8xf32> to vector<8x8xf32>
    %cst_85 = arith.constant dense<0.000000e+00> : vector<8x8xf32>
    %142 = tpu.matmul %115, %116, %cst_85 {dimension_numbers = #tpu.dot_dimension_numbers<[0], [0], [1], [1], [0, 1, 1, 1], [], []>} : vector<16x8xf32>, vector<16x8xf32>, vector<8x8xf32> -> vector<8x8xf32>
    %143 = arith.addf %141, %142 : vector<8x8xf32>
    %c2_86 = arith.constant 2 : index
    %c0_87 = arith.constant 0 : index
    %c0_88 = arith.constant 0 : index
    %144 = vector.load %arg16[%c2_86, %c0_87, %c0_88] : memref<4x8x8xf32, #tpu.memory_space<vmem>>, vector<1x8x8xf32>
    %145 = vector.shape_cast %144 : vector<1x8x8xf32> to vector<8x8xf32>
    %146 = vector.shape_cast %143 : vector<8x8xf32> to vector<1x8x8xf32>
    tpu.vector_store %arg16[%c2_86, %c0_87, %c0_88], %146 {strides = array<i32>} : memref<4x8x8xf32, #tpu.memory_space<vmem>>, vector<1x8x8xf32>,
    %c2_89 = arith.constant 2 : index
    %c0_90 = arith.constant 0 : index
    %c0_91 = arith.constant 0 : index
    %147 = vector.load %arg17[%c2_89, %c0_90, %c0_91] : memref<4x1x8xf32, #tpu.memory_space<vmem>>, vector<1x1x8xf32>
    %148 = vector.shape_cast %147 : vector<1x1x8xf32> to vector<1x8xf32>
    %cst_92 = arith.constant dense<0.000000e+00> : vector<8xf32>
    %149 = vector.multi_reduction <add>, %115, %cst_92 [0] : vector<16x8xf32> to vector<8xf32>
    %150 = vector.shape_cast %149 : vector<8xf32> to vector<1x8xf32>
    %151 = arith.addf %148, %150 : vector<1x8xf32>
    %c2_93 = arith.constant 2 : index
    %c0_94 = arith.constant 0 : index
    %c0_95 = arith.constant 0 : index
    %152 = vector.load %arg17[%c2_93, %c0_94, %c0_95] : memref<4x1x8xf32, #tpu.memory_space<vmem>>, vector<1x1x8xf32>
    %153 = vector.shape_cast %152 : vector<1x1x8xf32> to vector<1x8xf32>
    %154 = vector.shape_cast %151 : vector<1x8xf32> to vector<1x1x8xf32>
    tpu.vector_store %arg17[%c2_93, %c0_94, %c0_95], %154 {strides = array<i32>} : memref<4x1x8xf32, #tpu.memory_space<vmem>>, vector<1x1x8xf32>,
    %155 = vector.extract_strided_slice %18 {offsets = [0, 24], sizes = [16, 8], strides = [1, 1]} : vector<16x32xf32> to vector<16x8xf32>
    %156 = vector.extract_strided_slice %27 {offsets = [0, 24], sizes = [16, 8], strides = [1, 1]} : vector<16x32xf32> to vector<16x8xf32>
    %157 = vector.extract_strided_slice %28 {offsets = [0, 24], sizes = [16, 8], strides = [1, 1]} : vector<16x32xf32> to vector<16x8xf32>
    %cst_96 = arith.constant dense<0.000000e+00> : vector<16x16xf32>
    %158 = tpu.matmul %155, %156, %cst_96 {dimension_numbers = #tpu.dot_dimension_numbers<[1], [1], [0], [0], [0, 0, 1, 0], [], []>} : vector<16x8xf32>, vector<16x8xf32>, vector<16x16xf32> -> vector<16x16xf32>
    %cst_97 = arith.constant 0.000000e+00 : f32
    %159 = vector.broadcast %cst_97 : f32 to vector<16x16xf32>
    %160 = arith.select %31, %158, %159 : vector<16x16xi1>, vector<16x16xf32>
    %cst_98 = arith.constant dense<0.000000e+00> : vector<16x8xf32>
    %161 = tpu.matmul %160, %157, %cst_98 {dimension_numbers = #tpu.dot_dimension_numbers<[1], [0], [0], [1], [0, 0, 1, 1], [], []>} : vector<16x16xf32>, vector<16x8xf32>, vector<16x8xf32> -> vector<16x8xf32>
    %c3 = arith.constant 3 : index
    %c0_99 = arith.constant 0 : index
    %c0_100 = arith.constant 0 : index
    %162 = vector.load %arg16[%c3, %c0_99, %c0_100] : memref<4x8x8xf32, #tpu.memory_space<vmem>>, vector<1x8x8xf32>
    %163 = vector.shape_cast %162 : vector<1x8x8xf32> to vector<8x8xf32>
    %cst_101 = arith.constant dense<0.000000e+00> : vector<16x8xf32>
    %164 = tpu.matmul %155, %163, %cst_101 {dimension_numbers = #tpu.dot_dimension_numbers<[1], [0], [0], [1], [0, 0, 1, 1], [], []>} : vector<16x8xf32>, vector<8x8xf32>, vector<16x8xf32> -> vector<16x8xf32>
    %165 = arith.addf %161, %164 : vector<16x8xf32>
    %cst_102 = arith.constant dense<0.000000e+00> : vector<16xf32>
    %166 = vector.multi_reduction <add>, %160, %cst_102 [1] : vector<16x16xf32> to vector<16xf32>
    %167 = vector.shape_cast %166 : vector<16xf32> to vector<16x1xf32>
    %c3_103 = arith.constant 3 : index
    %c0_104 = arith.constant 0 : index
    %c0_105 = arith.constant 0 : index
    %168 = vector.load %arg17[%c3_103, %c0_104, %c0_105] : memref<4x1x8xf32, #tpu.memory_space<vmem>>, vector<1x1x8xf32>
    %169 = vector.shape_cast %168 : vector<1x1x8xf32> to vector<1x8xf32>
    %170 = vector.broadcast %169 : vector<1x8xf32> to vector<16x8xf32>
    %171 = arith.mulf %155, %170 : vector<16x8xf32>
    %cst_106 = arith.constant dense<0.000000e+00> : vector<16xf32>
    %172 = vector.multi_reduction <add>, %171, %cst_106 [1] : vector<16x8xf32> to vector<16xf32>
    %173 = vector.shape_cast %172 : vector<16xf32> to vector<16x1xf32>
    %174 = arith.addf %167, %173 : vector<16x1xf32>
    %cst_107 = arith.constant 9.99999997E-7 : f32
    %175 = vector.broadcast %cst_107 : f32 to vector<16x1xf32>
    %176 = arith.addf %174, %175 : vector<16x1xf32>
    %177 = tpu.reciprocal %176 : vector<16x1xf32> -> vector<16x1xf32>
    %178 = vector.broadcast %177 : vector<16x1xf32> to vector<16x8xf32>
    %179 = arith.mulf %165, %178 : vector<16x8xf32>
    %c0_108 = arith.constant 0 : index
    %c24 = arith.constant 24 : index
    %180 = vector.load %arg18[%c0_108, %c24] : memref<16x32xf32, #tpu.memory_space<vmem>>, vector<16x8xf32>
    tpu.vector_store %arg18[%c0_108, %c24], %179 {strides = array<i32>} : memref<16x32xf32, #tpu.memory_space<vmem>>, vector<16x8xf32>,
    %c3_109 = arith.constant 3 : index
    %c0_110 = arith.constant 0 : index
    %c0_111 = arith.constant 0 : index
    %181 = vector.load %arg16[%c3_109, %c0_110, %c0_111] : memref<4x8x8xf32, #tpu.memory_space<vmem>>, vector<1x8x8xf32>
    %182 = vector.shape_cast %181 : vector<1x8x8xf32> to vector<8x8xf32>
    %cst_112 = arith.constant dense<0.000000e+00> : vector<8x8xf32>
    %183 = tpu.matmul %156, %157, %cst_112 {dimension_numbers = #tpu.dot_dimension_numbers<[0], [0], [1], [1], [0, 1, 1, 1], [], []>} : vector<16x8xf32>, vector<16x8xf32>, vector<8x8xf32> -> vector<8x8xf32>
    %184 = arith.addf %182, %183 : vector<8x8xf32>
    %c3_113 = arith.constant 3 : index
    %c0_114 = arith.constant 0 : index
    %c0_115 = arith.constant 0 : index
    %185 = vector.load %arg16[%c3_113, %c0_114, %c0_115] : memref<4x8x8xf32, #tpu.memory_space<vmem>>, vector<1x8x8xf32>
    %186 = vector.shape_cast %185 : vector<1x8x8xf32> to vector<8x8xf32>
    %187 = vector.shape_cast %184 : vector<8x8xf32> to vector<1x8x8xf32>
    tpu.vector_store %arg16[%c3_113, %c0_114, %c0_115], %187 {strides = array<i32>} : memref<4x8x8xf32, #tpu.memory_space<vmem>>, vector<1x8x8xf32>,
    %c3_116 = arith.constant 3 : index
    %c0_117 = arith.constant 0 : index
    %c0_118 = arith.constant 0 : index
    %188 = vector.load %arg17[%c3_116, %c0_117, %c0_118] : memref<4x1x8xf32, #tpu.memory_space<vmem>>, vector<1x1x8xf32>
    %189 = vector.shape_cast %188 : vector<1x1x8xf32> to vector<1x8xf32>
    %cst_119 = arith.constant dense<0.000000e+00> : vector<8xf32>
    %190 = vector.multi_reduction <add>, %156, %cst_119 [0] : vector<16x8xf32> to vector<8xf32>
    %191 = vector.shape_cast %190 : vector<8xf32> to vector<1x8xf32>
    %192 = arith.addf %189, %191 : vector<1x8xf32>
    %c3_120 = arith.constant 3 : index
    %c0_121 = arith.constant 0 : index
    %c0_122 = arith.constant 0 : index
    %193 = vector.load %arg17[%c3_120, %c0_121, %c0_122] : memref<4x1x8xf32, #tpu.memory_space<vmem>>, vector<1x1x8xf32>
    %194 = vector.shape_cast %193 : vector<1x1x8xf32> to vector<1x8xf32>
    %195 = vector.shape_cast %192 : vector<1x8xf32> to vector<1x1x8xf32>
    tpu.vector_store %arg17[%c3_120, %c0_121, %c0_122], %195 {strides = array<i32>} : memref<4x1x8xf32, #tpu.memory_space<vmem>>, vector<1x1x8xf32>,
    %c0_123 = arith.constant 0 : index
    %c0_124 = arith.constant 0 : index
    %196 = vector.load %arg18[%c0_123, %c0_124] : memref<16x32xf32, #tpu.memory_space<vmem>>, vector<16x32xf32>
    %c0_125 = arith.constant 0 : index
    %c0_126 = arith.constant 0 : index
    %197 = vector.load %arg5[%c0_125, %c0_126] : memref<32x32xf32, #tpu.memory_space<vmem>>, vector<32x32xf32>
    %cst_127 = arith.constant dense<0.000000e+00> : vector<16x32xf32>
    %198 = tpu.matmul %196, %197, %cst_127 {dimension_numbers = #tpu.dot_dimension_numbers<[1], [0], [0], [1], [0, 0, 1, 1], [], []>} : vector<16x32xf32>, vector<32x32xf32>, vector<16x32xf32> -> vector<16x32xf32>
    %c0_128 = arith.constant 0 : index
    %c0_129 = arith.constant 0 : index
    %199 = vector.load %arg6[%c0_128, %c0_129] : memref<1x32xf32, #tpu.memory_space<vmem>>, vector<1x32xf32>
    %200 = vector.broadcast %199 : vector<1x32xf32> to vector<16x32xf32>
    %201 = arith.addf %198, %200 : vector<16x32xf32>
    %202 = arith.addf %4, %201 : vector<16x32xf32>
    %c0_130 = arith.constant 0 : index
    %c0_131 = arith.constant 0 : index
    %203 = vector.load %arg7[%c0_130, %c0_131] : memref<1x32xf32, #tpu.memory_space<vmem>>, vector<1x32xf32>
    %c0_132 = arith.constant 0 : index
    %c0_133 = arith.constant 0 : index
    %204 = vector.load %arg8[%c0_132, %c0_133] : memref<1x32xf32, #tpu.memory_space<vmem>>, vector<1x32xf32>
    %cst_134 = arith.constant dense<0.000000e+00> : vector<16xf32>
    %205 = vector.multi_reduction <add>, %202, %cst_134 [1] : vector<16x32xf32> to vector<16xf32>
    %206 = vector.shape_cast %205 : vector<16xf32> to vector<16x1xf32>
    %cst_135 = arith.constant 3.200000e+01 : f32
    %207 = vector.broadcast %cst_135 : f32 to vector<16x1xf32>
    %208 = arith.divf %206, %207 : vector<16x1xf32>
    %209 = vector.broadcast %208 : vector<16x1xf32> to vector<16x32xf32>
    %210 = arith.subf %202, %209 : vector<16x32xf32>
    %211 = arith.mulf %210, %210 : vector<16x32xf32>
    %cst_136 = arith.constant dense<0.000000e+00> : vector<16xf32>
    %212 = vector.multi_reduction <add>, %211, %cst_136 [1] : vector<16x32xf32> to vector<16xf32>
    %213 = vector.shape_cast %212 : vector<16xf32> to vector<16x1xf32>
    %cst_137 = arith.constant 3.200000e+01 : f32
    %214 = vector.broadcast %cst_137 : f32 to vector<16x1xf32>
    %215 = arith.divf %213, %214 : vector<16x1xf32>
    %cst_138 = arith.constant 9.99999974E-6 : f32
    %216 = vector.broadcast %cst_138 : f32 to vector<16x1xf32>
    %217 = arith.addf %215, %216 : vector<16x1xf32>
    %218 = math.rsqrt %217 : vector<16x1xf32>
    %219 = vector.broadcast %218 : vector<16x1xf32> to vector<16x32xf32>
    %220 = arith.mulf %210, %219 : vector<16x32xf32>
    %221 = vector.broadcast %203 : vector<1x32xf32> to vector<16x32xf32>
    %222 = arith.mulf %220, %221 : vector<16x32xf32>
    %223 = vector.broadcast %204 : vector<1x32xf32> to vector<16x32xf32>
    %224 = arith.addf %222, %223 : vector<16x32xf32>
    %c0_139 = arith.constant 0 : index
    %c0_140 = arith.constant 0 : index
    %225 = vector.load %arg9[%c0_139, %c0_140] : memref<32x128xf32, #tpu.memory_space<vmem>>, vector<32x128xf32>
    %cst_141 = arith.constant dense<0.000000e+00> : vector<16x128xf32>
    %226 = tpu.matmul %224, %225, %cst_141 {dimension_numbers = #tpu.dot_dimension_numbers<[1], [0], [0], [1], [0, 0, 1, 1], [], []>} : vector<16x32xf32>, vector<32x128xf32>, vector<16x128xf32> -> vector<16x128xf32>
    %c0_142 = arith.constant 0 : index
    %c0_143 = arith.constant 0 : index
    %227 = vector.load %arg10[%c0_142, %c0_143] : memref<1x128xf32, #tpu.memory_space<vmem>>, vector<1x128xf32>
    %228 = vector.broadcast %227 : vector<1x128xf32> to vector<16x128xf32>
    %229 = arith.addf %226, %228 : vector<16x128xf32>
    %cst_144 = arith.constant 5.000000e-01 : f32
    %230 = vector.broadcast %cst_144 : f32 to vector<16x128xf32>
    %231 = arith.mulf %230, %229 : vector<16x128xf32>
    %cst_145 = arith.constant 4.471500e-02 : f32
    %232 = vector.broadcast %cst_145 : f32 to vector<16x128xf32>
    %233 = arith.mulf %232, %229 : vector<16x128xf32>
    %234 = arith.mulf %233, %229 : vector<16x128xf32>
    %235 = arith.mulf %234, %229 : vector<16x128xf32>
    %236 = arith.addf %229, %235 : vector<16x128xf32>
    %cst_146 = arith.constant 0.797884583 : f32
    %237 = vector.broadcast %cst_146 : f32 to vector<16x128xf32>
    %238 = arith.mulf %237, %236 : vector<16x128xf32>
    %239 = math.tanh %238 : vector<16x128xf32>
    %cst_147 = arith.constant 1.000000e+00 : f32
    %240 = vector.broadcast %cst_147 : f32 to vector<16x128xf32>
    %241 = arith.addf %240, %239 : vector<16x128xf32>
    %242 = arith.mulf %231, %241 : vector<16x128xf32>
    %c0_148 = arith.constant 0 : index
    %c0_149 = arith.constant 0 : index
    %243 = vector.load %arg11[%c0_148, %c0_149] : memref<128x32xf32, #tpu.memory_space<vmem>>, vector<128x32xf32>
    %cst_150 = arith.constant dense<0.000000e+00> : vector<16x32xf32>
    %244 = tpu.matmul %242, %243, %cst_150 {dimension_numbers = #tpu.dot_dimension_numbers<[1], [0], [0], [1], [0, 0, 1, 1], [], []>} : vector<16x128xf32>, vector<128x32xf32>, vector<16x32xf32> -> vector<16x32xf32>
    %c0_151 = arith.constant 0 : index
    %c0_152 = arith.constant 0 : index
    %245 = vector.load %arg12[%c0_151, %c0_152] : memref<1x32xf32, #tpu.memory_space<vmem>>, vector<1x32xf32>
    %246 = vector.broadcast %245 : vector<1x32xf32> to vector<16x32xf32>
    %247 = arith.addf %244, %246 : vector<16x32xf32>
    %248 = arith.addf %224, %247 : vector<16x32xf32>
    %c0_153 = arith.constant 0 : index
    %c0_154 = arith.constant 0 : index
    %249 = vector.load %arg13[%c0_153, %c0_154] : memref<1x32xf32, #tpu.memory_space<vmem>>, vector<1x32xf32>
    %c0_155 = arith.constant 0 : index
    %c0_156 = arith.constant 0 : index
    %250 = vector.load %arg14[%c0_155, %c0_156] : memref<1x32xf32, #tpu.memory_space<vmem>>, vector<1x32xf32>
    %cst_157 = arith.constant dense<0.000000e+00> : vector<16xf32>
    %251 = vector.multi_reduction <add>, %248, %cst_157 [1] : vector<16x32xf32> to vector<16xf32>
    %252 = vector.shape_cast %251 : vector<16xf32> to vector<16x1xf32>
    %cst_158 = arith.constant 3.200000e+01 : f32
    %253 = vector.broadcast %cst_158 : f32 to vector<16x1xf32>
    %254 = arith.divf %252, %253 : vector<16x1xf32>
    %255 = vector.broadcast %254 : vector<16x1xf32> to vector<16x32xf32>
    %256 = arith.subf %248, %255 : vector<16x32xf32>
    %257 = arith.mulf %256, %256 : vector<16x32xf32>
    %cst_159 = arith.constant dense<0.000000e+00> : vector<16xf32>
    %258 = vector.multi_reduction <add>, %257, %cst_159 [1] : vector<16x32xf32> to vector<16xf32>
    %259 = vector.shape_cast %258 : vector<16xf32> to vector<16x1xf32>
    %cst_160 = arith.constant 3.200000e+01 : f32
    %260 = vector.broadcast %cst_160 : f32 to vector<16x1xf32>
    %261 = arith.divf %259, %260 : vector<16x1xf32>
    %cst_161 = arith.constant 9.99999974E-6 : f32
    %262 = vector.broadcast %cst_161 : f32 to vector<16x1xf32>
    %263 = arith.addf %261, %262 : vector<16x1xf32>
    %264 = math.rsqrt %263 : vector<16x1xf32>
    %265 = vector.broadcast %264 : vector<16x1xf32> to vector<16x32xf32>
    %266 = arith.mulf %256, %265 : vector<16x32xf32>
    %267 = vector.broadcast %249 : vector<1x32xf32> to vector<16x32xf32>
    %268 = arith.mulf %266, %267 : vector<16x32xf32>
    %269 = vector.broadcast %250 : vector<1x32xf32> to vector<16x32xf32>
    %270 = arith.addf %268, %269 : vector<16x32xf32>
    %c0_162 = arith.constant 0 : index
    %c0_163 = arith.constant 0 : index
    %c0_164 = arith.constant 0 : index
    %271 = vector.load %arg15[%c0_162, %c0_163, %c0_164] : memref<1x16x32xf32, #tpu.memory_space<vmem>>, vector<1x16x32xf32>
    %272 = vector.shape_cast %271 : vector<1x16x32xf32> to vector<16x32xf32>
    %273 = vector.shape_cast %270 : vector<16x32xf32> to vector<1x16x32xf32>
    tpu.vector_store %arg15[%c0_162, %c0_163, %c0_164], %273 {strides = array<i32>} : memref<1x16x32xf32, #tpu.memory_space<vmem>>, vector<1x16x32xf32>,
    return
  }
  func.func @transform_0(%arg0: i32, %arg1: i32) -> (i32, i32, i32) {
    %c0_i32 = arith.constant 0 : i32
    %c0_i32_0 = arith.constant 0 : i32
    return %arg0, %arg1, %c0_i32 : i32, i32, i32
  }
  func.func @transform_1(%arg0: i32, %arg1: i32) -> (i32, i32) {
    %c0_i32 = arith.constant 0 : i32
    %c0_i32_0 = arith.constant 0 : i32
    %c0_i32_1 = arith.constant 0 : i32
    return %c0_i32, %c0_i32_0 : i32, i32
  }
  func.func @transform_2(%arg0: i32, %arg1: i32) -> (i32, i32) {
    %c0_i32 = arith.constant 0 : i32
    %c0_i32_0 = arith.constant 0 : i32
    %c0_i32_1 = arith.constant 0 : i32
    return %c0_i32, %c0_i32_0 : i32, i32
  }
  func.func @transform_3(%arg0: i32, %arg1: i32) -> (i32, i32) {
    %c0_i32 = arith.constant 0 : i32
    %c0_i32_0 = arith.constant 0 : i32
    %c0_i32_1 = arith.constant 0 : i32
    return %c0_i32, %c0_i32_0 : i32, i32
  }
  func.func @transform_4(%arg0: i32, %arg1: i32) -> (i32, i32) {
    %c0_i32 = arith.constant 0 : i32
    %c0_i32_0 = arith.constant 0 : i32
    %c0_i32_1 = arith.constant 0 : i32
    return %c0_i32, %c0_i32_0 : i32, i32
  }
  func.func @transform_5(%arg0: i32, %arg1: i32) -> (i32, i32) {
    %c0_i32 = arith.constant 0 : i32
    %c0_i32_0 = arith.constant 0 : i32
    %c0_i32_1 = arith.constant 0 : i32
    return %c0_i32, %c0_i32_0 : i32, i32
  }
  func.func @transform_6(%arg0: i32, %arg1: i32) -> (i32, i32) {
    %c0_i32 = arith.constant 0 : i32
    %c0_i32_0 = arith.constant 0 : i32
    %c0_i32_1 = arith.constant 0 : i32
    return %c0_i32, %c0_i32_0 : i32, i32
  }
  func.func @transform_7(%arg0: i32, %arg1: i32) -> (i32, i32) {
    %c0_i32 = arith.constant 0 : i32
    %c0_i32_0 = arith.constant 0 : i32
    %c0_i32_1 = arith.constant 0 : i32
    return %c0_i32, %c0_i32_0 : i32, i32
  }
  func.func @transform_8(%arg0: i32, %arg1: i32) -> (i32, i32) {
    %c0_i32 = arith.constant 0 : i32
    %c0_i32_0 = arith.constant 0 : i32
    %c0_i32_1 = arith.constant 0 : i32
    return %c0_i32, %c0_i32_0 : i32, i32
  }
  func.func @transform_9(%arg0: i32, %arg1: i32) -> (i32, i32) {
    %c0_i32 = arith.constant 0 : i32
    %c0_i32_0 = arith.constant 0 : i32
    %c0_i32_1 = arith.constant 0 : i32
    return %c0_i32, %c0_i32_0 : i32, i32
  }
  func.func @transform_10(%arg0: i32, %arg1: i32) -> (i32, i32) {
    %c0_i32 = arith.constant 0 : i32
    %c0_i32_0 = arith.constant 0 : i32
    %c0_i32_1 = arith.constant 0 : i32
    return %c0_i32, %c0_i32_0 : i32, i32
  }
  func.func @transform_11(%arg0: i32, %arg1: i32) -> (i32, i32) {
    %c0_i32 = arith.constant 0 : i32
    %c0_i32_0 = arith.constant 0 : i32
    %c0_i32_1 = arith.constant 0 : i32
    return %c0_i32, %c0_i32_0 : i32, i32
  }
  func.func @transform_12(%arg0: i32, %arg1: i32) -> (i32, i32) {
    %c0_i32 = arith.constant 0 : i32
    %c0_i32_0 = arith.constant 0 : i32
    %c0_i32_1 = arith.constant 0 : i32
    return %c0_i32, %c0_i32_0 : i32, i32
  }
  func.func @transform_13(%arg0: i32, %arg1: i32) -> (i32, i32, i32) {
    %c0_i32 = arith.constant 0 : i32
    %c0_i32_0 = arith.constant 0 : i32
    return %arg0, %arg1, %c0_i32 : i32, i32, i32
  }
}

</mosaic_0001>

<llo_original>
// kernel: tpu_custom_call.1
$region0: #{tpu_custom_call.1}
  #allocation0 [shape = 'u32[]', space=smem, size = 0x4, offset = 0x4, fixed_abs, tag = 'smem constant byte address 0x4 - core index']
  #allocation1 [shape = 'u32[144,128]{1,0:T(1,128)}', space=vmem, size = 0x12000, scoped, tag = 'internal scratch']
  #allocation2 [shape = 'f32[4,8,8]{2,1,0:T(8,128)}', space=vmem, size = 0x4000, scoped, tag = 'scratch operand']
  #allocation3 [shape = 'f32[4,1,8]{2,1,0:T(1,128)}', space=vmem, size = 0x800, scoped, tag = 'scratch operand']
  #allocation4 [shape = 'f32[16,32]{1,0:T(8,128)}', space=vmem, size = 0x2000, scoped, tag = 'scratch operand']
  %s0 = inlined_call_operand.vmem [shape: f32[2,64,32], index: 0, kind: input, shape index: {}]
  %s1 = inlined_call_operand.vmem [shape: f32[32,96], index: 1, kind: input, shape index: {}]
  %s2 = inlined_call_operand.vmem [shape: f32[1,96], index: 2, kind: input, shape index: {}]
  %s3 = inlined_call_operand.vmem [shape: f32[32,32], index: 3, kind: input, shape index: {}]
  %s4 = inlined_call_operand.vmem [shape: f32[1,32], index: 4, kind: input, shape index: {}]
  %s5 = inlined_call_operand.vmem [shape: f32[1,32], index: 5, kind: input, shape index: {}]
  %s6 = inlined_call_operand.vmem [shape: f32[1,32], index: 6, kind: input, shape index: {}]
  %s7 = inlined_call_operand.vmem [shape: f32[32,128], index: 7, kind: input, shape index: {}]
  %s8 = inlined_call_operand.vmem [shape: f32[1,128], index: 8, kind: input, shape index: {}]
  %s9 = inlined_call_operand.vmem [shape: f32[128,32], index: 9, kind: input, shape index: {}]
  %s10 = inlined_call_operand.vmem [shape: f32[1,32], index: 10, kind: input, shape index: {}]
  %s11 = inlined_call_operand.vmem [shape: f32[1,32], index: 11, kind: input, shape index: {}]
  %s12 = inlined_call_operand.vmem [shape: f32[1,32], index: 12, kind: input, shape index: {}]
  %s13 = inlined_call_operand.vmem [shape: f32[2,64,32], index: 13, kind: output, shape index: {}]
  %s14 = sld [smem:[#allocation0]]
  $region89: #{tpu_custom_call.1} parent=0
    _
  %s16 = ssub.s32 1, %s14
  %s17 = scalar_select 0, %s16, %s14
  loop: start=0, step=1, limit=10
  $region2: #{tpu_custom_call.1} parent=0 // loop_pre_header
    _
  $region3: #{tpu_custom_call.1} parent=0 // loop_header
    %s19 = sphi 0, %s23
    %p20 = scmp.ge.s32.totalorder %s19, 10
    %s26 = sphi 0, %s38
    %s27 = sphi 0, %s34
    %s28 = sphi 0, %s26
    %s29 = sphi 0, %s27
    %s30 = sphi 0, %s28
    %s31 = sphi 0, %s29
    %s43 = sphi 0, %s45
    %s46 = sphi 0, %s43
    %s47 = sphi 0, %s46
    %s63 = sphi 0, %s47
    %s67 = sphi 0, %s67
    %s69 = sphi 0, %s67
    %s70 = sphi 0, %s69
    %s84 = sphi 0, %s70
    %s88 = sphi 0, %s88
    %s90 = sphi 0, %s88
    %s91 = sphi 0, %s90
    %s105 = sphi 0, %s91
    %s109 = sphi 0, %s109
    %s111 = sphi 0, %s109
    %s112 = sphi 0, %s111
    %s126 = sphi 0, %s112
    %s130 = sphi 0, %s130
    %s132 = sphi 0, %s130
    %s133 = sphi 0, %s132
    %s147 = sphi 0, %s133
    %s151 = sphi 0, %s151
    %s153 = sphi 0, %s151
    %s154 = sphi 0, %s153
    %s168 = sphi 0, %s154
    %s172 = sphi 0, %s172
    %s174 = sphi 0, %s172
    %s175 = sphi 0, %s174
    %s189 = sphi 0, %s175
    %s193 = sphi 0, %s193
    %s195 = sphi 0, %s193
    %s196 = sphi 0, %s195
    %s210 = sphi 0, %s196
    %s214 = sphi 0, %s214
    %s216 = sphi 0, %s214
    %s217 = sphi 0, %s216
    %s231 = sphi 0, %s217
    %s235 = sphi 0, %s235
    %s237 = sphi 0, %s235
    %s238 = sphi 0, %s237
    %s252 = sphi 0, %s238
    %s256 = sphi 0, %s256
    %s258 = sphi 0, %s256
    %s259 = sphi 0, %s258
    %s273 = sphi 0, %s259
    %s277 = sphi 0, %s277
    %s279 = sphi 0, %s277
    %s280 = sphi 0, %s279
    %s294 = sphi 0, %s280
    %s298 = sphi 0, %s298
    %s300 = sphi 0, %s298
    %s301 = sphi 0, %s300
    %s315 = sphi 0, %s301
    %s323 = sphi 0, %s325
    %s326 = sphi 0, %s323
    %s327 = sphi 0, %s326
    %s343 = sphi 0, %s327
  $region4: #{tpu_custom_call.1} parent=0 // loop_header_branch
    %22 = sbr.rel (%p20) target = $region8
  $region5: #{tpu_custom_call.1} parent=0 // loop_body
    %s24 = ssub.s32 %s19, 1
    %s25 = ssub.s32 %s19, 2
    %s32 = sadd.s32 1, %s27
    %p33 = scmp.ge.s32.totalorder %s32, 4
    %s34 = scalar_select %p33, 0, %s32
    %s35 = sadd.s32 1, %s26
    %s36 = scalar_select %p33, %s35, %s26
    %p37 = scmp.ge.s32.totalorder %s36, 2
    %s38 = scalar_select %p37, 0, %s36
    %s39 = ssub.s32 %s26, %s38
    %s40 = ssub.s32 %s27, %s34
    %s41 = sor.u32 %s39, %s40
    %p42 = scmp.eq.s32.totalorder %s41, 0
    %s44 = sadd.s32 %s43, 1
    %s45 = scalar_select %p42, %s43, %s44
    %p48 = pneg %p42
    %p49 = scmp.eq.s32.totalorder %s19, 7
    %p50 = por %p48, %p49
    %p51 = scmp.ne.s32.totalorder %s43, %s46
    %p52 = scmp.eq.s32.totalorder %s19, 0
    %p53 = por %p51, %p52
    %p54 = scmp.ne.s32.totalorder %s43, %s46
    %p55 = scmp.eq.s32.totalorder %s24, 7
    %p56 = por %p54, %p55
    %p57 = scmp.ne.s32.totalorder %s46, %s47
    %p58 = scmp.eq.s32.totalorder %s24, 0
    %p59 = por %p57, %p58
    %p60 = scmp.ne.s32.totalorder %s46, %s47
    %p61 = scmp.eq.s32.totalorder %s25, 7
    %p62 = por %p60, %p61
    %p64 = scmp.ne.s32.totalorder %s47, %s63
    %p65 = scmp.eq.s32.totalorder %s25, 0
    %p66 = por %p64, %p65
    %s68 = sadd.s32 %s67, 1
    %p71 = scmp.eq.s32.totalorder %s19, 7
    %p72 = scmp.ne.s32.totalorder %s67, %s69
    %p73 = scmp.eq.s32.totalorder %s19, 0
    %p74 = por %p72, %p73
    %p75 = scmp.ne.s32.totalorder %s67, %s69
    %p76 = scmp.eq.s32.totalorder %s24, 7
    %p77 = por %p75, %p76
    %p78 = scmp.ne.s32.totalorder %s69, %s70
    %p79 = scmp.eq.s32.totalorder %s24, 0
    %p80 = por %p78, %p79
    %p81 = scmp.ne.s32.totalorder %s69, %s70
    %p82 = scmp.eq.s32.totalorder %s25, 7
    %p83 = por %p81, %p82
    %p85 = scmp.ne.s32.totalorder %s70, %s84
    %p86 = scmp.eq.s32.totalorder %s25, 0
    %p87 = por %p85, %p86
    %s89 = sadd.s32 %s88, 1
    %p92 = scmp.eq.s32.totalorder %s19, 7
    %p93 = scmp.ne.s32.totalorder %s88, %s90
    %p94 = scmp.eq.s32.totalorder %s19, 0
    %p95 = por %p93, %p94
    %p96 = scmp.ne.s32.totalorder %s88, %s90
    %p97 = scmp.eq.s32.totalorder %s24, 7
    %p98 = por %p96, %p97
    %p99 = scmp.ne.s32.totalorder %s90, %s91
    %p100 = scmp.eq.s32.totalorder %s24, 0
    %p101 = por %p99, %p100
    %p102 = scmp.ne.s32.totalorder %s90, %s91
    %p103 = scmp.eq.s32.totalorder %s25, 7
    %p104 = por %p102, %p103
    %p106 = scmp.ne.s32.totalorder %s91, %s105
    %p107 = scmp.eq.s32.totalorder %s25, 0
    %p108 = por %p106, %p107
    %s110 = sadd.s32 %s109, 1
    %p113 = scmp.eq.s32.totalorder %s19, 7
    %p114 = scmp.ne.s32.totalorder %s109, %s111
    %p115 = scmp.eq.s32.totalorder %s19, 0
    %p116 = por %p114, %p115
    %p117 = scmp.ne.s32.totalorder %s109, %s111
    %p118 = scmp.eq.s32.totalorder %s24, 7
    %p119 = por %p117, %p118
    %p120 = scmp.ne.s32.totalorder %s111, %s112
    %p121 = scmp.eq.s32.totalorder %s24, 0
    %p122 = por %p120, %p121
    %p123 = scmp.ne.s32.totalorder %s111, %s112
    %p124 = scmp.eq.s32.totalorder %s25, 7
    %p125 = por %p123, %p124
    %p127 = scmp.ne.s32.totalorder %s112, %s126
    %p128 = scmp.eq.s32.totalorder %s25, 0
    %p129 = por %p127, %p128
    %s131 = sadd.s32 %s130, 1
    %p134 = scmp.eq.s32.totalorder %s19, 7
    %p135 = scmp.ne.s32.totalorder %s130, %s132
    %p136 = scmp.eq.s32.totalorder %s19, 0
    %p137 = por %p135, %p136
    %p138 = scmp.ne.s32.totalorder %s130, %s132
    %p139 = scmp.eq.s32.totalorder %s24, 7
    %p140 = por %p138, %p139
    %p141 = scmp.ne.s32.totalorder %s132, %s133
    %p142 = scmp.eq.s32.totalorder %s24, 0
    %p143 = por %p141, %p142
    %p144 = scmp.ne.s32.totalorder %s132, %s133
    %p145 = scmp.eq.s32.totalorder %s25, 7
    %p146 = por %p144, %p145
    %p148 = scmp.ne.s32.totalorder %s133, %s147
    %p149 = scmp.eq.s32.totalorder %s25, 0
    %p150 = por %p148, %p149
    %s152 = sadd.s32 %s151, 1
    %p155 = scmp.eq.s32.totalorder %s19, 7
    %p156 = scmp.ne.s32.totalorder %s151, %s153
    %p157 = scmp.eq.s32.totalorder %s19, 0
    %p158 = por %p156, %p157
    %p159 = scmp.ne.s32.totalorder %s151, %s153
    %p160 = scmp.eq.s32.totalorder %s24, 7
    %p161 = por %p159, %p160
    %p162 = scmp.ne.s32.totalorder %s153, %s154
    %p163 = scmp.eq.s32.totalorder %s24, 0
    %p164 = por %p162, %p163
    %p165 = scmp.ne.s32.totalorder %s153, %s154
    %p166 = scmp.eq.s32.totalorder %s25, 7
    %p167 = por %p165, %p166
    %p169 = scmp.ne.s32.totalorder %s154, %s168
    %p170 = scmp.eq.s32.totalorder %s25, 0
    %p171 = por %p169, %p170
    %s173 = sadd.s32 %s172, 1
    %p176 = scmp.eq.s32.totalorder %s19, 7
    %p177 = scmp.ne.s32.totalorder %s172, %s174
    %p178 = scmp.eq.s32.totalorder %s19, 0
    %p179 = por %p177, %p178
    %p180 = scmp.ne.s32.totalorder %s172, %s174
    %p181 = scmp.eq.s32.totalorder %s24, 7
    %p182 = por %p180, %p181
    %p183 = scmp.ne.s32.totalorder %s174, %s175
    %p184 = scmp.eq.s32.totalorder %s24, 0
    %p185 = por %p183, %p184
    %p186 = scmp.ne.s32.totalorder %s174, %s175
    %p187 = scmp.eq.s32.totalorder %s25, 7
    %p188 = por %p186, %p187
    %p190 = scmp.ne.s32.totalorder %s175, %s189
    %p191 = scmp.eq.s32.totalorder %s25, 0
    %p192 = por %p190, %p191
    %s194 = sadd.s32 %s193, 1
    %p197 = scmp.eq.s32.totalorder %s19, 7
    %p198 = scmp.ne.s32.totalorder %s193, %s195
    %p199 = scmp.eq.s32.totalorder %s19, 0
    %p200 = por %p198, %p199
    %p201 = scmp.ne.s32.totalorder %s193, %s195
    %p202 = scmp.eq.s32.totalorder %s24, 7
    %p203 = por %p201, %p202
    %p204 = scmp.ne.s32.totalorder %s195, %s196
    %p205 = scmp.eq.s32.totalorder %s24, 0
    %p206 = por %p204, %p205
    %p207 = scmp.ne.s32.totalorder %s195, %s196
    %p208 = scmp.eq.s32.totalorder %s25, 7
    %p209 = por %p207, %p208
    %p211 = scmp.ne.s32.totalorder %s196, %s210
    %p212 = scmp.eq.s32.totalorder %s25, 0
    %p213 = por %p211, %p212
    %s215 = sadd.s32 %s214, 1
    %p218 = scmp.eq.s32.totalorder %s19, 7
    %p219 = scmp.ne.s32.totalorder %s214, %s216
    %p220 = scmp.eq.s32.totalorder %s19, 0
    %p221 = por %p219, %p220
    %p222 = scmp.ne.s32.totalorder %s214, %s216
    %p223 = scmp.eq.s32.totalorder %s24, 7
    %p224 = por %p222, %p223
    %p225 = scmp.ne.s32.totalorder %s216, %s217
    %p226 = scmp.eq.s32.totalorder %s24, 0
    %p227 = por %p225, %p226
    %p228 = scmp.ne.s32.totalorder %s216, %s217
    %p229 = scmp.eq.s32.totalorder %s25, 7
    %p230 = por %p228, %p229
    %p232 = scmp.ne.s32.totalorder %s217, %s231
    %p233 = scmp.eq.s32.totalorder %s25, 0
    %p234 = por %p232, %p233
    %s236 = sadd.s32 %s235, 1
    %p239 = scmp.eq.s32.totalorder %s19, 7
    %p240 = scmp.ne.s32.totalorder %s235, %s237
    %p241 = scmp.eq.s32.totalorder %s19, 0
    %p242 = por %p240, %p241
    %p243 = scmp.ne.s32.totalorder %s235, %s237
    %p244 = scmp.eq.s32.totalorder %s24, 7
    %p245 = por %p243, %p244
    %p246 = scmp.ne.s32.totalorder %s237, %s238
    %p247 = scmp.eq.s32.totalorder %s24, 0
    %p248 = por %p246, %p247
    %p249 = scmp.ne.s32.totalorder %s237, %s238
    %p250 = scmp.eq.s32.totalorder %s25, 7
    %p251 = por %p249, %p250
    %p253 = scmp.ne.s32.totalorder %s238, %s252
    %p254 = scmp.eq.s32.totalorder %s25, 0
    %p255 = por %p253, %p254
    %s257 = sadd.s32 %s256, 1
    %p260 = scmp.eq.s32.totalorder %s19, 7
    %p261 = scmp.ne.s32.totalorder %s256, %s258
    %p262 = scmp.eq.s32.totalorder %s19, 0
    %p263 = por %p261, %p262
    %p264 = scmp.ne.s32.totalorder %s256, %s258
    %p265 = scmp.eq.s32.totalorder %s24, 7
    %p266 = por %p264, %p265
    %p267 = scmp.ne.s32.totalorder %s258, %s259
    %p268 = scmp.eq.s32.totalorder %s24, 0
    %p269 = por %p267, %p268
    %p270 = scmp.ne.s32.totalorder %s258, %s259
    %p271 = scmp.eq.s32.totalorder %s25, 7
    %p272 = por %p270, %p271
    %p274 = scmp.ne.s32.totalorder %s259, %s273
    %p275 = scmp.eq.s32.totalorder %s25, 0
    %p276 = por %p274, %p275
    %s278 = sadd.s32 %s277, 1
    %p281 = scmp.eq.s32.totalorder %s19, 7
    %p282 = scmp.ne.s32.totalorder %s277, %s279
    %p283 = scmp.eq.s32.totalorder %s19, 0
    %p284 = por %p282, %p283
    %p285 = scmp.ne.s32.totalorder %s277, %s279
    %p286 = scmp.eq.s32.totalorder %s24, 7
    %p287 = por %p285, %p286
    %p288 = scmp.ne.s32.totalorder %s279, %s280
    %p289 = scmp.eq.s32.totalorder %s24, 0
    %p290 = por %p288, %p289
    %p291 = scmp.ne.s32.totalorder %s279, %s280
    %p292 = scmp.eq.s32.totalorder %s25, 7
    %p293 = por %p291, %p292
    %p295 = scmp.ne.s32.totalorder %s280, %s294
    %p296 = scmp.eq.s32.totalorder %s25, 0
    %p297 = por %p295, %p296
    %s299 = sadd.s32 %s298, 1
    %p302 = scmp.eq.s32.totalorder %s19, 7
    %p303 = scmp.ne.s32.totalorder %s298, %s300
    %p304 = scmp.eq.s32.totalorder %s19, 0
    %p305 = por %p303, %p304
    %p306 = scmp.ne.s32.totalorder %s298, %s300
    %p307 = scmp.eq.s32.totalorder %s24, 7
    %p308 = por %p306, %p307
    %p309 = scmp.ne.s32.totalorder %s300, %s301
    %p310 = scmp.eq.s32.totalorder %s24, 0
    %p311 = por %p309, %p310
    %p312 = scmp.ne.s32.totalorder %s300, %s301
    %p313 = scmp.eq.s32.totalorder %s25, 7
    %p314 = por %p312, %p313
    %p316 = scmp.ne.s32.totalorder %s301, %s315
    %p317 = scmp.eq.s32.totalorder %s25, 0
    %p318 = por %p316, %p317
    %s319 = ssub.s32 %s26, %s38
    %s320 = ssub.s32 %s27, %s34
    %s321 = sor.u32 %s319, %s320
    %p322 = scmp.eq.s32.totalorder %s321, 0
    %s324 = sadd.s32 %s323, 1
    %s325 = scalar_select %p322, %s323, %s324
    %p328 = pneg %p322
    %p329 = scmp.eq.s32.totalorder %s19, 7
    %p330 = por %p328, %p329
    %p331 = scmp.ne.s32.totalorder %s323, %s326
    %p332 = scmp.eq.s32.totalorder %s19, 0
    %p333 = por %p331, %p332
    %p334 = scmp.ne.s32.totalorder %s323, %s326
    %p335 = scmp.eq.s32.totalorder %s24, 7
    %p336 = por %p334, %p335
    %p337 = scmp.ne.s32.totalorder %s326, %s327
    %p338 = scmp.eq.s32.totalorder %s24, 0
    %p339 = por %p337, %p338
    %p340 = scmp.ne.s32.totalorder %s326, %s327
    %p341 = scmp.eq.s32.totalorder %s25, 7
    %p342 = por %p340, %p341
    %p344 = scmp.ne.s32.totalorder %s327, %s343
    %p345 = scmp.eq.s32.totalorder %s25, 0
    %p346 = por %p344, %p345
    %p347 = scmp.le.s32.totalorder 1, %s19
    %p348 = scmp.lt.s32.totalorder %s19, 9
    %p349 = pnand %p347, %p348
    %p350 = pneg %p349
    // Predicated region
    $region9: #{tpu_custom_call.1} parent=5 // pred_check
      _
    $region10: #{tpu_custom_call.1} parent=5 // pred_check_branch
      %352 = sbr.rel (%p349) target = $region12
    $region11: #{tpu_custom_call.1} parent=5 // pred_region
      %s353 = ssub.s32 %s19, 1
      // Predicated region
      $region13: #{tpu_custom_call.1} parent=11 // pred_check
        %p354 = pneg %p80
      $region14: #{tpu_custom_call.1} parent=11 // pred_check_branch
        %356 = sbr.rel (%p354) target = $region16
      $region15: #{tpu_custom_call.1} parent=11 // pred_region
        _
      $region16: #{tpu_custom_call.1} parent=11 // pred_fallthru
        _
      // Predicated region
      $region17: #{tpu_custom_call.1} parent=11 // pred_check
        %p357 = pneg %p101
      $region18: #{tpu_custom_call.1} parent=11 // pred_check_branch
        %359 = sbr.rel (%p357) target = $region20
      $region19: #{tpu_custom_call.1} parent=11 // pred_region
        _
      $region20: #{tpu_custom_call.1} parent=11 // pred_fallthru
        _
      // Predicated region
      $region21: #{tpu_custom_call.1} parent=11 // pred_check
        %p360 = pneg %p122
      $region22: #{tpu_custom_call.1} parent=11 // pred_check_branch
        %362 = sbr.rel (%p360) target = $region24
      $region23: #{tpu_custom_call.1} parent=11 // pred_region
        _
      $region24: #{tpu_custom_call.1} parent=11 // pred_fallthru
        _
      // Predicated region
      $region25: #{tpu_custom_call.1} parent=11 // pred_check
        %p363 = pneg %p143
      $region26: #{tpu_custom_call.1} parent=11 // pred_check_branch
        %365 = sbr.rel (%p363) target = $region28
      $region27: #{tpu_custom_call.1} parent=11 // pred_region
        _
      $region28: #{tpu_custom_call.1} parent=11 // pred_fallthru
        _
      // Predicated region
      $region29: #{tpu_custom_call.1} parent=11 // pred_check
        %p366 = pneg %p164
      $region30: #{tpu_custom_call.1} parent=11 // pred_check_branch
        %368 = sbr.rel (%p366) target = $region32
      $region31: #{tpu_custom_call.1} parent=11 // pred_region
        _
      $region32: #{tpu_custom_call.1} parent=11 // pred_fallthru
        _
      // Predicated region
      $region33: #{tpu_custom_call.1} parent=11 // pred_check
        %p369 = pneg %p185
      $region34: #{tpu_custom_call.1} parent=11 // pred_check_branch
        %371 = sbr.rel (%p369) target = $region36
      $region35: #{tpu_custom_call.1} parent=11 // pred_region
        _
      $region36: #{tpu_custom_call.1} parent=11 // pred_fallthru
        _
      // Predicated region
      $region37: #{tpu_custom_call.1} parent=11 // pred_check
        %p372 = pneg %p206
      $region38: #{tpu_custom_call.1} parent=11 // pred_check_branch
        %374 = sbr.rel (%p372) target = $region40
      $region39: #{tpu_custom_call.1} parent=11 // pred_region
        _
      $region40: #{tpu_custom_call.1} parent=11 // pred_fallthru
        _
      // Predicated region
      $region41: #{tpu_custom_call.1} parent=11 // pred_check
        %p375 = pneg %p227
      $region42: #{tpu_custom_call.1} parent=11 // pred_check_branch
        %377 = sbr.rel (%p375) target = $region44
      $region43: #{tpu_custom_call.1} parent=11 // pred_region
        _
      $region44: #{tpu_custom_call.1} parent=11 // pred_fallthru
        _
      // Predicated region
      $region45: #{tpu_custom_call.1} parent=11 // pred_check
        %p378 = pneg %p248
      $region46: #{tpu_custom_call.1} parent=11 // pred_check_branch
        %380 = sbr.rel (%p378) target = $region48
      $region47: #{tpu_custom_call.1} parent=11 // pred_region
        _
      $region48: #{tpu_custom_call.1} parent=11 // pred_fallthru
        _
      // Predicated region
      $region49: #{tpu_custom_call.1} parent=11 // pred_check
        %p381 = pneg %p269
      $region50: #{tpu_custom_call.1} parent=11 // pred_check_branch
        %383 = sbr.rel (%p381) target = $region52
      $region51: #{tpu_custom_call.1} parent=11 // pred_region
        _
      $region52: #{tpu_custom_call.1} parent=11 // pred_fallthru
        _
      // Predicated region
      $region53: #{tpu_custom_call.1} parent=11 // pred_check
        %p384 = pneg %p290
      $region54: #{tpu_custom_call.1} parent=11 // pred_check_branch
        %386 = sbr.rel (%p384) target = $region56
      $region55: #{tpu_custom_call.1} parent=11 // pred_region
        _
      $region56: #{tpu_custom_call.1} parent=11 // pred_fallthru
        _
      // Predicated region
      $region57: #{tpu_custom_call.1} parent=11 // pred_check
        %p387 = pneg %p311
      $region58: #{tpu_custom_call.1} parent=11 // pred_check_branch
        %389 = sbr.rel (%p387) target = $region60
      $region59: #{tpu_custom_call.1} parent=11 // pred_region
        _
      $region60: #{tpu_custom_call.1} parent=11 // pred_fallthru
        _
    $region12: #{tpu_custom_call.1} parent=5 // pred_fallthru
      _
    %p390 = scmp.lt.s32.totalorder %s19, 8
    // Predicated region
    $region61: #{tpu_custom_call.1} parent=5 // pred_check
      %p391 = pneg %p390
    $region62: #{tpu_custom_call.1} parent=5 // pred_check_branch
      %393 = sbr.rel (%p391) target = $region64
    $region63: #{tpu_custom_call.1} parent=5 // pred_region
      // Predicated region
      $region65: #{tpu_custom_call.1} parent=63 // pred_check
        %p394 = pneg %p53
      $region66: #{tpu_custom_call.1} parent=63 // pred_check_branch
        %396 = sbr.rel (%p394) target = $region68
      $region67: #{tpu_custom_call.1} parent=63 // pred_region
        %s397 = smul.u32 2, %s27
        %p398 = scmp.lt.s32.totalorder %s26, 1
        %s399 = scalar_select %p398, %s26, 1
        %p400 = scmp.lt.s32.totalorder %s397, 7
        %s401 = scalar_select %p400, %s397, 7
        %s402 = smul.addr %s399, 8
        %s403 = sadd.s32 %s401, %s402
        %s404 = smul.addr %s403, 8
        %s405 = scalar_lea.vmem %s0, %s404
        %s406 = smul.u32 2, %s27
      $region68: #{tpu_custom_call.1} parent=63 // pred_fallthru
        _
    $region64: #{tpu_custom_call.1} parent=5 // pred_fallthru
      _
    %p407 = scmp.le.s32.totalorder 1, %s19
    %p408 = scmp.lt.s32.totalorder %s19, 9
    %p409 = pnand %p407, %p408
    %p410 = pneg %p409
    // Predicated region
    $region69: #{tpu_custom_call.1} parent=5 // pred_check
      _
    $region70: #{tpu_custom_call.1} parent=5 // pred_check_branch
      %412 = sbr.rel (%p409) target = $region72
    $region71: #{tpu_custom_call.1} parent=5 // pred_region
      %s413 = ssub.s32 %s19, 1
      %s414 = smul.u32 2, %s29
      %p415 = scmp.lt.s32.totalorder %s28, 1
      %s416 = scalar_select %p415, %s28, 1
      %p417 = scmp.lt.s32.totalorder %s414, 7
      %s418 = scalar_select %p417, %s414, 7
      %s419 = smul.addr %s416, 8
      %s420 = sadd.s32 %s418, %s419
      %s421 = smul.addr %s420, 8
      %s422 = scalar_lea.vmem %s0, %s421
      %p423 = pneg %p59
      %p424 = pneg %p56
      %p425 = pneg %p80
      %p426 = pneg %p77
      %p427 = pneg %p101
      %p428 = pneg %p98
      %p429 = pneg %p122
      %p430 = pneg %p119
      %p431 = pneg %p143
      %p432 = pneg %p140
      %p433 = pneg %p164
      %p434 = pneg %p161
      %p435 = pneg %p185
      %p436 = pneg %p182
      %p437 = pneg %p206
      %p438 = pneg %p203
      %p439 = pneg %p227
      %p440 = pneg %p224
      %p441 = pneg %p248
      %p442 = pneg %p245
      %p443 = pneg %p269
      %p444 = pneg %p266
      %p445 = pneg %p290
      %p446 = pneg %p287
      %p447 = pneg %p311
      %p448 = pneg %p308
      %p449 = pneg %p339
      %p450 = pneg %p336
      %s451 = smul.u32 2, %s29
      %p452 = scmp.lt.s32.totalorder %s28, 1
      %s453 = scalar_select %p452, %s28, 1
      %p454 = scmp.lt.s32.totalorder %s451, 7
      %s455 = scalar_select %p454, %s451, 7
      %s456 = smul.addr %s453, 8
      %s457 = sadd.s32 %s455, %s456
      %s458 = smul.addr %s457, 8
      %s459 = scalar_lea.vmem %s13, %s458
      %s460 = smul.u32 2, %s29
      %p461 = scmp.lt.s32.totalorder %s28, 1
      %s462 = scalar_select %p461, %s28, 1
      %p463 = scmp.lt.s32.totalorder %s460, 7
      %s464 = scalar_select %p463, %s460, 7
      %s465 = smul.addr %s462, 8
      %s466 = sadd.s32 %s464, %s465
      %s467 = smul.addr %s466, 8
      %s468 = scalar_lea.vmem %s0, %s467
      %s469 = smul.u32 2, %s29
      %s470 = smul.u32 2, %s29
      %p471 = scmp.lt.s32.totalorder %s28, 1
      %s472 = scalar_select %p471, %s28, 1
      %p473 = scmp.lt.s32.totalorder %s470, 7
      %s474 = scalar_select %p473, %s470, 7
      %s475 = smul.addr %s472, 8
      %s476 = sadd.s32 %s474, %s475
      %s477 = smul.addr %s476, 8
      %s478 = scalar_lea.vmem %s13, %s477
      %s479 = smul.u32 2, %s29
      %p480 = scmp.eq.s32.totalorder %s29, 0
      // Predicated region
      $region73: #{tpu_custom_call.1} parent=71 // pred_check
        %p481 = pneg %p480
      $region74: #{tpu_custom_call.1} parent=71 // pred_check_branch
        %483 = sbr.rel (%p481) target = $region76
      $region75: #{tpu_custom_call.1} parent=71 // pred_region
        %vm484 = vcmask 64512
        %485 = vst.msk [vmem:[#allocation2] sm:$0xff] %vm484, 0.0
        %486 = vst.msk [vmem:[#allocation2 + $0x8] sm:$0xff] %vm484, 0.0
        %487 = vst.msk [vmem:[#allocation2 + $0x10] sm:$0xff] %vm484, 0.0
        %488 = vst.msk [vmem:[#allocation2 + $0x18] sm:$0xff] %vm484, 0.0
        %vm489 = vcmask 57344
        %490 = vst.msk [vmem:[#allocation3] sm:$0x1] %vm489, 0.0
        %491 = vst.msk [vmem:[#allocation3 + $0x1] sm:$0x1] %vm489, 0.0
        %492 = vst.msk [vmem:[#allocation3 + $0x2] sm:$0x1] %vm489, 0.0
        %493 = vst.msk [vmem:[#allocation3 + $0x3] sm:$0x1] %vm489, 0.0
      $region76: #{tpu_custom_call.1} parent=71 // pred_fallthru
        _
      %v494 = vld [vmem:[%s468] sm:$0xff]
      %v495 = vld [vmem:[%s468 + $0x8] sm:$0xff]
      %v496 = vld [vmem:[%s1] sm:$0xff]
      %v497 = vld [vmem:[%s1 + $0x8] sm:$0xff]
      %v498 = vld [vmem:[%s1 + $0x10] sm:$0xff]
      %v499 = vld [vmem:[%s1 + $0x18] sm:$0xff]
      %v500 = vld [vmem:[%s2] sm:$0x1]
      %v502 = vlaneseq
      %v503 = vshrl.u32 %v502, 7
      %v504 = vsub.s32 0, %v503
      %v505 = vrot.slane %v500, %v504
      %vm507 = vcmask 261120
      %v509 = vsel %vm507, %v494, 0
      %v512 = vsel %vm507, %v495, 0
      %514 = vmatprep.subr.mxu0 0.0
      %515 = vmatpush1.msra.mxu0 %v496
      %516 = vmatprep.subr.mxu0 0.0
      %517 = vmatpush1.msra.mxu0 %v497
      %518 = vmatprep.subr.mxu0 0.0
      %519 = vmatpush1.msra.mxu0 %v498
      %520 = vmatprep.subr.mxu0 0.0
      %521 = vmatpush1.msra.mxu0 %v499
      %522 = vmatprep.subr.mxu0 0.0
      %523 = vmatpush1.msra.mxu0 0.0
      %524 = vmatprep.subr.mxu0 0.0
      %525 = vmatpush1.msra.mxu0 0.0
      %526 = vmatprep.subr.mxu0 0.0
      %527 = vmatpush1.msra.mxu0 0.0
      %528 = vmatprep.subr.mxu0 0.0
      %529 = vmatpush1.msra.mxu0 0.0
      %530 = vmatprep.subr.mxu0 0.0
      %531 = vmatpush1.msra.mxu0 0.0
      %532 = vmatprep.subr.mxu0 0.0
      %533 = vmatpush1.msra.mxu0 0.0
      %534 = vmatprep.subr.mxu0 0.0
      %535 = vmatpush1.msra.mxu0 0.0
      %536 = vmatprep.subr.mxu0 0.0
      %537 = vmatpush1.msra.mxu0 0.0
      %538 = vmatprep.subr.mxu0 0.0
      %539 = vmatpush1.msra.mxu0 0.0
      %540 = vmatprep.subr.mxu0 0.0
      %541 = vmatpush1.msra.mxu0 0.0
      %542 = vmatprep.subr.mxu0 0.0
      %543 = vmatpush1.msra.mxu0 0.0
      %544 = vmatprep.subr.mxu0 0.0
      %545 = vmatpush1.msra.mxu0 0.0
      %546 = vmatprep.subr.mxu0 0.0
      %547 = vmatpush1.msra.mxu0 0.0
      %548 = vmatprep.subr.mxu0 0.0
      %549 = vmatpush1.msra.mxu0 0.0
      %550 = vmatprep.subr.mxu0 0.0
      %551 = vmatpush1.msra.mxu0 0.0
      %552 = vmatprep.subr.mxu0 0.0
      %553 = vmatpush1.msra.mxu0 0.0
      %554 = vmatprep.subr.mxu0 0.0
      %555 = vmatpush1.msra.mxu0 0.0
      %556 = vmatprep.subr.mxu0 0.0
      %557 = vmatpush1.msra.mxu0 0.0
      %558 = vmatprep.subr.mxu0 0.0
      %559 = vmatpush1.msra.mxu0 0.0
      %560 = vmatprep.subr.mxu0 0.0
      %561 = vmatpush1.msra.mxu0 0.0
      %562 = vmatprep.subr.mxu0 0.0
      %563 = vmatpush1.msra.mxu0 0.0
      %564 = vmatprep.subr.mxu0 0.0
      %565 = vmatpush1.msra.mxu0 0.0
      %566 = vmatprep.subr.mxu0 0.0
      %567 = vmatpush1.msra.mxu0 0.0
      %568 = vmatprep.subr.mxu0 0.0
      %569 = vmatpush1.msra.mxu0 0.0
      %570 = vmatprep.subr.mxu0 0.0
      %571 = vmatpush1.msra.mxu0 0.0
      %572 = vmatprep.subr.mxu0 0.0
      %573 = vmatpush1.msra.mxu0 0.0
      %574 = vmatprep.subr.mxu0 0.0
      %575 = vmatpush1.msra.mxu0 0.0
      %576 = vmatprep.subr.mxu0 0.0
      %577 = vmatpush1.msra.mxu0 0.0
      %578 = vmatprep.mubr.f32.mxu0 0.0
      %579 = vmatmul.mubr.f32.gmra.mrb[0].mxu0 %v509
      %v580 = vpop.f32.mrb[0].mxu0
      %v581 = vadd.f32 %v505, %v580
      %v582 = vpop.f32.mrb[0].mxu0
      %583 = vmatprep.mubr.f32.mxu0 0.0
      %584 = vmatmul.mubr.f32.gmra.mrb[0].mxu0 %v512
      %v585 = vpop.f32.mrb[0].mxu0
      %v586 = vadd.f32 %v505, %v585
      %v587 = vpop.f32.mrb[0].mxu0
      %588 = vdwg.mxu0
      %vm589 = vcmp.gt.f32.partialorder %v581, 0.0
      %vm590 = vcmp.gt.f32.partialorder %v586, 0.0
      %v591 = vadd.f32 %v581, 1.0
      %v592 = vadd.f32 %v586, 1.0
      %v593 = vmin.f32 %v581, 0.0
      %v594 = vmin.f32 %v586, 0.0
      %v595 = vmul.f32 %v593, 1.442695
      %v596 = vpow.pop %v595
      %v597 = vmul.f32 %v594, 1.442695
      %v598 = vpow.pop %v597
      %v599 = vsel %vm589, %v591, %v596
      %v600 = vsel %vm590, %v592, %v598
      %v601 = vlaneseq
      %v602 = vshrl.u32 %v601, 7
      %v603 = vadd.s32 %v602, 8
      %v604 = vlaneseq
      %v605 = vand.u32 %v604, 127
      %vm606 = vcmp.le.s32.totalorder %v605, %v602
      %vm607 = vcmp.le.s32.totalorder %v605, %v603
      %610 = vrot.lane.b32.xlu0 %v599, 96
      %v611 = vpop.permute.xlu0 %610
      %612 = vrot.lane.b32.xlu0 %v600, 96
      %v613 = vpop.permute.xlu0 %612
      %vm614 = vcmask 64512
      %v615 = vsel %vm614, %v599, 0
      %v617 = vsel %vm614, %v600, 0
      %v619 = vsel %vm614, %v611, 0
      %v621 = vsel %vm614, %v613, 0
      %623 = vmatprep.subr.mxu0 0.0
      %624 = vmatpush1.xpose.msra.mxu0 %v619
      %625 = vmatprep.subr.mxu0 0.0
      %626 = vmatpush1.xpose.msra.mxu0 %v621
      %627 = vmatprep.subr.mxu0 0.0
      %628 = vmatpush1.xpose.msra.mxu0 0.0
      %629 = vmatprep.subr.mxu0 0.0
      %630 = vmatpush1.xpose.msra.mxu0 0.0
      %631 = vmatprep.subr.mxu0 0.0
      %632 = vmatpush1.xpose.msra.mxu0 0.0
      %633 = vmatprep.subr.mxu0 0.0
      %634 = vmatpush1.xpose.msra.mxu0 0.0
      %635 = vmatprep.subr.mxu0 0.0
      %636 = vmatpush1.xpose.msra.mxu0 0.0
      %637 = vmatprep.subr.mxu0 0.0
      %638 = vmatpush1.xpose.msra.mxu0 0.0
      %639 = vmatprep.subr.mxu0 0.0
      %640 = vmatpush1.xpose.msra.mxu0 0.0
      %641 = vmatprep.subr.mxu0 0.0
      %642 = vmatpush1.xpose.msra.mxu0 0.0
      %643 = vmatprep.subr.mxu0 0.0
      %644 = vmatpush1.xpose.msra.mxu0 0.0
      %645 = vmatprep.subr.mxu0 0.0
      %646 = vmatpush1.xpose.msra.mxu0 0.0
      %647 = vmatprep.subr.mxu0 0.0
      %648 = vmatpush1.xpose.msra.mxu0 0.0
      %649 = vmatprep.subr.mxu0 0.0
      %650 = vmatpush1.xpose.msra.mxu0 0.0
      %651 = vmatprep.subr.mxu0 0.0
      %652 = vmatpush1.xpose.msra.mxu0 0.0
      %653 = vmatprep.subr.mxu0 0.0
      %654 = vmatpush1.xpose.msra.mxu0 0.0
      %655 = vmatprep.subr.mxu0 0.0
      %656 = vmatpush1.xpose.msra.mxu0 0.0
      %657 = vmatprep.subr.mxu0 0.0
      %658 = vmatpush1.xpose.msra.mxu0 0.0
      %659 = vmatprep.subr.mxu0 0.0
      %660 = vmatpush1.xpose.msra.mxu0 0.0
      %661 = vmatprep.subr.mxu0 0.0
      %662 = vmatpush1.xpose.msra.mxu0 0.0
      %663 = vmatprep.subr.mxu0 0.0
      %664 = vmatpush1.xpose.msra.mxu0 0.0
      %665 = vmatprep.subr.mxu0 0.0
      %666 = vmatpush1.xpose.msra.mxu0 0.0
      %667 = vmatprep.subr.mxu0 0.0
      %668 = vmatpush1.xpose.msra.mxu0 0.0
      %669 = vmatprep.subr.mxu0 0.0
      %670 = vmatpush1.xpose.msra.mxu0 0.0
      %671 = vmatprep.subr.mxu0 0.0
      %672 = vmatpush1.xpose.msra.mxu0 0.0
      %673 = vmatprep.subr.mxu0 0.0
      %674 = vmatpush1.xpose.msra.mxu0 0.0
      %675 = vmatprep.subr.mxu0 0.0
      %676 = vmatpush1.xpose.msra.mxu0 0.0
      %677 = vmatprep.subr.mxu0 0.0
      %678 = vmatpush1.xpose.msra.mxu0 0.0
      %679 = vmatprep.subr.mxu0 0.0
      %680 = vmatpush1.xpose.msra.mxu0 0.0
      %681 = vmatprep.subr.mxu0 0.0
      %682 = vmatpush1.xpose.msra.mxu0 0.0
      %683 = vmatprep.subr.mxu0 0.0
      %684 = vmatpush1.xpose.msra.mxu0 0.0
      %685 = vmatprep.subr.mxu0 0.0
      %686 = vmatpush1.xpose.msra.mxu0 0.0
      %687 = vmatprep.mubr.f32.mxu0 0.0
      %688 = vmatmul.mubr.f32.gmra.mrb[0].mxu0 %v615
      %v689 = vpop.f32.mrb[0].mxu0
      %v690 = vadd.f32 0.0, %v689
      %v691 = vpop.f32.mrb[0].mxu0
      %692 = vmatprep.mubr.f32.mxu0 0.0
      %693 = vmatmul.mubr.f32.gmra.mrb[0].mxu0 %v617
      %v694 = vpop.f32.mrb[0].mxu0
      %v695 = vadd.f32 0.0, %v694
      %v696 = vpop.f32.mrb[0].mxu0
      %697 = vdwg.mxu0
      %v698 = vsel %vm606, %v690, 0.0
      %v699 = vsel %vm607, %v695, 0.0
      %v700 = vld [vmem:[#allocation2] sm:$0xff]
      %701 = vmatprep.subr.mxu0 0.0
      %702 = vmatpush1.msra.mxu0 %v700
      %703 = vmatprep.subr.mxu0 0.0
      %704 = vmatpush1.msra.mxu0 0.0
      %705 = vmatprep.subr.mxu0 0.0
      %706 = vmatpush1.msra.mxu0 0.0
      %707 = vmatprep.subr.mxu0 0.0
      %708 = vmatpush1.msra.mxu0 0.0
      %709 = vmatprep.subr.mxu0 0.0
      %710 = vmatpush1.msra.mxu0 0.0
      %711 = vmatprep.subr.mxu0 0.0
      %712 = vmatpush1.msra.mxu0 0.0
      %713 = vmatprep.subr.mxu0 0.0
      %714 = vmatpush1.msra.mxu0 0.0
      %715 = vmatprep.subr.mxu0 0.0
      %716 = vmatpush1.msra.mxu0 0.0
      %717 = vmatprep.subr.mxu0 0.0
      %718 = vmatpush1.msra.mxu0 0.0
      %719 = vmatprep.subr.mxu0 0.0
      %720 = vmatpush1.msra.mxu0 0.0
      %721 = vmatprep.subr.mxu0 0.0
      %722 = vmatpush1.msra.mxu0 0.0
      %723 = vmatprep.subr.mxu0 0.0
      %724 = vmatpush1.msra.mxu0 0.0
      %725 = vmatprep.subr.mxu0 0.0
      %726 = vmatpush1.msra.mxu0 0.0
      %727 = vmatprep.subr.mxu0 0.0
      %728 = vmatpush1.msra.mxu0 0.0
      %729 = vmatprep.subr.mxu0 0.0
      %730 = vmatpush1.msra.mxu0 0.0
      %731 = vmatprep.subr.mxu0 0.0
      %732 = vmatpush1.msra.mxu0 0.0
      %733 = vmatprep.subr.mxu0 0.0
      %734 = vmatpush1.msra.mxu0 0.0
      %735 = vmatprep.subr.mxu0 0.0
      %736 = vmatpush1.msra.mxu0 0.0
      %737 = vmatprep.subr.mxu0 0.0
      %738 = vmatpush1.msra.mxu0 0.0
      %739 = vmatprep.subr.mxu0 0.0
      %740 = vmatpush1.msra.mxu0 0.0
      %741 = vmatprep.subr.mxu0 0.0
      %742 = vmatpush1.msra.mxu0 0.0
      %743 = vmatprep.subr.mxu0 0.0
      %744 = vmatpush1.msra.mxu0 0.0
      %745 = vmatprep.subr.mxu0 0.0
      %746 = vmatpush1.msra.mxu0 0.0
      %747 = vmatprep.subr.mxu0 0.0
      %748 = vmatpush1.msra.mxu0 0.0
      %749 = vmatprep.subr.mxu0 0.0
      %750 = vmatpush1.msra.mxu0 0.0
      %751 = vmatprep.subr.mxu0 0.0
      %752 = vmatpush1.msra.mxu0 0.0
      %753 = vmatprep.subr.mxu0 0.0
      %754 = vmatpush1.msra.mxu0 0.0
      %755 = vmatprep.subr.mxu0 0.0
      %756 = vmatpush1.msra.mxu0 0.0
      %757 = vmatprep.subr.mxu0 0.0
      %758 = vmatpush1.msra.mxu0 0.0
      %759 = vmatprep.subr.mxu0 0.0
      %760 = vmatpush1.msra.mxu0 0.0
      %761 = vmatprep.subr.mxu0 0.0
      %762 = vmatpush1.msra.mxu0 0.0
      %763 = vmatprep.subr.mxu0 0.0
      %764 = vmatpush1.msra.mxu0 0.0
      %765 = vmatprep.mubr.f32.mxu0 0.0
      %766 = vmatmul.mubr.f32.gmra.mrb[0].mxu0 %v615
      %v767 = vpop.f32.mrb[0].mxu0
      %v768 = vadd.f32 0.0, %v767
      %v769 = vpop.f32.mrb[0].mxu0
      %770 = vmatprep.mubr.f32.mxu0 0.0
      %771 = vmatmul.mubr.f32.gmra.mrb[0].mxu0 %v617
      %v772 = vpop.f32.mrb[0].mxu0
      %v773 = vadd.f32 0.0, %v772
      %v774 = vpop.f32.mrb[0].mxu0
      %775 = vdwg.mxu0
      %778 = vrot.lane.b32.xlu0 %v581, 64
      %v779 = vpop.permute.xlu0 %778
      %780 = vrot.lane.b32.xlu0 %v586, 64
      %v781 = vpop.permute.xlu0 %780
      %vm784 = vcmask 130048
      %v786 = vsel %vm784, %v698, 0
      %v789 = vsel %vm784, %v699, 0
      %791 = vmatprep.subr.mxu0 0.0
      %792 = vmatpush1.msra.mxu0 %v779
      %793 = vmatprep.subr.mxu0 0.0
      %794 = vmatpush1.msra.mxu0 %v781
      %795 = vmatprep.subr.mxu0 0.0
      %796 = vmatpush1.msra.mxu0 0.0
      %797 = vmatprep.subr.mxu0 0.0
      %798 = vmatpush1.msra.mxu0 0.0
      %799 = vmatprep.subr.mxu0 0.0
      %800 = vmatpush1.msra.mxu0 0.0
      %801 = vmatprep.subr.mxu0 0.0
      %802 = vmatpush1.msra.mxu0 0.0
      %803 = vmatprep.subr.mxu0 0.0
      %804 = vmatpush1.msra.mxu0 0.0
      %805 = vmatprep.subr.mxu0 0.0
      %806 = vmatpush1.msra.mxu0 0.0
      %807 = vmatprep.subr.mxu0 0.0
      %808 = vmatpush1.msra.mxu0 0.0
      %809 = vmatprep.subr.mxu0 0.0
      %810 = vmatpush1.msra.mxu0 0.0
      %811 = vmatprep.subr.mxu0 0.0
      %812 = vmatpush1.msra.mxu0 0.0
      %813 = vmatprep.subr.mxu0 0.0
      %814 = vmatpush1.msra.mxu0 0.0
      %815 = vmatprep.subr.mxu0 0.0
      %816 = vmatpush1.msra.mxu0 0.0
      %817 = vmatprep.subr.mxu0 0.0
      %818 = vmatpush1.msra.mxu0 0.0
      %819 = vmatprep.subr.mxu0 0.0
      %820 = vmatpush1.msra.mxu0 0.0
      %821 = vmatprep.subr.mxu0 0.0
      %822 = vmatpush1.msra.mxu0 0.0
      %823 = vmatprep.subr.mxu0 0.0
      %824 = vmatpush1.msra.mxu0 0.0
      %825 = vmatprep.subr.mxu0 0.0
      %826 = vmatpush1.msra.mxu0 0.0
      %827 = vmatprep.subr.mxu0 0.0
      %828 = vmatpush1.msra.mxu0 0.0
      %829 = vmatprep.subr.mxu0 0.0
      %830 = vmatpush1.msra.mxu0 0.0
      %831 = vmatprep.subr.mxu0 0.0
      %832 = vmatpush1.msra.mxu0 0.0
      %833 = vmatprep.subr.mxu0 0.0
      %834 = vmatpush1.msra.mxu0 0.0
      %835 = vmatprep.subr.mxu0 0.0
      %836 = vmatpush1.msra.mxu0 0.0
      %837 = vmatprep.subr.mxu0 0.0
      %838 = vmatpush1.msra.mxu0 0.0
      %839 = vmatprep.subr.mxu0 0.0
      %840 = vmatpush1.msra.mxu0 0.0
      %841 = vmatprep.subr.mxu0 0.0
      %842 = vmatpush1.msra.mxu0 0.0
      %843 = vmatprep.subr.mxu0 0.0
      %844 = vmatpush1.msra.mxu0 0.0
      %845 = vmatprep.subr.mxu0 0.0
      %846 = vmatpush1.msra.mxu0 0.0
      %847 = vmatprep.subr.mxu0 0.0
      %848 = vmatpush1.msra.mxu0 0.0
      %849 = vmatprep.subr.mxu0 0.0
      %850 = vmatpush1.msra.mxu0 0.0
      %851 = vmatprep.subr.mxu0 0.0
      %852 = vmatpush1.msra.mxu0 0.0
      %853 = vmatprep.subr.mxu0 0.0
      %854 = vmatpush1.msra.mxu0 0.0
      %855 = vmatprep.mubr.f32.mxu0 0.0
      %856 = vmatmul.mubr.f32.gmra.mrb[0].mxu0 %v786
      %v857 = vpop.f32.mrb[0].mxu0
      %v858 = vadd.f32 %v768, %v857
      %v859 = vpop.f32.mrb[0].mxu0
      %860 = vmatprep.mubr.f32.mxu0 0.0
      %861 = vmatmul.mubr.f32.gmra.mrb[0].mxu0 %v789
      %v862 = vpop.f32.mrb[0].mxu0
      %v863 = vadd.f32 %v773, %v862
      %v864 = vpop.f32.mrb[0].mxu0
      %865 = vdwg.mxu0
      %v866 = vsel %vm784, %v698, 0.0
      %867 = vadd.xlane.f32.xlu0 %v866
      %v868 = vpop.xlane.xlu0 %867
      %v869 = vsel %vm784, %v699, 0.0
      %870 = vadd.xlane.f32.xlu0 %v869
      %v871 = vpop.xlane.xlu0 %870
      %v872 = vld [vmem:[#allocation3] sm:$0x1]
      %v874 = vlaneseq
      %v875 = vshrl.u32 %v874, 7
      %v876 = vsub.s32 0, %v875
      %v877 = vrot.slane %v872, %v876
      %v879 = vmul.f32 %v599, %v877
      %v880 = vmul.f32 %v600, %v877
      %v881 = vsel %vm614, %v879, 0.0
      %882 = vadd.xlane.f32.xlu0 %v881
      %v883 = vpop.xlane.xlu0 %882
      %v884 = vsel %vm614, %v880, 0.0
      %885 = vadd.xlane.f32.xlu0 %v884
      %v886 = vpop.xlane.xlu0 %885
      %v887 = vadd.f32 %v868, %v883
      %v888 = vadd.f32 %v871, %v886
      %v889 = vadd.f32 %v887, 1e-06
      %v890 = vadd.f32 %v888, 1e-06
      %v891 = vrcp.pop %v889
      %v892 = vrcp.pop %v890
      %v893 = vmul.f32 %v858, %v891
      %v894 = vmul.f32 %v863, %v892
      %895 = vst.msk [vmem:[#allocation4] sm:$0xff] %vm614, %v893
      %896 = vst.msk [vmem:[#allocation4 + $0x8] sm:$0xff] %vm614, %v894
      %v897 = vld [vmem:[#allocation2] sm:$0xff]
      %900 = vxpose.xlu0.b32.start [1/16] %v611, 128
      %901 = vxpose.xlu0.b32.cont [2/16] %v613, 128
      %902 = vxpose.xlu0.b32.cont [3/16] 0.0, 128
      %903 = vxpose.xlu0.b32.cont [4/16] 0.0, 128
      %904 = vxpose.xlu0.b32.cont [5/16] 0.0, 128
      %905 = vxpose.xlu0.b32.cont [6/16] 0.0, 128
      %906 = vxpose.xlu0.b32.cont [7/16] 0.0, 128
      %907 = vxpose.xlu0.b32.cont [8/16] 0.0, 128
      %908 = vxpose.xlu0.b32.cont [9/16] 0.0, 128
      %909 = vxpose.xlu0.b32.cont [10/16] 0.0, 128
      %910 = vxpose.xlu0.b32.cont [11/16] 0.0, 128
      %911 = vxpose.xlu0.b32.cont [12/16] 0.0, 128
      %912 = vxpose.xlu0.b32.cont [13/16] 0.0, 128
      %913 = vxpose.xlu0.b32.cont [14/16] 0.0, 128
      %914 = vxpose.xlu0.b32.cont [15/16] 0.0, 128
      %915 = vxpose.xlu0.b32.end [16/16] 0.0, 128
      %v916 = vpop.trf.xlu0
      %v917 = vpop.trf.xlu0
      %v918 = vpop.trf.xlu0
      %v919 = vpop.trf.xlu0
      %v920 = vpop.trf.xlu0
      %v921 = vpop.trf.xlu0
      %v922 = vpop.trf.xlu0
      %v923 = vpop.trf.xlu0
      %v924 = vpop.trf.xlu0
      %v925 = vpop.trf.xlu0
      %v926 = vpop.trf.xlu0
      %v927 = vpop.trf.xlu0
      %v928 = vpop.trf.xlu0
      %v929 = vpop.trf.xlu0
      %v930 = vpop.trf.xlu0
      %v931 = vpop.trf.xlu0
      %v933 = vsel %vm784, %v916, 0
      %935 = vmatprep.subr.mxu0 0.0
      %936 = vmatpush1.msra.mxu0 %v779
      %937 = vmatprep.subr.mxu0 0.0
      %938 = vmatpush1.msra.mxu0 %v781
      %939 = vmatprep.subr.mxu0 0.0
      %940 = vmatpush1.msra.mxu0 0.0
      %941 = vmatprep.subr.mxu0 0.0
      %942 = vmatpush1.msra.mxu0 0.0
      %943 = vmatprep.subr.mxu0 0.0
      %944 = vmatpush1.msra.mxu0 0.0
      %945 = vmatprep.subr.mxu0 0.0
      %946 = vmatpush1.msra.mxu0 0.0
      %947 = vmatprep.subr.mxu0 0.0
      %948 = vmatpush1.msra.mxu0 0.0
      %949 = vmatprep.subr.mxu0 0.0
      %950 = vmatpush1.msra.mxu0 0.0
      %951 = vmatprep.subr.mxu0 0.0
      %952 = vmatpush1.msra.mxu0 0.0
      %953 = vmatprep.subr.mxu0 0.0
      %954 = vmatpush1.msra.mxu0 0.0
      %955 = vmatprep.subr.mxu0 0.0
      %956 = vmatpush1.msra.mxu0 0.0
      %957 = vmatprep.subr.mxu0 0.0
      %958 = vmatpush1.msra.mxu0 0.0
      %959 = vmatprep.subr.mxu0 0.0
      %960 = vmatpush1.msra.mxu0 0.0
      %961 = vmatprep.subr.mxu0 0.0
      %962 = vmatpush1.msra.mxu0 0.0
      %963 = vmatprep.subr.mxu0 0.0
      %964 = vmatpush1.msra.mxu0 0.0
      %965 = vmatprep.subr.mxu0 0.0
      %966 = vmatpush1.msra.mxu0 0.0
      %967 = vmatprep.subr.mxu0 0.0
      %968 = vmatpush1.msra.mxu0 0.0
      %969 = vmatprep.subr.mxu0 0.0
      %970 = vmatpush1.msra.mxu0 0.0
      %971 = vmatprep.subr.mxu0 0.0
      %972 = vmatpush1.msra.mxu0 0.0
      %973 = vmatprep.subr.mxu0 0.0
      %974 = vmatpush1.msra.mxu0 0.0
      %975 = vmatprep.subr.mxu0 0.0
      %976 = vmatpush1.msra.mxu0 0.0
      %977 = vmatprep.subr.mxu0 0.0
      %978 = vmatpush1.msra.mxu0 0.0
      %979 = vmatprep.subr.mxu0 0.0
      %980 = vmatpush1.msra.mxu0 0.0
      %981 = vmatprep.subr.mxu0 0.0
      %982 = vmatpush1.msra.mxu0 0.0
      %983 = vmatprep.subr.mxu0 0.0
      %984 = vmatpush1.msra.mxu0 0.0
      %985 = vmatprep.subr.mxu0 0.0
      %986 = vmatpush1.msra.mxu0 0.0
      %987 = vmatprep.subr.mxu0 0.0
      %988 = vmatpush1.msra.mxu0 0.0
      %989 = vmatprep.subr.mxu0 0.0
      %990 = vmatpush1.msra.mxu0 0.0
      %991 = vmatprep.subr.mxu0 0.0
      %992 = vmatpush1.msra.mxu0 0.0
      %993 = vmatprep.subr.mxu0 0.0
      %994 = vmatpush1.msra.mxu0 0.0
      %995 = vmatprep.subr.mxu0 0.0
      %996 = vmatpush1.msra.mxu0 0.0
      %997 = vmatprep.subr.mxu0 0.0
      %998 = vmatpush1.msra.mxu0 0.0
      %999 = vmatprep.mubr.f32.mxu0 0.0
      %1000 = vmatmul.mubr.f32.gmra.mrb[0].mxu0 %v933
      %v1001 = vpop.f32.mrb[0].mxu0
      %v1002 = vadd.f32 0.0, %v1001
      %v1003 = vpop.f32.mrb[0].mxu0
      %1004 = vdwg.mxu0
      %v1005 = vadd.f32 %v897, %v1002
      %1006 = vst.msk [vmem:[#allocation2] sm:$0xff] %vm614, %v1005
      %v1007 = vld [vmem:[#allocation3] sm:$0x1]
      %vm1008 = vcmask 326912
      %v1009 = vsel %vm1008, %v599, 0.0
      %v1010 = vsel %vm1008, %v600, 0.0
      %v1011 = vadd.f32 %v1009, %v1010
      %v1012 = vrot.slane %v1011, 4
      %v1013 = vadd.f32 %v1011, %v1012
      %v1014 = vrot.slane %v1013, 2
      %v1015 = vadd.f32 %v1013, %v1014
      %v1016 = vrot.slane %v1015, 1
      %v1017 = vadd.f32 %v1015, %v1016
      %v1020 = vunpack.c.l.s4 1966171168
      %v1021 = vunpack.c.0.s8 %v1020
      %v1022 = vlaneseq
      %v1023 = vshrl.u32 %v1022, 7
      %v1024 = vsub.s32 %v1021, %v1023
      %v1025 = vrot.slane %v1017, %v1024
      %v1027 = vunpack.c.l.s4 1966171168
      %v1028 = vunpack.c.0.s8 %v1027
      %v1029 = vlaneseq
      %v1030 = vshrl.u32 %v1029, 7
      %v1031 = vsub.s32 %v1028, %v1030
      %v1032 = vrot.slane %v1025, %v1031
      %1033 = vrot.lane.b32.xlu0 %v1032, 96
      %v1034 = vpop.permute.xlu0 %1033
      %v1036 = vadd.f32 %v1007, %v1034
      %vm1037 = vcmask 57344
      %1038 = vst.msk [vmem:[#allocation3] sm:$0x1] %vm1037, %v1036
      %1039 = vrot.lane.b32.xlu0 %v599, 120
      %v1040 = vpop.permute.xlu0 %1039
      %1041 = vrot.lane.b32.xlu0 %v600, 120
      %v1042 = vpop.permute.xlu0 %1041
      %1043 = vrot.lane.b32.xlu0 %v599, 88
      %v1044 = vpop.permute.xlu0 %1043
      %1045 = vrot.lane.b32.xlu0 %v600, 88
      %v1046 = vpop.permute.xlu0 %1045
      %v1047 = vsel %vm614, %v1040, 0
      %v1049 = vsel %vm614, %v1042, 0
      %v1051 = vsel %vm614, %v1044, 0
      %v1053 = vsel %vm614, %v1046, 0
      %1055 = vmatprep.subr.mxu0 0.0
      %1056 = vmatpush1.xpose.msra.mxu0 %v1051
      %1057 = vmatprep.subr.mxu0 0.0
      %1058 = vmatpush1.xpose.msra.mxu0 %v1053
      %1059 = vmatprep.subr.mxu0 0.0
      %1060 = vmatpush1.xpose.msra.mxu0 0.0
      %1061 = vmatprep.subr.mxu0 0.0
      %1062 = vmatpush1.xpose.msra.mxu0 0.0
      %1063 = vmatprep.subr.mxu0 0.0
      %1064 = vmatpush1.xpose.msra.mxu0 0.0
      %1065 = vmatprep.subr.mxu0 0.0
      %1066 = vmatpush1.xpose.msra.mxu0 0.0
      %1067 = vmatprep.subr.mxu0 0.0
      %1068 = vmatpush1.xpose.msra.mxu0 0.0
      %1069 = vmatprep.subr.mxu0 0.0
      %1070 = vmatpush1.xpose.msra.mxu0 0.0
      %1071 = vmatprep.subr.mxu0 0.0
      %1072 = vmatpush1.xpose.msra.mxu0 0.0
      %1073 = vmatprep.subr.mxu0 0.0
      %1074 = vmatpush1.xpose.msra.mxu0 0.0
      %1075 = vmatprep.subr.mxu0 0.0
      %1076 = vmatpush1.xpose.msra.mxu0 0.0
      %1077 = vmatprep.subr.mxu0 0.0
      %1078 = vmatpush1.xpose.msra.mxu0 0.0
      %1079 = vmatprep.subr.mxu0 0.0
      %1080 = vmatpush1.xpose.msra.mxu0 0.0
      %1081 = vmatprep.subr.mxu0 0.0
      %1082 = vmatpush1.xpose.msra.mxu0 0.0
      %1083 = vmatprep.subr.mxu0 0.0
      %1084 = vmatpush1.xpose.msra.mxu0 0.0
      %1085 = vmatprep.subr.mxu0 0.0
      %1086 = vmatpush1.xpose.msra.mxu0 0.0
      %1087 = vmatprep.subr.mxu0 0.0
      %1088 = vmatpush1.xpose.msra.mxu0 0.0
      %1089 = vmatprep.subr.mxu0 0.0
      %1090 = vmatpush1.xpose.msra.mxu0 0.0
      %1091 = vmatprep.subr.mxu0 0.0
      %1092 = vmatpush1.xpose.msra.mxu0 0.0
      %1093 = vmatprep.subr.mxu0 0.0
      %1094 = vmatpush1.xpose.msra.mxu0 0.0
      %1095 = vmatprep.subr.mxu0 0.0
      %1096 = vmatpush1.xpose.msra.mxu0 0.0
      %1097 = vmatprep.subr.mxu0 0.0
      %1098 = vmatpush1.xpose.msra.mxu0 0.0
      %1099 = vmatprep.subr.mxu0 0.0
      %1100 = vmatpush1.xpose.msra.mxu0 0.0
      %1101 = vmatprep.subr.mxu0 0.0
      %1102 = vmatpush1.xpose.msra.mxu0 0.0
      %1103 = vmatprep.subr.mxu0 0.0
      %1104 = vmatpush1.xpose.msra.mxu0 0.0
      %1105 = vmatprep.subr.mxu0 0.0
      %1106 = vmatpush1.xpose.msra.mxu0 0.0
      %1107 = vmatprep.subr.mxu0 0.0
      %1108 = vmatpush1.xpose.msra.mxu0 0.0
      %1109 = vmatprep.subr.mxu0 0.0
      %1110 = vmatpush1.xpose.msra.mxu0 0.0
      %1111 = vmatprep.subr.mxu0 0.0
      %1112 = vmatpush1.xpose.msra.mxu0 0.0
      %1113 = vmatprep.subr.mxu0 0.0
      %1114 = vmatpush1.xpose.msra.mxu0 0.0
      %1115 = vmatprep.subr.mxu0 0.0
      %1116 = vmatpush1.xpose.msra.mxu0 0.0
      %1117 = vmatprep.subr.mxu0 0.0
      %1118 = vmatpush1.xpose.msra.mxu0 0.0
      %1119 = vmatprep.mubr.f32.mxu0 0.0
      %1120 = vmatmul.mubr.f32.gmra.mrb[0].mxu0 %v1047
      %v1121 = vpop.f32.mrb[0].mxu0
      %v1122 = vadd.f32 0.0, %v1121
      %v1123 = vpop.f32.mrb[0].mxu0
      %1124 = vmatprep.mubr.f32.mxu0 0.0
      %1125 = vmatmul.mubr.f32.gmra.mrb[0].mxu0 %v1049
      %v1126 = vpop.f32.mrb[0].mxu0
      %v1127 = vadd.f32 0.0, %v1126
      %v1128 = vpop.f32.mrb[0].mxu0
      %1129 = vdwg.mxu0
      %v1130 = vsel %vm606, %v1122, 0.0
      %v1131 = vsel %vm607, %v1127, 0.0
      %s1132 = scalar_lea.vmem [#allocation2], 8
      %v1133 = vld [vmem:[%s1132] sm:$0xff]
      %1134 = vmatprep.subr.mxu0 0.0
      %1135 = vmatpush1.msra.mxu0 %v1133
      %1136 = vmatprep.subr.mxu0 0.0
      %1137 = vmatpush1.msra.mxu0 0.0
      %1138 = vmatprep.subr.mxu0 0.0
      %1139 = vmatpush1.msra.mxu0 0.0
      %1140 = vmatprep.subr.mxu0 0.0
      %1141 = vmatpush1.msra.mxu0 0.0
      %1142 = vmatprep.subr.mxu0 0.0
      %1143 = vmatpush1.msra.mxu0 0.0
      %1144 = vmatprep.subr.mxu0 0.0
      %1145 = vmatpush1.msra.mxu0 0.0
      %1146 = vmatprep.subr.mxu0 0.0
      %1147 = vmatpush1.msra.mxu0 0.0
      %1148 = vmatprep.subr.mxu0 0.0
      %1149 = vmatpush1.msra.mxu0 0.0
      %1150 = vmatprep.subr.mxu0 0.0
      %1151 = vmatpush1.msra.mxu0 0.0
      %1152 = vmatprep.subr.mxu0 0.0
      %1153 = vmatpush1.msra.mxu0 0.0
      %1154 = vmatprep.subr.mxu0 0.0
      %1155 = vmatpush1.msra.mxu0 0.0
      %1156 = vmatprep.subr.mxu0 0.0
      %1157 = vmatpush1.msra.mxu0 0.0
      %1158 = vmatprep.subr.mxu0 0.0
      %1159 = vmatpush1.msra.mxu0 0.0
      %1160 = vmatprep.subr.mxu0 0.0
      %1161 = vmatpush1.msra.mxu0 0.0
      %1162 = vmatprep.subr.mxu0 0.0
      %1163 = vmatpush1.msra.mxu0 0.0
      %1164 = vmatprep.subr.mxu0 0.0
      %1165 = vmatpush1.msra.mxu0 0.0
      %1166 = vmatprep.subr.mxu0 0.0
      %1167 = vmatpush1.msra.mxu0 0.0
      %1168 = vmatprep.subr.mxu0 0.0
      %1169 = vmatpush1.msra.mxu0 0.0
      %1170 = vmatprep.subr.mxu0 0.0
      %1171 = vmatpush1.msra.mxu0 0.0
      %1172 = vmatprep.subr.mxu0 0.0
      %1173 = vmatpush1.msra.mxu0 0.0
      %1174 = vmatprep.subr.mxu0 0.0
      %1175 = vmatpush1.msra.mxu0 0.0
      %1176 = vmatprep.subr.mxu0 0.0
      %1177 = vmatpush1.msra.mxu0 0.0
      %1178 = vmatprep.subr.mxu0 0.0
      %1179 = vmatpush1.msra.mxu0 0.0
      %1180 = vmatprep.subr.mxu0 0.0
      %1181 = vmatpush1.msra.mxu0 0.0
      %1182 = vmatprep.subr.mxu0 0.0
      %1183 = vmatpush1.msra.mxu0 0.0
      %1184 = vmatprep.subr.mxu0 0.0
      %1185 = vmatpush1.msra.mxu0 0.0
      %1186 = vmatprep.subr.mxu0 0.0
      %1187 = vmatpush1.msra.mxu0 0.0
      %1188 = vmatprep.subr.mxu0 0.0
      %1189 = vmatpush1.msra.mxu0 0.0
      %1190 = vmatprep.subr.mxu0 0.0
      %1191 = vmatpush1.msra.mxu0 0.0
      %1192 = vmatprep.subr.mxu0 0.0
      %1193 = vmatpush1.msra.mxu0 0.0
      %1194 = vmatprep.subr.mxu0 0.0
      %1195 = vmatpush1.msra.mxu0 0.0
      %1196 = vmatprep.subr.mxu0 0.0
      %1197 = vmatpush1.msra.mxu0 0.0
      %1198 = vmatprep.mubr.f32.mxu0 0.0
      %1199 = vmatmul.mubr.f32.gmra.mrb[0].mxu0 %v1047
      %v1200 = vpop.f32.mrb[0].mxu0
      %v1201 = vadd.f32 0.0, %v1200
      %v1202 = vpop.f32.mrb[0].mxu0
      %1203 = vmatprep.mubr.f32.mxu0 0.0
      %1204 = vmatmul.mubr.f32.gmra.mrb[0].mxu0 %v1049
      %v1205 = vpop.f32.mrb[0].mxu0
      %v1206 = vadd.f32 0.0, %v1205
      %v1207 = vpop.f32.mrb[0].mxu0
      %1208 = vdwg.mxu0
      %1209 = vrot.lane.b32.xlu0 %v581, 56
      %v1210 = vpop.permute.xlu0 %1209
      %1211 = vrot.lane.b32.xlu0 %v586, 56
      %v1212 = vpop.permute.xlu0 %1211
      %v1216 = vsel %vm784, %v1130, 0
      %v1219 = vsel %vm784, %v1131, 0
      %1221 = vmatprep.subr.mxu0 0.0
      %1222 = vmatpush1.msra.mxu0 %v1210
      %1223 = vmatprep.subr.mxu0 0.0
      %1224 = vmatpush1.msra.mxu0 %v1212
      %1225 = vmatprep.subr.mxu0 0.0
      %1226 = vmatpush1.msra.mxu0 0.0
      %1227 = vmatprep.subr.mxu0 0.0
      %1228 = vmatpush1.msra.mxu0 0.0
      %1229 = vmatprep.subr.mxu0 0.0
      %1230 = vmatpush1.msra.mxu0 0.0
      %1231 = vmatprep.subr.mxu0 0.0
      %1232 = vmatpush1.msra.mxu0 0.0
      %1233 = vmatprep.subr.mxu0 0.0
      %1234 = vmatpush1.msra.mxu0 0.0
      %1235 = vmatprep.subr.mxu0 0.0
      %1236 = vmatpush1.msra.mxu0 0.0
      %1237 = vmatprep.subr.mxu0 0.0
      %1238 = vmatpush1.msra.mxu0 0.0
      %1239 = vmatprep.subr.mxu0 0.0
      %1240 = vmatpush1.msra.mxu0 0.0
      %1241 = vmatprep.subr.mxu0 0.0
      %1242 = vmatpush1.msra.mxu0 0.0
      %1243 = vmatprep.subr.mxu0 0.0
      %1244 = vmatpush1.msra.mxu0 0.0
      %1245 = vmatprep.subr.mxu0 0.0
      %1246 = vmatpush1.msra.mxu0 0.0
      %1247 = vmatprep.subr.mxu0 0.0
      %1248 = vmatpush1.msra.mxu0 0.0
      %1249 = vmatprep.subr.mxu0 0.0
      %1250 = vmatpush1.msra.mxu0 0.0
      %1251 = vmatprep.subr.mxu0 0.0
      %1252 = vmatpush1.msra.mxu0 0.0
      %1253 = vmatprep.subr.mxu0 0.0
      %1254 = vmatpush1.msra.mxu0 0.0
      %1255 = vmatprep.subr.mxu0 0.0
      %1256 = vmatpush1.msra.mxu0 0.0
      %1257 = vmatprep.subr.mxu0 0.0
      %1258 = vmatpush1.msra.mxu0 0.0
      %1259 = vmatprep.subr.mxu0 0.0
      %1260 = vmatpush1.msra.mxu0 0.0
      %1261 = vmatprep.subr.mxu0 0.0
      %1262 = vmatpush1.msra.mxu0 0.0
      %1263 = vmatprep.subr.mxu0 0.0
      %1264 = vmatpush1.msra.mxu0 0.0
      %1265 = vmatprep.subr.mxu0 0.0
      %1266 = vmatpush1.msra.mxu0 0.0
      %1267 = vmatprep.subr.mxu0 0.0
      %1268 = vmatpush1.msra.mxu0 0.0
      %1269 = vmatprep.subr.mxu0 0.0
      %1270 = vmatpush1.msra.mxu0 0.0
      %1271 = vmatprep.subr.mxu0 0.0
      %1272 = vmatpush1.msra.mxu0 0.0
      %1273 = vmatprep.subr.mxu0 0.0
      %1274 = vmatpush1.msra.mxu0 0.0
      %1275 = vmatprep.subr.mxu0 0.0
      %1276 = vmatpush1.msra.mxu0 0.0
      %1277 = vmatprep.subr.mxu0 0.0
      %1278 = vmatpush1.msra.mxu0 0.0
      %1279 = vmatprep.subr.mxu0 0.0
      %1280 = vmatpush1.msra.mxu0 0.0
      %1281 = vmatprep.subr.mxu0 0.0
      %1282 = vmatpush1.msra.mxu0 0.0
      %1283 = vmatprep.subr.mxu0 0.0
      %1284 = vmatpush1.msra.mxu0 0.0
      %1285 = vmatprep.mubr.f32.mxu0 0.0
      %1286 = vmatmul.mubr.f32.gmra.mrb[0].mxu0 %v1216
      %v1287 = vpop.f32.mrb[0].mxu0
      %v1288 = vadd.f32 %v1201, %v1287
      %v1289 = vpop.f32.mrb[0].mxu0
      %1290 = vmatprep.mubr.f32.mxu0 0.0
      %1291 = vmatmul.mubr.f32.gmra.mrb[0].mxu0 %v1219
      %v1292 = vpop.f32.mrb[0].mxu0
      %v1293 = vadd.f32 %v1206, %v1292
      %v1294 = vpop.f32.mrb[0].mxu0
      %1295 = vdwg.mxu0
      %v1296 = vsel %vm784, %v1130, 0.0
      %1297 = vadd.xlane.f32.xlu0 %v1296
      %v1298 = vpop.xlane.xlu0 %1297
      %v1299 = vsel %vm784, %v1131, 0.0
      %1300 = vadd.xlane.f32.xlu0 %v1299
      %v1301 = vpop.xlane.xlu0 %1300
      %s1302 = scalar_lea.vmem [#allocation3], 1
      %v1303 = vld [vmem:[%s1302] sm:$0x1]
      %v1305 = vlaneseq
      %v1306 = vshrl.u32 %v1305, 7
      %v1307 = vsub.s32 0, %v1306
      %v1308 = vrot.slane %v1303, %v1307
      %1309 = vrot.lane.b32.xlu0 %v1308, 8
      %v1310 = vpop.permute.xlu0 %1309
      %v1312 = vmul.f32 %v599, %v1310
      %v1313 = vmul.f32 %v600, %v1310
      %1316 = vrot.lane.b32.xlu0 %v1312, 120
      %v1317 = vpop.permute.xlu0 %1316
      %1318 = vrot.lane.b32.xlu0 %v1313, 120
      %v1319 = vpop.permute.xlu0 %1318
      %v1322 = vsel %vm614, %v1317, 0.0
      %1323 = vadd.xlane.f32.xlu0 %v1322
      %v1324 = vpop.xlane.xlu0 %1323
      %v1325 = vsel %vm614, %v1319, 0.0
      %1326 = vadd.xlane.f32.xlu0 %v1325
      %v1327 = vpop.xlane.xlu0 %1326
      %v1328 = vadd.f32 %v1298, %v1324
      %v1329 = vadd.f32 %v1301, %v1327
      %v1330 = vadd.f32 %v1328, 1e-06
      %v1331 = vadd.f32 %v1329, 1e-06
      %v1332 = vrcp.pop %v1330
      %v1333 = vrcp.pop %v1331
      %v1334 = vmul.f32 %v1288, %v1332
      %v1335 = vmul.f32 %v1293, %v1333
      %1338 = vrot.lane.b32.xlu0 %v1334, 8
      %v1339 = vpop.permute.xlu0 %1338
      %1340 = vrot.lane.b32.xlu0 %v1335, 8
      %v1341 = vpop.permute.xlu0 %1340
      %vm1344 = vcmask 130112
      %1345 = vst.msk [vmem:[#allocation4] sm:$0xff] %vm1344, %v1339
      %1346 = vst.msk [vmem:[#allocation4 + $0x8] sm:$0xff] %vm1344, %v1341
      %v1347 = vld [vmem:[%s1132] sm:$0xff]
      %1350 = vxpose.xlu0.b32.start [1/16] %v1044, 128
      %1351 = vxpose.xlu0.b32.cont [2/16] %v1046, 128
      %1352 = vxpose.xlu0.b32.cont [3/16] 0.0, 128
      %1353 = vxpose.xlu0.b32.cont [4/16] 0.0, 128
      %1354 = vxpose.xlu0.b32.cont [5/16] 0.0, 128
      %1355 = vxpose.xlu0.b32.cont [6/16] 0.0, 128
      %1356 = vxpose.xlu0.b32.cont [7/16] 0.0, 128
      %1357 = vxpose.xlu0.b32.cont [8/16] 0.0, 128
      %1358 = vxpose.xlu0.b32.cont [9/16] 0.0, 128
      %1359 = vxpose.xlu0.b32.cont [10/16] 0.0, 128
      %1360 = vxpose.xlu0.b32.cont [11/16] 0.0, 128
      %1361 = vxpose.xlu0.b32.cont [12/16] 0.0, 128
      %1362 = vxpose.xlu0.b32.cont [13/16] 0.0, 128
      %1363 = vxpose.xlu0.b32.cont [14/16] 0.0, 128
      %1364 = vxpose.xlu0.b32.cont [15/16] 0.0, 128
      %1365 = vxpose.xlu0.b32.end [16/16] 0.0, 128
      %v1366 = vpop.trf.xlu0
      %v1367 = vpop.trf.xlu0
      %v1368 = vpop.trf.xlu0
      %v1369 = vpop.trf.xlu0
      %v1370 = vpop.trf.xlu0
      %v1371 = vpop.trf.xlu0
      %v1372 = vpop.trf.xlu0
      %v1373 = vpop.trf.xlu0
      %v1374 = vpop.trf.xlu0
      %v1375 = vpop.trf.xlu0
      %v1376 = vpop.trf.xlu0
      %v1377 = vpop.trf.xlu0
      %v1378 = vpop.trf.xlu0
      %v1379 = vpop.trf.xlu0
      %v1380 = vpop.trf.xlu0
      %v1381 = vpop.trf.xlu0
      %v1383 = vsel %vm784, %v1366, 0
      %1385 = vmatprep.subr.mxu0 0.0
      %1386 = vmatpush1.msra.mxu0 %v1210
      %1387 = vmatprep.subr.mxu0 0.0
      %1388 = vmatpush1.msra.mxu0 %v1212
      %1389 = vmatprep.subr.mxu0 0.0
      %1390 = vmatpush1.msra.mxu0 0.0
      %1391 = vmatprep.subr.mxu0 0.0
      %1392 = vmatpush1.msra.mxu0 0.0
      %1393 = vmatprep.subr.mxu0 0.0
      %1394 = vmatpush1.msra.mxu0 0.0
      %1395 = vmatprep.subr.mxu0 0.0
      %1396 = vmatpush1.msra.mxu0 0.0
      %1397 = vmatprep.subr.mxu0 0.0
      %1398 = vmatpush1.msra.mxu0 0.0
      %1399 = vmatprep.subr.mxu0 0.0
      %1400 = vmatpush1.msra.mxu0 0.0
      %1401 = vmatprep.subr.mxu0 0.0
      %1402 = vmatpush1.msra.mxu0 0.0
      %1403 = vmatprep.subr.mxu0 0.0
      %1404 = vmatpush1.msra.mxu0 0.0
      %1405 = vmatprep.subr.mxu0 0.0
      %1406 = vmatpush1.msra.mxu0 0.0
      %1407 = vmatprep.subr.mxu0 0.0
      %1408 = vmatpush1.msra.mxu0 0.0
      %1409 = vmatprep.subr.mxu0 0.0
      %1410 = vmatpush1.msra.mxu0 0.0
      %1411 = vmatprep.subr.mxu0 0.0
      %1412 = vmatpush1.msra.mxu0 0.0
      %1413 = vmatprep.subr.mxu0 0.0
      %1414 = vmatpush1.msra.mxu0 0.0
      %1415 = vmatprep.subr.mxu0 0.0
      %1416 = vmatpush1.msra.mxu0 0.0
      %1417 = vmatprep.subr.mxu0 0.0
      %1418 = vmatpush1.msra.mxu0 0.0
      %1419 = vmatprep.subr.mxu0 0.0
      %1420 = vmatpush1.msra.mxu0 0.0
      %1421 = vmatprep.subr.mxu0 0.0
      %1422 = vmatpush1.msra.mxu0 0.0
      %1423 = vmatprep.subr.mxu0 0.0
      %1424 = vmatpush1.msra.mxu0 0.0
      %1425 = vmatprep.subr.mxu0 0.0
      %1426 = vmatpush1.msra.mxu0 0.0
      %1427 = vmatprep.subr.mxu0 0.0
      %1428 = vmatpush1.msra.mxu0 0.0
      %1429 = vmatprep.subr.mxu0 0.0
      %1430 = vmatpush1.msra.mxu0 0.0
      %1431 = vmatprep.subr.mxu0 0.0
      %1432 = vmatpush1.msra.mxu0 0.0
      %1433 = vmatprep.subr.mxu0 0.0
      %1434 = vmatpush1.msra.mxu0 0.0
      %1435 = vmatprep.subr.mxu0 0.0
      %1436 = vmatpush1.msra.mxu0 0.0
      %1437 = vmatprep.subr.mxu0 0.0
      %1438 = vmatpush1.msra.mxu0 0.0
      %1439 = vmatprep.subr.mxu0 0.0
      %1440 = vmatpush1.msra.mxu0 0.0
      %1441 = vmatprep.subr.mxu0 0.0
      %1442 = vmatpush1.msra.mxu0 0.0
      %1443 = vmatprep.subr.mxu0 0.0
      %1444 = vmatpush1.msra.mxu0 0.0
      %1445 = vmatprep.subr.mxu0 0.0
      %1446 = vmatpush1.msra.mxu0 0.0
      %1447 = vmatprep.subr.mxu0 0.0
      %1448 = vmatpush1.msra.mxu0 0.0
      %1449 = vmatprep.mubr.f32.mxu0 0.0
      %1450 = vmatmul.mubr.f32.gmra.mrb[0].mxu0 %v1383
      %v1451 = vpop.f32.mrb[0].mxu0
      %v1452 = vadd.f32 0.0, %v1451
      %v1453 = vpop.f32.mrb[0].mxu0
      %1454 = vdwg.mxu0
      %v1455 = vadd.f32 %v1347, %v1452
      %1456 = vst.msk [vmem:[%s1132] sm:$0xff] %vm614, %v1455
      %v1457 = vld [vmem:[%s1302] sm:$0x1]
      %vm1458 = vcmask 392512
      %v1459 = vsel %vm1458, %v599, 0.0
      %v1460 = vsel %vm1458, %v600, 0.0
      %v1461 = vadd.f32 %v1459, %v1460
      %v1462 = vrot.slane %v1461, 4
      %v1463 = vadd.f32 %v1461, %v1462
      %v1464 = vrot.slane %v1463, 2
      %v1465 = vadd.f32 %v1463, %v1464
      %v1466 = vrot.slane %v1465, 1
      %v1467 = vadd.f32 %v1465, %v1466
      %v1470 = vunpack.c.l.s4 1966171168
      %v1471 = vunpack.c.0.s8 %v1470
      %v1472 = vlaneseq
      %v1473 = vshrl.u32 %v1472, 7
      %v1474 = vsub.s32 %v1471, %v1473
      %v1475 = vrot.slane %v1467, %v1474
      %v1477 = vunpack.c.l.s4 1966171168
      %v1478 = vunpack.c.0.s8 %v1477
      %v1479 = vlaneseq
      %v1480 = vshrl.u32 %v1479, 7
      %v1481 = vsub.s32 %v1478, %v1480
      %v1482 = vrot.slane %v1475, %v1481
      %1483 = vrot.lane.b32.xlu0 %v1482, 88
      %v1484 = vpop.permute.xlu0 %1483
      %v1486 = vadd.f32 %v1457, %v1484
      %1487 = vst.msk [vmem:[%s1302] sm:$0x1] %vm1037, %v1486
      %1488 = vrot.lane.b32.xlu0 %v599, 112
      %v1489 = vpop.permute.xlu0 %1488
      %1490 = vrot.lane.b32.xlu0 %v600, 112
      %v1491 = vpop.permute.xlu0 %1490
      %1492 = vrot.lane.b32.xlu0 %v599, 80
      %v1493 = vpop.permute.xlu0 %1492
      %1494 = vrot.lane.b32.xlu0 %v600, 80
      %v1495 = vpop.permute.xlu0 %1494
      %v1496 = vsel %vm614, %v1489, 0
      %v1498 = vsel %vm614, %v1491, 0
      %v1500 = vsel %vm614, %v1493, 0
      %v1502 = vsel %vm614, %v1495, 0
      %1504 = vmatprep.subr.mxu0 0.0
      %1505 = vmatpush1.xpose.msra.mxu0 %v1500
      %1506 = vmatprep.subr.mxu0 0.0
      %1507 = vmatpush1.xpose.msra.mxu0 %v1502
      %1508 = vmatprep.subr.mxu0 0.0
      %1509 = vmatpush1.xpose.msra.mxu0 0.0
      %1510 = vmatprep.subr.mxu0 0.0
      %1511 = vmatpush1.xpose.msra.mxu0 0.0
      %1512 = vmatprep.subr.mxu0 0.0
      %1513 = vmatpush1.xpose.msra.mxu0 0.0
      %1514 = vmatprep.subr.mxu0 0.0
      %1515 = vmatpush1.xpose.msra.mxu0 0.0
      %1516 = vmatprep.subr.mxu0 0.0
      %1517 = vmatpush1.xpose.msra.mxu0 0.0
      %1518 = vmatprep.subr.mxu0 0.0
      %1519 = vmatpush1.xpose.msra.mxu0 0.0
      %1520 = vmatprep.subr.mxu0 0.0
      %1521 = vmatpush1.xpose.msra.mxu0 0.0
      %1522 = vmatprep.subr.mxu0 0.0
      %1523 = vmatpush1.xpose.msra.mxu0 0.0
      %1524 = vmatprep.subr.mxu0 0.0
      %1525 = vmatpush1.xpose.msra.mxu0 0.0
      %1526 = vmatprep.subr.mxu0 0.0
      %1527 = vmatpush1.xpose.msra.mxu0 0.0
      %1528 = vmatprep.subr.mxu0 0.0
      %1529 = vmatpush1.xpose.msra.mxu0 0.0
      %1530 = vmatprep.subr.mxu0 0.0
      %1531 = vmatpush1.xpose.msra.mxu0 0.0
      %1532 = vmatprep.subr.mxu0 0.0
      %1533 = vmatpush1.xpose.msra.mxu0 0.0
      %1534 = vmatprep.subr.mxu0 0.0
      %1535 = vmatpush1.xpose.msra.mxu0 0.0
      %1536 = vmatprep.subr.mxu0 0.0
      %1537 = vmatpush1.xpose.msra.mxu0 0.0
      %1538 = vmatprep.subr.mxu0 0.0
      %1539 = vmatpush1.xpose.msra.mxu0 0.0
      %1540 = vmatprep.subr.mxu0 0.0
      %1541 = vmatpush1.xpose.msra.mxu0 0.0
      %1542 = vmatprep.subr.mxu0 0.0
      %1543 = vmatpush1.xpose.msra.mxu0 0.0
      %1544 = vmatprep.subr.mxu0 0.0
      %1545 = vmatpush1.xpose.msra.mxu0 0.0
      %1546 = vmatprep.subr.mxu0 0.0
      %1547 = vmatpush1.xpose.msra.mxu0 0.0
      %1548 = vmatprep.subr.mxu0 0.0
      %1549 = vmatpush1.xpose.msra.mxu0 0.0
      %1550 = vmatprep.subr.mxu0 0.0
      %1551 = vmatpush1.xpose.msra.mxu0 0.0
      %1552 = vmatprep.subr.mxu0 0.0
      %1553 = vmatpush1.xpose.msra.mxu0 0.0
      %1554 = vmatprep.subr.mxu0 0.0
      %1555 = vmatpush1.xpose.msra.mxu0 0.0
      %1556 = vmatprep.subr.mxu0 0.0
      %1557 = vmatpush1.xpose.msra.mxu0 0.0
      %1558 = vmatprep.subr.mxu0 0.0
      %1559 = vmatpush1.xpose.msra.mxu0 0.0
      %1560 = vmatprep.subr.mxu0 0.0
      %1561 = vmatpush1.xpose.msra.mxu0 0.0
      %1562 = vmatprep.subr.mxu0 0.0
      %1563 = vmatpush1.xpose.msra.mxu0 0.0
      %1564 = vmatprep.subr.mxu0 0.0
      %1565 = vmatpush1.xpose.msra.mxu0 0.0
      %1566 = vmatprep.subr.mxu0 0.0
      %1567 = vmatpush1.xpose.msra.mxu0 0.0
      %1568 = vmatprep.mubr.f32.mxu0 0.0
      %1569 = vmatmul.mubr.f32.gmra.mrb[0].mxu0 %v1496
      %v1570 = vpop.f32.mrb[0].mxu0
      %v1571 = vadd.f32 0.0, %v1570
      %v1572 = vpop.f32.mrb[0].mxu0
      %1573 = vmatprep.mubr.f32.mxu0 0.0
      %1574 = vmatmul.mubr.f32.gmra.mrb[0].mxu0 %v1498
      %v1575 = vpop.f32.mrb[0].mxu0
      %v1576 = vadd.f32 0.0, %v1575
      %v1577 = vpop.f32.mrb[0].mxu0
      %1578 = vdwg.mxu0
      %v1579 = vsel %vm606, %v1571, 0.0
      %v1580 = vsel %vm607, %v1576, 0.0
      %s1581 = scalar_lea.vmem [#allocation2], 16
      %v1582 = vld [vmem:[%s1581] sm:$0xff]
      %1583 = vmatprep.subr.mxu0 0.0
      %1584 = vmatpush1.msra.mxu0 %v1582
      %1585 = vmatprep.subr.mxu0 0.0
      %1586 = vmatpush1.msra.mxu0 0.0
      %1587 = vmatprep.subr.mxu0 0.0
      %1588 = vmatpush1.msra.mxu0 0.0
      %1589 = vmatprep.subr.mxu0 0.0
      %1590 = vmatpush1.msra.mxu0 0.0
      %1591 = vmatprep.subr.mxu0 0.0
      %1592 = vmatpush1.msra.mxu0 0.0
      %1593 = vmatprep.subr.mxu0 0.0
      %1594 = vmatpush1.msra.mxu0 0.0
      %1595 = vmatprep.subr.mxu0 0.0
      %1596 = vmatpush1.msra.mxu0 0.0
      %1597 = vmatprep.subr.mxu0 0.0
      %1598 = vmatpush1.msra.mxu0 0.0
      %1599 = vmatprep.subr.mxu0 0.0
      %1600 = vmatpush1.msra.mxu0 0.0
      %1601 = vmatprep.subr.mxu0 0.0
      %1602 = vmatpush1.msra.mxu0 0.0
      %1603 = vmatprep.subr.mxu0 0.0
      %1604 = vmatpush1.msra.mxu0 0.0
      %1605 = vmatprep.subr.mxu0 0.0
      %1606 = vmatpush1.msra.mxu0 0.0
      %1607 = vmatprep.subr.mxu0 0.0
      %1608 = vmatpush1.msra.mxu0 0.0
      %1609 = vmatprep.subr.mxu0 0.0
      %1610 = vmatpush1.msra.mxu0 0.0
      %1611 = vmatprep.subr.mxu0 0.0
      %1612 = vmatpush1.msra.mxu0 0.0
      %1613 = vmatprep.subr.mxu0 0.0
      %1614 = vmatpush1.msra.mxu0 0.0
      %1615 = vmatprep.subr.mxu0 0.0
      %1616 = vmatpush1.msra.mxu0 0.0
      %1617 = vmatprep.subr.mxu0 0.0
      %1618 = vmatpush1.msra.mxu0 0.0
      %1619 = vmatprep.subr.mxu0 0.0
      %1620 = vmatpush1.msra.mxu0 0.0
      %1621 = vmatprep.subr.mxu0 0.0
      %1622 = vmatpush1.msra.mxu0 0.0
      %1623 = vmatprep.subr.mxu0 0.0
      %1624 = vmatpush1.msra.mxu0 0.0
      %1625 = vmatprep.subr.mxu0 0.0
      %1626 = vmatpush1.msra.mxu0 0.0
      %1627 = vmatprep.subr.mxu0 0.0
      %1628 = vmatpush1.msra.mxu0 0.0
      %1629 = vmatprep.subr.mxu0 0.0
      %1630 = vmatpush1.msra.mxu0 0.0
      %1631 = vmatprep.subr.mxu0 0.0
      %1632 = vmatpush1.msra.mxu0 0.0
      %1633 = vmatprep.subr.mxu0 0.0
      %1634 = vmatpush1.msra.mxu0 0.0
      %1635 = vmatprep.subr.mxu0 0.0
      %1636 = vmatpush1.msra.mxu0 0.0
      %1637 = vmatprep.subr.mxu0 0.0
      %1638 = vmatpush1.msra.mxu0 0.0
      %1639 = vmatprep.subr.mxu0 0.0
      %1640 = vmatpush1.msra.mxu0 0.0
      %1641 = vmatprep.subr.mxu0 0.0
      %1642 = vmatpush1.msra.mxu0 0.0
      %1643 = vmatprep.subr.mxu0 0.0
      %1644 = vmatpush1.msra.mxu0 0.0
      %1645 = vmatprep.subr.mxu0 0.0
      %1646 = vmatpush1.msra.mxu0 0.0
      %1647 = vmatprep.mubr.f32.mxu0 0.0
      %1648 = vmatmul.mubr.f32.gmra.mrb[0].mxu0 %v1496
      %v1649 = vpop.f32.mrb[0].mxu0
      %v1650 = vadd.f32 0.0, %v1649
      %v1651 = vpop.f32.mrb[0].mxu0
      %1652 = vmatprep.mubr.f32.mxu0 0.0
      %1653 = vmatmul.mubr.f32.gmra.mrb[0].mxu0 %v1498
      %v1654 = vpop.f32.mrb[0].mxu0
      %v1655 = vadd.f32 0.0, %v1654
      %v1656 = vpop.f32.mrb[0].mxu0
      %1657 = vdwg.mxu0
      %1658 = vrot.lane.b32.xlu0 %v581, 48
      %v1659 = vpop.permute.xlu0 %1658
      %1660 = vrot.lane.b32.xlu0 %v586, 48
      %v1661 = vpop.permute.xlu0 %1660
      %v1665 = vsel %vm784, %v1579, 0
      %v1668 = vsel %vm784, %v1580, 0
      %1670 = vmatprep.subr.mxu0 0.0
      %1671 = vmatpush1.msra.mxu0 %v1659
      %1672 = vmatprep.subr.mxu0 0.0
      %1673 = vmatpush1.msra.mxu0 %v1661
      %1674 = vmatprep.subr.mxu0 0.0
      %1675 = vmatpush1.msra.mxu0 0.0
      %1676 = vmatprep.subr.mxu0 0.0
      %1677 = vmatpush1.msra.mxu0 0.0
      %1678 = vmatprep.subr.mxu0 0.0
      %1679 = vmatpush1.msra.mxu0 0.0
      %1680 = vmatprep.subr.mxu0 0.0
      %1681 = vmatpush1.msra.mxu0 0.0
      %1682 = vmatprep.subr.mxu0 0.0
      %1683 = vmatpush1.msra.mxu0 0.0
      %1684 = vmatprep.subr.mxu0 0.0
      %1685 = vmatpush1.msra.mxu0 0.0
      %1686 = vmatprep.subr.mxu0 0.0
      %1687 = vmatpush1.msra.mxu0 0.0
      %1688 = vmatprep.subr.mxu0 0.0
      %1689 = vmatpush1.msra.mxu0 0.0
      %1690 = vmatprep.subr.mxu0 0.0
      %1691 = vmatpush1.msra.mxu0 0.0
      %1692 = vmatprep.subr.mxu0 0.0
      %1693 = vmatpush1.msra.mxu0 0.0
      %1694 = vmatprep.subr.mxu0 0.0
      %1695 = vmatpush1.msra.mxu0 0.0
      %1696 = vmatprep.subr.mxu0 0.0
      %1697 = vmatpush1.msra.mxu0 0.0
      %1698 = vmatprep.subr.mxu0 0.0
      %1699 = vmatpush1.msra.mxu0 0.0
      %1700 = vmatprep.subr.mxu0 0.0
      %1701 = vmatpush1.msra.mxu0 0.0
      %1702 = vmatprep.subr.mxu0 0.0
      %1703 = vmatpush1.msra.mxu0 0.0
      %1704 = vmatprep.subr.mxu0 0.0
      %1705 = vmatpush1.msra.mxu0 0.0
      %1706 = vmatprep.subr.mxu0 0.0
      %1707 = vmatpush1.msra.mxu0 0.0
      %1708 = vmatprep.subr.mxu0 0.0
      %1709 = vmatpush1.msra.mxu0 0.0
      %1710 = vmatprep.subr.mxu0 0.0
      %1711 = vmatpush1.msra.mxu0 0.0
      %1712 = vmatprep.subr.mxu0 0.0
      %1713 = vmatpush1.msra.mxu0 0.0
      %1714 = vmatprep.subr.mxu0 0.0
      %1715 = vmatpush1.msra.mxu0 0.0
      %1716 = vmatprep.subr.mxu0 0.0
      %1717 = vmatpush1.msra.mxu0 0.0
      %1718 = vmatprep.subr.mxu0 0.0
      %1719 = vmatpush1.msra.mxu0 0.0
      %1720 = vmatprep.subr.mxu0 0.0
      %1721 = vmatpush1.msra.mxu0 0.0
      %1722 = vmatprep.subr.mxu0 0.0
      %1723 = vmatpush1.msra.mxu0 0.0
      %1724 = vmatprep.subr.mxu0 0.0
      %1725 = vmatpush1.msra.mxu0 0.0
      %1726 = vmatprep.subr.mxu0 0.0
      %1727 = vmatpush1.msra.mxu0 0.0
      %1728 = vmatprep.subr.mxu0 0.0
      %1729 = vmatpush1.msra.mxu0 0.0
      %1730 = vmatprep.subr.mxu0 0.0
      %1731 = vmatpush1.msra.mxu0 0.0
      %1732 = vmatprep.subr.mxu0 0.0
      %1733 = vmatpush1.msra.mxu0 0.0
      %1734 = vmatprep.mubr.f32.mxu0 0.0
      %1735 = vmatmul.mubr.f32.gmra.mrb[0].mxu0 %v1665
      %v1736 = vpop.f32.mrb[0].mxu0
      %v1737 = vadd.f32 %v1650, %v1736
      %v1738 = vpop.f32.mrb[0].mxu0
      %1739 = vmatprep.mubr.f32.mxu0 0.0
      %1740 = vmatmul.mubr.f32.gmra.mrb[0].mxu0 %v1668
      %v1741 = vpop.f32.mrb[0].mxu0
      %v1742 = vadd.f32 %v1655, %v1741
      %v1743 = vpop.f32.mrb[0].mxu0
      %1744 = vdwg.mxu0
      %v1745 = vsel %vm784, %v1579, 0.0
      %1746 = vadd.xlane.f32.xlu0 %v1745
      %v1747 = vpop.xlane.xlu0 %1746
      %v1748 = vsel %vm784, %v1580, 0.0
      %1749 = vadd.xlane.f32.xlu0 %v1748
      %v1750 = vpop.xlane.xlu0 %1749
      %s1751 = scalar_lea.vmem [#allocation3], 2
      %v1752 = vld [vmem:[%s1751] sm:$0x1]
      %v1754 = vlaneseq
      %v1755 = vshrl.u32 %v1754, 7
      %v1756 = vsub.s32 0, %v1755
      %v1757 = vrot.slane %v1752, %v1756
      %1758 = vrot.lane.b32.xlu0 %v1757, 16
      %v1759 = vpop.permute.xlu0 %1758
      %v1761 = vmul.f32 %v599, %v1759
      %v1762 = vmul.f32 %v600, %v1759
      %1765 = vrot.lane.b32.xlu0 %v1761, 112
      %v1766 = vpop.permute.xlu0 %1765
      %1767 = vrot.lane.b32.xlu0 %v1762, 112
      %v1768 = vpop.permute.xlu0 %1767
      %v1771 = vsel %vm614, %v1766, 0.0
      %1772 = vadd.xlane.f32.xlu0 %v1771
      %v1773 = vpop.xlane.xlu0 %1772
      %v1774 = vsel %vm614, %v1768, 0.0
      %1775 = vadd.xlane.f32.xlu0 %v1774
      %v1776 = vpop.xlane.xlu0 %1775
      %v1777 = vadd.f32 %v1747, %v1773
      %v1778 = vadd.f32 %v1750, %v1776
      %v1779 = vadd.f32 %v1777, 1e-06
      %v1780 = vadd.f32 %v1778, 1e-06
      %v1781 = vrcp.pop %v1779
      %v1782 = vrcp.pop %v1780
      %v1783 = vmul.f32 %v1737, %v1781
      %v1784 = vmul.f32 %v1742, %v1782
      %1787 = vrot.lane.b32.xlu0 %v1783, 16
      %v1788 = vpop.permute.xlu0 %1787
      %1789 = vrot.lane.b32.xlu0 %v1784, 16
      %v1790 = vpop.permute.xlu0 %1789
      %vm1793 = vcmask 195712
      %1794 = vst.msk [vmem:[#allocation4] sm:$0xff] %vm1793, %v1788
      %1795 = vst.msk [vmem:[#allocation4 + $0x8] sm:$0xff] %vm1793, %v1790
      %v1796 = vld [vmem:[%s1581] sm:$0xff]
      %1799 = vxpose.xlu0.b32.start [1/16] %v1493, 128
      %1800 = vxpose.xlu0.b32.cont [2/16] %v1495, 128
      %1801 = vxpose.xlu0.b32.cont [3/16] 0.0, 128
      %1802 = vxpose.xlu0.b32.cont [4/16] 0.0, 128
      %1803 = vxpose.xlu0.b32.cont [5/16] 0.0, 128
      %1804 = vxpose.xlu0.b32.cont [6/16] 0.0, 128
      %1805 = vxpose.xlu0.b32.cont [7/16] 0.0, 128
      %1806 = vxpose.xlu0.b32.cont [8/16] 0.0, 128
      %1807 = vxpose.xlu0.b32.cont [9/16] 0.0, 128
      %1808 = vxpose.xlu0.b32.cont [10/16] 0.0, 128
      %1809 = vxpose.xlu0.b32.cont [11/16] 0.0, 128
      %1810 = vxpose.xlu0.b32.cont [12/16] 0.0, 128
      %1811 = vxpose.xlu0.b32.cont [13/16] 0.0, 128
      %1812 = vxpose.xlu0.b32.cont [14/16] 0.0, 128
      %1813 = vxpose.xlu0.b32.cont [15/16] 0.0, 128
      %1814 = vxpose.xlu0.b32.end [16/16] 0.0, 128
      %v1815 = vpop.trf.xlu0
      %v1816 = vpop.trf.xlu0
      %v1817 = vpop.trf.xlu0
      %v1818 = vpop.trf.xlu0
      %v1819 = vpop.trf.xlu0
      %v1820 = vpop.trf.xlu0
      %v1821 = vpop.trf.xlu0
      %v1822 = vpop.trf.xlu0
      %v1823 = vpop.trf.xlu0
      %v1824 = vpop.trf.xlu0
      %v1825 = vpop.trf.xlu0
      %v1826 = vpop.trf.xlu0
      %v1827 = vpop.trf.xlu0
      %v1828 = vpop.trf.xlu0
      %v1829 = vpop.trf.xlu0
      %v1830 = vpop.trf.xlu0
      %v1832 = vsel %vm784, %v1815, 0
      %1834 = vmatprep.subr.mxu0 0.0
      %1835 = vmatpush1.msra.mxu0 %v1659
      %1836 = vmatprep.subr.mxu0 0.0
      %1837 = vmatpush1.msra.mxu0 %v1661
      %1838 = vmatprep.subr.mxu0 0.0
      %1839 = vmatpush1.msra.mxu0 0.0
      %1840 = vmatprep.subr.mxu0 0.0
      %1841 = vmatpush1.msra.mxu0 0.0
      %1842 = vmatprep.subr.mxu0 0.0
      %1843 = vmatpush1.msra.mxu0 0.0
      %1844 = vmatprep.subr.mxu0 0.0
      %1845 = vmatpush1.msra.mxu0 0.0
      %1846 = vmatprep.subr.mxu0 0.0
      %1847 = vmatpush1.msra.mxu0 0.0
      %1848 = vmatprep.subr.mxu0 0.0
      %1849 = vmatpush1.msra.mxu0 0.0
      %1850 = vmatprep.subr.mxu0 0.0
      %1851 = vmatpush1.msra.mxu0 0.0
      %1852 = vmatprep.subr.mxu0 0.0
      %1853 = vmatpush1.msra.mxu0 0.0
      %1854 = vmatprep.subr.mxu0 0.0
      %1855 = vmatpush1.msra.mxu0 0.0
      %1856 = vmatprep.subr.mxu0 0.0
      %1857 = vmatpush1.msra.mxu0 0.0
      %1858 = vmatprep.subr.mxu0 0.0
      %1859 = vmatpush1.msra.mxu0 0.0
      %1860 = vmatprep.subr.mxu0 0.0
      %1861 = vmatpush1.msra.mxu0 0.0
      %1862 = vmatprep.subr.mxu0 0.0
      %1863 = vmatpush1.msra.mxu0 0.0
      %1864 = vmatprep.subr.mxu0 0.0
      %1865 = vmatpush1.msra.mxu0 0.0
      %1866 = vmatprep.subr.mxu0 0.0
      %1867 = vmatpush1.msra.mxu0 0.0
      %1868 = vmatprep.subr.mxu0 0.0
      %1869 = vmatpush1.msra.mxu0 0.0
      %1870 = vmatprep.subr.mxu0 0.0
      %1871 = vmatpush1.msra.mxu0 0.0
      %1872 = vmatprep.subr.mxu0 0.0
      %1873 = vmatpush1.msra.mxu0 0.0
      %1874 = vmatprep.subr.mxu0 0.0
      %1875 = vmatpush1.msra.mxu0 0.0
      %1876 = vmatprep.subr.mxu0 0.0
      %1877 = vmatpush1.msra.mxu0 0.0
      %1878 = vmatprep.subr.mxu0 0.0
      %1879 = vmatpush1.msra.mxu0 0.0
      %1880 = vmatprep.subr.mxu0 0.0
      %1881 = vmatpush1.msra.mxu0 0.0
      %1882 = vmatprep.subr.mxu0 0.0
      %1883 = vmatpush1.msra.mxu0 0.0
      %1884 = vmatprep.subr.mxu0 0.0
      %1885 = vmatpush1.msra.mxu0 0.0
      %1886 = vmatprep.subr.mxu0 0.0
      %1887 = vmatpush1.msra.mxu0 0.0
      %1888 = vmatprep.subr.mxu0 0.0
      %1889 = vmatpush1.msra.mxu0 0.0
      %1890 = vmatprep.subr.mxu0 0.0
      %1891 = vmatpush1.msra.mxu0 0.0
      %1892 = vmatprep.subr.mxu0 0.0
      %1893 = vmatpush1.msra.mxu0 0.0
      %1894 = vmatprep.subr.mxu0 0.0
      %1895 = vmatpush1.msra.mxu0 0.0
      %1896 = vmatprep.subr.mxu0 0.0
      %1897 = vmatpush1.msra.mxu0 0.0
      %1898 = vmatprep.mubr.f32.mxu0 0.0
      %1899 = vmatmul.mubr.f32.gmra.mrb[0].mxu0 %v1832
      %v1900 = vpop.f32.mrb[0].mxu0
      %v1901 = vadd.f32 0.0, %v1900
      %v1902 = vpop.f32.mrb[0].mxu0
      %1903 = vdwg.mxu0
      %v1904 = vadd.f32 %v1796, %v1901
      %1905 = vst.msk [vmem:[%s1581] sm:$0xff] %vm614, %v1904
      %v1906 = vld [vmem:[%s1751] sm:$0x1]
      %vm1907 = vcmask 458112
      %v1908 = vsel %vm1907, %v599, 0.0
      %v1909 = vsel %vm1907, %v600, 0.0
      %v1910 = vadd.f32 %v1908, %v1909
      %v1911 = vrot.slane %v1910, 4
      %v1912 = vadd.f32 %v1910, %v1911
      %v1913 = vrot.slane %v1912, 2
      %v1914 = vadd.f32 %v1912, %v1913
      %v1915 = vrot.slane %v1914, 1
      %v1916 = vadd.f32 %v1914, %v1915
      %v1919 = vunpack.c.l.s4 1966171168
      %v1920 = vunpack.c.0.s8 %v1919
      %v1921 = vlaneseq
      %v1922 = vshrl.u32 %v1921, 7
      %v1923 = vsub.s32 %v1920, %v1922
      %v1924 = vrot.slane %v1916, %v1923
      %v1926 = vunpack.c.l.s4 1966171168
      %v1927 = vunpack.c.0.s8 %v1926
      %v1928 = vlaneseq
      %v1929 = vshrl.u32 %v1928, 7
      %v1930 = vsub.s32 %v1927, %v1929
      %v1931 = vrot.slane %v1924, %v1930
      %1932 = vrot.lane.b32.xlu0 %v1931, 80
      %v1933 = vpop.permute.xlu0 %1932
      %v1935 = vadd.f32 %v1906, %v1933
      %1936 = vst.msk [vmem:[%s1751] sm:$0x1] %vm1037, %v1935
      %1937 = vrot.lane.b32.xlu0 %v599, 104
      %v1938 = vpop.permute.xlu0 %1937
      %1939 = vrot.lane.b32.xlu0 %v600, 104
      %v1940 = vpop.permute.xlu0 %1939
      %1941 = vrot.lane.b32.xlu0 %v599, 72
      %v1942 = vpop.permute.xlu0 %1941
      %1943 = vrot.lane.b32.xlu0 %v600, 72
      %v1944 = vpop.permute.xlu0 %1943
      %v1945 = vsel %vm614, %v1938, 0
      %v1947 = vsel %vm614, %v1940, 0
      %v1949 = vsel %vm614, %v1942, 0
      %v1951 = vsel %vm614, %v1944, 0
      %1953 = vmatprep.subr.mxu0 0.0
      %1954 = vmatpush1.xpose.msra.mxu0 %v1949
      %1955 = vmatprep.subr.mxu0 0.0
      %1956 = vmatpush1.xpose.msra.mxu0 %v1951
      %1957 = vmatprep.subr.mxu0 0.0
      %1958 = vmatpush1.xpose.msra.mxu0 0.0
      %1959 = vmatprep.subr.mxu0 0.0
      %1960 = vmatpush1.xpose.msra.mxu0 0.0
      %1961 = vmatprep.subr.mxu0 0.0
      %1962 = vmatpush1.xpose.msra.mxu0 0.0
      %1963 = vmatprep.subr.mxu0 0.0
      %1964 = vmatpush1.xpose.msra.mxu0 0.0
      %1965 = vmatprep.subr.mxu0 0.0
      %1966 = vmatpush1.xpose.msra.mxu0 0.0
      %1967 = vmatprep.subr.mxu0 0.0
      %1968 = vmatpush1.xpose.msra.mxu0 0.0
      %1969 = vmatprep.subr.mxu0 0.0
      %1970 = vmatpush1.xpose.msra.mxu0 0.0
      %1971 = vmatprep.subr.mxu0 0.0
      %1972 = vmatpush1.xpose.msra.mxu0 0.0
      %1973 = vmatprep.subr.mxu0 0.0
      %1974 = vmatpush1.xpose.msra.mxu0 0.0
      %1975 = vmatprep.subr.mxu0 0.0
      %1976 = vmatpush1.xpose.msra.mxu0 0.0
      %1977 = vmatprep.subr.mxu0 0.0
      %1978 = vmatpush1.xpose.msra.mxu0 0.0
      %1979 = vmatprep.subr.mxu0 0.0
      %1980 = vmatpush1.xpose.msra.mxu0 0.0
      %1981 = vmatprep.subr.mxu0 0.0
      %1982 = vmatpush1.xpose.msra.mxu0 0.0
      %1983 = vmatprep.subr.mxu0 0.0
      %1984 = vmatpush1.xpose.msra.mxu0 0.0
      %1985 = vmatprep.subr.mxu0 0.0
      %1986 = vmatpush1.xpose.msra.mxu0 0.0
      %1987 = vmatprep.subr.mxu0 0.0
      %1988 = vmatpush1.xpose.msra.mxu0 0.0
      %1989 = vmatprep.subr.mxu0 0.0
      %1990 = vmatpush1.xpose.msra.mxu0 0.0
      %1991 = vmatprep.subr.mxu0 0.0
      %1992 = vmatpush1.xpose.msra.mxu0 0.0
      %1993 = vmatprep.subr.mxu0 0.0
      %1994 = vmatpush1.xpose.msra.mxu0 0.0
      %1995 = vmatprep.subr.mxu0 0.0
      %1996 = vmatpush1.xpose.msra.mxu0 0.0
      %1997 = vmatprep.subr.mxu0 0.0
      %1998 = vmatpush1.xpose.msra.mxu0 0.0
      %1999 = vmatprep.subr.mxu0 0.0
      %2000 = vmatpush1.xpose.msra.mxu0 0.0
      %2001 = vmatprep.subr.mxu0 0.0
      %2002 = vmatpush1.xpose.msra.mxu0 0.0
      %2003 = vmatprep.subr.mxu0 0.0
      %2004 = vmatpush1.xpose.msra.mxu0 0.0
      %2005 = vmatprep.subr.mxu0 0.0
      %2006 = vmatpush1.xpose.msra.mxu0 0.0
      %2007 = vmatprep.subr.mxu0 0.0
      %2008 = vmatpush1.xpose.msra.mxu0 0.0
      %2009 = vmatprep.subr.mxu0 0.0
      %2010 = vmatpush1.xpose.msra.mxu0 0.0
      %2011 = vmatprep.subr.mxu0 0.0
      %2012 = vmatpush1.xpose.msra.mxu0 0.0
      %2013 = vmatprep.subr.mxu0 0.0
      %2014 = vmatpush1.xpose.msra.mxu0 0.0
      %2015 = vmatprep.subr.mxu0 0.0
      %2016 = vmatpush1.xpose.msra.mxu0 0.0
      %2017 = vmatprep.mubr.f32.mxu0 0.0
      %2018 = vmatmul.mubr.f32.gmra.mrb[0].mxu0 %v1945
      %v2019 = vpop.f32.mrb[0].mxu0
      %v2020 = vadd.f32 0.0, %v2019
      %v2021 = vpop.f32.mrb[0].mxu0
      %2022 = vmatprep.mubr.f32.mxu0 0.0
      %2023 = vmatmul.mubr.f32.gmra.mrb[0].mxu0 %v1947
      %v2024 = vpop.f32.mrb[0].mxu0
      %v2025 = vadd.f32 0.0, %v2024
      %v2026 = vpop.f32.mrb[0].mxu0
      %2027 = vdwg.mxu0
      %v2028 = vsel %vm606, %v2020, 0.0
      %v2029 = vsel %vm607, %v2025, 0.0
      %s2030 = scalar_lea.vmem [#allocation2], 24
      %v2031 = vld [vmem:[%s2030] sm:$0xff]
      %2032 = vmatprep.subr.mxu0 0.0
      %2033 = vmatpush1.msra.mxu0 %v2031
      %2034 = vmatprep.subr.mxu0 0.0
      %2035 = vmatpush1.msra.mxu0 0.0
      %2036 = vmatprep.subr.mxu0 0.0
      %2037 = vmatpush1.msra.mxu0 0.0
      %2038 = vmatprep.subr.mxu0 0.0
      %2039 = vmatpush1.msra.mxu0 0.0
      %2040 = vmatprep.subr.mxu0 0.0
      %2041 = vmatpush1.msra.mxu0 0.0
      %2042 = vmatprep.subr.mxu0 0.0
      %2043 = vmatpush1.msra.mxu0 0.0
      %2044 = vmatprep.subr.mxu0 0.0
      %2045 = vmatpush1.msra.mxu0 0.0
      %2046 = vmatprep.subr.mxu0 0.0
      %2047 = vmatpush1.msra.mxu0 0.0
      %2048 = vmatprep.subr.mxu0 0.0
      %2049 = vmatpush1.msra.mxu0 0.0
      %2050 = vmatprep.subr.mxu0 0.0
      %2051 = vmatpush1.msra.mxu0 0.0
      %2052 = vmatprep.subr.mxu0 0.0
      %2053 = vmatpush1.msra.mxu0 0.0
      %2054 = vmatprep.subr.mxu0 0.0
      %2055 = vmatpush1.msra.mxu0 0.0
      %2056 = vmatprep.subr.mxu0 0.0
      %2057 = vmatpush1.msra.mxu0 0.0
      %2058 = vmatprep.subr.mxu0 0.0
      %2059 = vmatpush1.msra.mxu0 0.0
      %2060 = vmatprep.subr.mxu0 0.0
      %2061 = vmatpush1.msra.mxu0 0.0
      %2062 = vmatprep.subr.mxu0 0.0
      %2063 = vmatpush1.msra.mxu0 0.0
      %2064 = vmatprep.subr.mxu0 0.0
      %2065 = vmatpush1.msra.mxu0 0.0
      %2066 = vmatprep.subr.mxu0 0.0
      %2067 = vmatpush1.msra.mxu0 0.0
      %2068 = vmatprep.subr.mxu0 0.0
      %2069 = vmatpush1.msra.mxu0 0.0
      %2070 = vmatprep.subr.mxu0 0.0
      %2071 = vmatpush1.msra.mxu0 0.0
      %2072 = vmatprep.subr.mxu0 0.0
      %2073 = vmatpush1.msra.mxu0 0.0
      %2074 = vmatprep.subr.mxu0 0.0
      %2075 = vmatpush1.msra.mxu0 0.0
      %2076 = vmatprep.subr.mxu0 0.0
      %2077 = vmatpush1.msra.mxu0 0.0
      %2078 = vmatprep.subr.mxu0 0.0
      %2079 = vmatpush1.msra.mxu0 0.0
      %2080 = vmatprep.subr.mxu0 0.0
      %2081 = vmatpush1.msra.mxu0 0.0
      %2082 = vmatprep.subr.mxu0 0.0
      %2083 = vmatpush1.msra.mxu0 0.0
      %2084 = vmatprep.subr.mxu0 0.0
      %2085 = vmatpush1.msra.mxu0 0.0
      %2086 = vmatprep.subr.mxu0 0.0
      %2087 = vmatpush1.msra.mxu0 0.0
      %2088 = vmatprep.subr.mxu0 0.0
      %2089 = vmatpush1.msra.mxu0 0.0
      %2090 = vmatprep.subr.mxu0 0.0
      %2091 = vmatpush1.msra.mxu0 0.0
      %2092 = vmatprep.subr.mxu0 0.0
      %2093 = vmatpush1.msra.mxu0 0.0
      %2094 = vmatprep.subr.mxu0 0.0
      %2095 = vmatpush1.msra.mxu0 0.0
      %2096 = vmatprep.mubr.f32.mxu0 0.0
      %2097 = vmatmul.mubr.f32.gmra.mrb[0].mxu0 %v1945
      %v2098 = vpop.f32.mrb[0].mxu0
      %v2099 = vadd.f32 0.0, %v2098
      %v2100 = vpop.f32.mrb[0].mxu0
      %2101 = vmatprep.mubr.f32.mxu0 0.0
      %2102 = vmatmul.mubr.f32.gmra.mrb[0].mxu0 %v1947
      %v2103 = vpop.f32.mrb[0].mxu0
      %v2104 = vadd.f32 0.0, %v2103
      %v2105 = vpop.f32.mrb[0].mxu0
      %2106 = vdwg.mxu0
      %2107 = vrot.lane.b32.xlu0 %v581, 40
      %v2108 = vpop.permute.xlu0 %2107
      %2109 = vrot.lane.b32.xlu0 %v586, 40
      %v2110 = vpop.permute.xlu0 %2109
      %v2114 = vsel %vm784, %v2028, 0
      %v2117 = vsel %vm784, %v2029, 0
      %2119 = vmatprep.subr.mxu0 0.0
      %2120 = vmatpush1.msra.mxu0 %v2108
      %2121 = vmatprep.subr.mxu0 0.0
      %2122 = vmatpush1.msra.mxu0 %v2110
      %2123 = vmatprep.subr.mxu0 0.0
      %2124 = vmatpush1.msra.mxu0 0.0
      %2125 = vmatprep.subr.mxu0 0.0
      %2126 = vmatpush1.msra.mxu0 0.0
      %2127 = vmatprep.subr.mxu0 0.0
      %2128 = vmatpush1.msra.mxu0 0.0
      %2129 = vmatprep.subr.mxu0 0.0
      %2130 = vmatpush1.msra.mxu0 0.0
      %2131 = vmatprep.subr.mxu0 0.0
      %2132 = vmatpush1.msra.mxu0 0.0
      %2133 = vmatprep.subr.mxu0 0.0
      %2134 = vmatpush1.msra.mxu0 0.0
      %2135 = vmatprep.subr.mxu0 0.0
      %2136 = vmatpush1.msra.mxu0 0.0
      %2137 = vmatprep.subr.mxu0 0.0
      %2138 = vmatpush1.msra.mxu0 0.0
      %2139 = vmatprep.subr.mxu0 0.0
      %2140 = vmatpush1.msra.mxu0 0.0
      %2141 = vmatprep.subr.mxu0 0.0
      %2142 = vmatpush1.msra.mxu0 0.0
      %2143 = vmatprep.subr.mxu0 0.0
      %2144 = vmatpush1.msra.mxu0 0.0
      %2145 = vmatprep.subr.mxu0 0.0
      %2146 = vmatpush1.msra.mxu0 0.0
      %2147 = vmatprep.subr.mxu0 0.0
      %2148 = vmatpush1.msra.mxu0 0.0
      %2149 = vmatprep.subr.mxu0 0.0
      %2150 = vmatpush1.msra.mxu0 0.0
      %2151 = vmatprep.subr.mxu0 0.0
      %2152 = vmatpush1.msra.mxu0 0.0
      %2153 = vmatprep.subr.mxu0 0.0
      %2154 = vmatpush1.msra.mxu0 0.0
      %2155 = vmatprep.subr.mxu0 0.0
      %2156 = vmatpush1.msra.mxu0 0.0
      %2157 = vmatprep.subr.mxu0 0.0
      %2158 = vmatpush1.msra.mxu0 0.0
      %2159 = vmatprep.subr.mxu0 0.0
      %2160 = vmatpush1.msra.mxu0 0.0
      %2161 = vmatprep.subr.mxu0 0.0
      %2162 = vmatpush1.msra.mxu0 0.0
      %2163 = vmatprep.subr.mxu0 0.0
      %2164 = vmatpush1.msra.mxu0 0.0
      %2165 = vmatprep.subr.mxu0 0.0
      %2166 = vmatpush1.msra.mxu0 0.0
      %2167 = vmatprep.subr.mxu0 0.0
      %2168 = vmatpush1.msra.mxu0 0.0
      %2169 = vmatprep.subr.mxu0 0.0
      %2170 = vmatpush1.msra.mxu0 0.0
      %2171 = vmatprep.subr.mxu0 0.0
      %2172 = vmatpush1.msra.mxu0 0.0
      %2173 = vmatprep.subr.mxu0 0.0
      %2174 = vmatpush1.msra.mxu0 0.0
      %2175 = vmatprep.subr.mxu0 0.0
      %2176 = vmatpush1.msra.mxu0 0.0
      %2177 = vmatprep.subr.mxu0 0.0
      %2178 = vmatpush1.msra.mxu0 0.0
      %2179 = vmatprep.subr.mxu0 0.0
      %2180 = vmatpush1.msra.mxu0 0.0
      %2181 = vmatprep.subr.mxu0 0.0
      %2182 = vmatpush1.msra.mxu0 0.0
      %2183 = vmatprep.mubr.f32.mxu0 0.0
      %2184 = vmatmul.mubr.f32.gmra.mrb[0].mxu0 %v2114
      %v2185 = vpop.f32.mrb[0].mxu0
      %v2186 = vadd.f32 %v2099, %v2185
      %v2187 = vpop.f32.mrb[0].mxu0
      %2188 = vmatprep.mubr.f32.mxu0 0.0
      %2189 = vmatmul.mubr.f32.gmra.mrb[0].mxu0 %v2117
      %v2190 = vpop.f32.mrb[0].mxu0
      %v2191 = vadd.f32 %v2104, %v2190
      %v2192 = vpop.f32.mrb[0].mxu0
      %2193 = vdwg.mxu0
      %v2194 = vsel %vm784, %v2028, 0.0
      %2195 = vadd.xlane.f32.xlu0 %v2194
      %v2196 = vpop.xlane.xlu0 %2195
      %v2197 = vsel %vm784, %v2029, 0.0
      %2198 = vadd.xlane.f32.xlu0 %v2197
      %v2199 = vpop.xlane.xlu0 %2198
      %s2200 = scalar_lea.vmem [#allocation3], 3
      %v2201 = vld [vmem:[%s2200] sm:$0x1]
      %v2203 = vlaneseq
      %v2204 = vshrl.u32 %v2203, 7
      %v2205 = vsub.s32 0, %v2204
      %v2206 = vrot.slane %v2201, %v2205
      %2207 = vrot.lane.b32.xlu0 %v2206, 24
      %v2208 = vpop.permute.xlu0 %2207
      %v2210 = vmul.f32 %v599, %v2208
      %v2211 = vmul.f32 %v600, %v2208
      %2214 = vrot.lane.b32.xlu0 %v2210, 104
      %v2215 = vpop.permute.xlu0 %2214
      %2216 = vrot.lane.b32.xlu0 %v2211, 104
      %v2217 = vpop.permute.xlu0 %2216
      %v2220 = vsel %vm614, %v2215, 0.0
      %2221 = vadd.xlane.f32.xlu0 %v2220
      %v2222 = vpop.xlane.xlu0 %2221
      %v2223 = vsel %vm614, %v2217, 0.0
      %2224 = vadd.xlane.f32.xlu0 %v2223
      %v2225 = vpop.xlane.xlu0 %2224
      %v2226 = vadd.f32 %v2196, %v2222
      %v2227 = vadd.f32 %v2199, %v2225
      %v2228 = vadd.f32 %v2226, 1e-06
      %v2229 = vadd.f32 %v2227, 1e-06
      %v2230 = vrcp.pop %v2228
      %v2231 = vrcp.pop %v2229
      %v2232 = vmul.f32 %v2186, %v2230
      %v2233 = vmul.f32 %v2191, %v2231
      %2236 = vrot.lane.b32.xlu0 %v2232, 24
      %v2237 = vpop.permute.xlu0 %2236
      %2238 = vrot.lane.b32.xlu0 %v2233, 24
      %v2239 = vpop.permute.xlu0 %2238
      %vm2242 = vcmask 261312
      %2243 = vst.msk [vmem:[#allocation4] sm:$0xff] %vm2242, %v2237
      %2244 = vst.msk [vmem:[#allocation4 + $0x8] sm:$0xff] %vm2242, %v2239
      %v2245 = vld [vmem:[%s2030] sm:$0xff]
      %2248 = vxpose.xlu0.b32.start [1/16] %v1942, 128
      %2249 = vxpose.xlu0.b32.cont [2/16] %v1944, 128
      %2250 = vxpose.xlu0.b32.cont [3/16] 0.0, 128
      %2251 = vxpose.xlu0.b32.cont [4/16] 0.0, 128
      %2252 = vxpose.xlu0.b32.cont [5/16] 0.0, 128
      %2253 = vxpose.xlu0.b32.cont [6/16] 0.0, 128
      %2254 = vxpose.xlu0.b32.cont [7/16] 0.0, 128
      %2255 = vxpose.xlu0.b32.cont [8/16] 0.0, 128
      %2256 = vxpose.xlu0.b32.cont [9/16] 0.0, 128
      %2257 = vxpose.xlu0.b32.cont [10/16] 0.0, 128
      %2258 = vxpose.xlu0.b32.cont [11/16] 0.0, 128
      %2259 = vxpose.xlu0.b32.cont [12/16] 0.0, 128
      %2260 = vxpose.xlu0.b32.cont [13/16] 0.0, 128
      %2261 = vxpose.xlu0.b32.cont [14/16] 0.0, 128
      %2262 = vxpose.xlu0.b32.cont [15/16] 0.0, 128
      %2263 = vxpose.xlu0.b32.end [16/16] 0.0, 128
      %v2264 = vpop.trf.xlu0
      %v2265 = vpop.trf.xlu0
      %v2266 = vpop.trf.xlu0
      %v2267 = vpop.trf.xlu0
      %v2268 = vpop.trf.xlu0
      %v2269 = vpop.trf.xlu0
      %v2270 = vpop.trf.xlu0
      %v2271 = vpop.trf.xlu0
      %v2272 = vpop.trf.xlu0
      %v2273 = vpop.trf.xlu0
      %v2274 = vpop.trf.xlu0
      %v2275 = vpop.trf.xlu0
      %v2276 = vpop.trf.xlu0
      %v2277 = vpop.trf.xlu0
      %v2278 = vpop.trf.xlu0
      %v2279 = vpop.trf.xlu0
      %v2281 = vsel %vm784, %v2264, 0
      %2283 = vmatprep.subr.mxu0 0.0
      %2284 = vmatpush1.msra.mxu0 %v2108
      %2285 = vmatprep.subr.mxu0 0.0
      %2286 = vmatpush1.msra.mxu0 %v2110
      %2287 = vmatprep.subr.mxu0 0.0
      %2288 = vmatpush1.msra.mxu0 0.0
      %2289 = vmatprep.subr.mxu0 0.0
      %2290 = vmatpush1.msra.mxu0 0.0
      %2291 = vmatprep.subr.mxu0 0.0
      %2292 = vmatpush1.msra.mxu0 0.0
      %2293 = vmatprep.subr.mxu0 0.0
      %2294 = vmatpush1.msra.mxu0 0.0
      %2295 = vmatprep.subr.mxu0 0.0
      %2296 = vmatpush1.msra.mxu0 0.0
      %2297 = vmatprep.subr.mxu0 0.0
      %2298 = vmatpush1.msra.mxu0 0.0
      %2299 = vmatprep.subr.mxu0 0.0
      %2300 = vmatpush1.msra.mxu0 0.0
      %2301 = vmatprep.subr.mxu0 0.0
      %2302 = vmatpush1.msra.mxu0 0.0
      %2303 = vmatprep.subr.mxu0 0.0
      %2304 = vmatpush1.msra.mxu0 0.0
      %2305 = vmatprep.subr.mxu0 0.0
      %2306 = vmatpush1.msra.mxu0 0.0
      %2307 = vmatprep.subr.mxu0 0.0
      %2308 = vmatpush1.msra.mxu0 0.0
      %2309 = vmatprep.subr.mxu0 0.0
      %2310 = vmatpush1.msra.mxu0 0.0
      %2311 = vmatprep.subr.mxu0 0.0
      %2312 = vmatpush1.msra.mxu0 0.0
      %2313 = vmatprep.subr.mxu0 0.0
      %2314 = vmatpush1.msra.mxu0 0.0
      %2315 = vmatprep.subr.mxu0 0.0
      %2316 = vmatpush1.msra.mxu0 0.0
      %2317 = vmatprep.subr.mxu0 0.0
      %2318 = vmatpush1.msra.mxu0 0.0
      %2319 = vmatprep.subr.mxu0 0.0
      %2320 = vmatpush1.msra.mxu0 0.0
      %2321 = vmatprep.subr.mxu0 0.0
      %2322 = vmatpush1.msra.mxu0 0.0
      %2323 = vmatprep.subr.mxu0 0.0
      %2324 = vmatpush1.msra.mxu0 0.0
      %2325 = vmatprep.subr.mxu0 0.0
      %2326 = vmatpush1.msra.mxu0 0.0
      %2327 = vmatprep.subr.mxu0 0.0
      %2328 = vmatpush1.msra.mxu0 0.0
      %2329 = vmatprep.subr.mxu0 0.0
      %2330 = vmatpush1.msra.mxu0 0.0
      %2331 = vmatprep.subr.mxu0 0.0
      %2332 = vmatpush1.msra.mxu0 0.0
      %2333 = vmatprep.subr.mxu0 0.0
      %2334 = vmatpush1.msra.mxu0 0.0
      %2335 = vmatprep.subr.mxu0 0.0
      %2336 = vmatpush1.msra.mxu0 0.0
      %2337 = vmatprep.subr.mxu0 0.0
      %2338 = vmatpush1.msra.mxu0 0.0
      %2339 = vmatprep.subr.mxu0 0.0
      %2340 = vmatpush1.msra.mxu0 0.0
      %2341 = vmatprep.subr.mxu0 0.0
      %2342 = vmatpush1.msra.mxu0 0.0
      %2343 = vmatprep.subr.mxu0 0.0
      %2344 = vmatpush1.msra.mxu0 0.0
      %2345 = vmatprep.subr.mxu0 0.0
      %2346 = vmatpush1.msra.mxu0 0.0
      %2347 = vmatprep.mubr.f32.mxu0 0.0
      %2348 = vmatmul.mubr.f32.gmra.mrb[0].mxu0 %v2281
      %v2349 = vpop.f32.mrb[0].mxu0
      %v2350 = vadd.f32 0.0, %v2349
      %v2351 = vpop.f32.mrb[0].mxu0
      %2352 = vdwg.mxu0
      %v2353 = vadd.f32 %v2245, %v2350
      %2354 = vst.msk [vmem:[%s2030] sm:$0xff] %vm614, %v2353
      %v2355 = vld [vmem:[%s2200] sm:$0x1]
      %vm2356 = vcmask 523712
      %v2357 = vsel %vm2356, %v599, 0.0
      %v2358 = vsel %vm2356, %v600, 0.0
      %v2359 = vadd.f32 %v2357, %v2358
      %v2360 = vrot.slane %v2359, 4
      %v2361 = vadd.f32 %v2359, %v2360
      %v2362 = vrot.slane %v2361, 2
      %v2363 = vadd.f32 %v2361, %v2362
      %v2364 = vrot.slane %v2363, 1
      %v2365 = vadd.f32 %v2363, %v2364
      %v2368 = vunpack.c.l.s4 1966171168
      %v2369 = vunpack.c.0.s8 %v2368
      %v2370 = vlaneseq
      %v2371 = vshrl.u32 %v2370, 7
      %v2372 = vsub.s32 %v2369, %v2371
      %v2373 = vrot.slane %v2365, %v2372
      %v2375 = vunpack.c.l.s4 1966171168
      %v2376 = vunpack.c.0.s8 %v2375
      %v2377 = vlaneseq
      %v2378 = vshrl.u32 %v2377, 7
      %v2379 = vsub.s32 %v2376, %v2378
      %v2380 = vrot.slane %v2373, %v2379
      %2381 = vrot.lane.b32.xlu0 %v2380, 72
      %v2382 = vpop.permute.xlu0 %2381
      %v2384 = vadd.f32 %v2355, %v2382
      %2385 = vst.msk [vmem:[%s2200] sm:$0x1] %vm1037, %v2384
      %v2386 = vld [vmem:[#allocation4] sm:$0xff]
      %v2387 = vld [vmem:[#allocation4 + $0x8] sm:$0xff]
      %v2388 = vld [vmem:[%s3] sm:$0xff]
      %v2389 = vld [vmem:[%s3 + $0x8] sm:$0xff]
      %v2390 = vld [vmem:[%s3 + $0x10] sm:$0xff]
      %v2391 = vld [vmem:[%s3 + $0x18] sm:$0xff]
      %v2392 = vld [vmem:[%s4] sm:$0x1]
      %v2394 = vlaneseq
      %v2395 = vshrl.u32 %v2394, 7
      %v2396 = vsub.s32 0, %v2395
      %v2397 = vrot.slane %v2392, %v2396
      %v2400 = vsel %vm507, %v2386, 0
      %v2403 = vsel %vm507, %v2387, 0
      %2405 = vmatprep.subr.mxu0 0.0
      %2406 = vmatpush1.msra.mxu0 %v2388
      %2407 = vmatprep.subr.mxu0 0.0
      %2408 = vmatpush1.msra.mxu0 %v2389
      %2409 = vmatprep.subr.mxu0 0.0
      %2410 = vmatpush1.msra.mxu0 %v2390
      %2411 = vmatprep.subr.mxu0 0.0
      %2412 = vmatpush1.msra.mxu0 %v2391
      %2413 = vmatprep.subr.mxu0 0.0
      %2414 = vmatpush1.msra.mxu0 0.0
      %2415 = vmatprep.subr.mxu0 0.0
      %2416 = vmatpush1.msra.mxu0 0.0
      %2417 = vmatprep.subr.mxu0 0.0
      %2418 = vmatpush1.msra.mxu0 0.0
      %2419 = vmatprep.subr.mxu0 0.0
      %2420 = vmatpush1.msra.mxu0 0.0
      %2421 = vmatprep.subr.mxu0 0.0
      %2422 = vmatpush1.msra.mxu0 0.0
      %2423 = vmatprep.subr.mxu0 0.0
      %2424 = vmatpush1.msra.mxu0 0.0
      %2425 = vmatprep.subr.mxu0 0.0
      %2426 = vmatpush1.msra.mxu0 0.0
      %2427 = vmatprep.subr.mxu0 0.0
      %2428 = vmatpush1.msra.mxu0 0.0
      %2429 = vmatprep.subr.mxu0 0.0
      %2430 = vmatpush1.msra.mxu0 0.0
      %2431 = vmatprep.subr.mxu0 0.0
      %2432 = vmatpush1.msra.mxu0 0.0
      %2433 = vmatprep.subr.mxu0 0.0
      %2434 = vmatpush1.msra.mxu0 0.0
      %2435 = vmatprep.subr.mxu0 0.0
      %2436 = vmatpush1.msra.mxu0 0.0
      %2437 = vmatprep.subr.mxu0 0.0
      %2438 = vmatpush1.msra.mxu0 0.0
      %2439 = vmatprep.subr.mxu0 0.0
      %2440 = vmatpush1.msra.mxu0 0.0
      %2441 = vmatprep.subr.mxu0 0.0
      %2442 = vmatpush1.msra.mxu0 0.0
      %2443 = vmatprep.subr.mxu0 0.0
      %2444 = vmatpush1.msra.mxu0 0.0
      %2445 = vmatprep.subr.mxu0 0.0
      %2446 = vmatpush1.msra.mxu0 0.0
      %2447 = vmatprep.subr.mxu0 0.0
      %2448 = vmatpush1.msra.mxu0 0.0
      %2449 = vmatprep.subr.mxu0 0.0
      %2450 = vmatpush1.msra.mxu0 0.0
      %2451 = vmatprep.subr.mxu0 0.0
      %2452 = vmatpush1.msra.mxu0 0.0
      %2453 = vmatprep.subr.mxu0 0.0
      %2454 = vmatpush1.msra.mxu0 0.0
      %2455 = vmatprep.subr.mxu0 0.0
      %2456 = vmatpush1.msra.mxu0 0.0
      %2457 = vmatprep.subr.mxu0 0.0
      %2458 = vmatpush1.msra.mxu0 0.0
      %2459 = vmatprep.subr.mxu0 0.0
      %2460 = vmatpush1.msra.mxu0 0.0
      %2461 = vmatprep.subr.mxu0 0.0
      %2462 = vmatpush1.msra.mxu0 0.0
      %2463 = vmatprep.subr.mxu0 0.0
      %2464 = vmatpush1.msra.mxu0 0.0
      %2465 = vmatprep.subr.mxu0 0.0
      %2466 = vmatpush1.msra.mxu0 0.0
      %2467 = vmatprep.subr.mxu0 0.0
      %2468 = vmatpush1.msra.mxu0 0.0
      %2469 = vmatprep.mubr.f32.mxu0 0.0
      %2470 = vmatmul.mubr.f32.gmra.mrb[0].mxu0 %v2400
      %v2471 = vpop.f32.mrb[0].mxu0
      %v2472 = vadd.f32 %v2397, %v2471
      %v2473 = vpop.f32.mrb[0].mxu0
      %2474 = vmatprep.mubr.f32.mxu0 0.0
      %2475 = vmatmul.mubr.f32.gmra.mrb[0].mxu0 %v2403
      %v2476 = vpop.f32.mrb[0].mxu0
      %v2477 = vadd.f32 %v2397, %v2476
      %v2478 = vpop.f32.mrb[0].mxu0
      %2479 = vdwg.mxu0
      %v2480 = vadd.f32 %v494, %v2472
      %v2481 = vadd.f32 %v495, %v2477
      %v2482 = vld [vmem:[%s5] sm:$0x1]
      %v2483 = vld [vmem:[%s6] sm:$0x1]
      %v2484 = vsel %vm507, %v2480, 0.0
      %2485 = vadd.xlane.f32.xlu0 %v2484
      %v2486 = vpop.xlane.xlu0 %2485
      %v2487 = vsel %vm507, %v2481, 0.0
      %2488 = vadd.xlane.f32.xlu0 %v2487
      %v2489 = vpop.xlane.xlu0 %2488
      %v2490 = vrcp.pop 32.0
      %v2491 = vmul.f32 %v2486, %v2490
      %v2492 = vmul.f32 %v2489, %v2490
      %v2493 = vsub.f32 %v2480, %v2491
      %v2494 = vsub.f32 %v2481, %v2492
      %v2495 = vmul.f32 %v2493, %v2493
      %v2496 = vmul.f32 %v2494, %v2494
      %v2497 = vsel %vm507, %v2495, 0.0
      %2498 = vadd.xlane.f32.xlu0 %v2497
      %v2499 = vpop.xlane.xlu0 %2498
      %v2500 = vsel %vm507, %v2496, 0.0
      %2501 = vadd.xlane.f32.xlu0 %v2500
      %v2502 = vpop.xlane.xlu0 %2501
      %v2503 = vmul.f32 %v2499, %v2490
      %v2504 = vmul.f32 %v2502, %v2490
      %v2505 = vadd.f32 %v2503, 1e-05
      %v2506 = vadd.f32 %v2504, 1e-05
      %v2507 = vrsqrt.pop %v2505
      %v2508 = vrsqrt.pop %v2506
      %v2509 = vmul.f32 %v2493, %v2507
      %v2510 = vmul.f32 %v2494, %v2508
      %v2512 = vlaneseq
      %v2513 = vshrl.u32 %v2512, 7
      %v2514 = vsub.s32 0, %v2513
      %v2515 = vrot.slane %v2482, %v2514
      %v2517 = vmul.f32 %v2509, %v2515
      %v2518 = vmul.f32 %v2510, %v2515
      %v2520 = vlaneseq
      %v2521 = vshrl.u32 %v2520, 7
      %v2522 = vsub.s32 0, %v2521
      %v2523 = vrot.slane %v2483, %v2522
      %v2525 = vadd.f32 %v2517, %v2523
      %v2526 = vadd.f32 %v2518, %v2523
      %v2527 = vld [vmem:[%s7] sm:$0xff]
      %v2528 = vld [vmem:[%s7 + $0x8] sm:$0xff]
      %v2529 = vld [vmem:[%s7 + $0x10] sm:$0xff]
      %v2530 = vld [vmem:[%s7 + $0x18] sm:$0xff]
      %v2531 = vld [vmem:[%s8] sm:$0x1]
      %v2533 = vlaneseq
      %v2534 = vshrl.u32 %v2533, 7
      %v2535 = vsub.s32 0, %v2534
      %v2536 = vrot.slane %v2531, %v2535
      %v2539 = vsel %vm507, %v2525, 0
      %v2542 = vsel %vm507, %v2526, 0
      %2544 = vmatprep.subr.mxu0 0.0
      %2545 = vmatpush1.msra.mxu0 %v2527
      %2546 = vmatprep.subr.mxu0 0.0
      %2547 = vmatpush1.msra.mxu0 %v2528
      %2548 = vmatprep.subr.mxu0 0.0
      %2549 = vmatpush1.msra.mxu0 %v2529
      %2550 = vmatprep.subr.mxu0 0.0
      %2551 = vmatpush1.msra.mxu0 %v2530
      %2552 = vmatprep.subr.mxu0 0.0
      %2553 = vmatpush1.msra.mxu0 0.0
      %2554 = vmatprep.subr.mxu0 0.0
      %2555 = vmatpush1.msra.mxu0 0.0
      %2556 = vmatprep.subr.mxu0 0.0
      %2557 = vmatpush1.msra.mxu0 0.0
      %2558 = vmatprep.subr.mxu0 0.0
      %2559 = vmatpush1.msra.mxu0 0.0
      %2560 = vmatprep.subr.mxu0 0.0
      %2561 = vmatpush1.msra.mxu0 0.0
      %2562 = vmatprep.subr.mxu0 0.0
      %2563 = vmatpush1.msra.mxu0 0.0
      %2564 = vmatprep.subr.mxu0 0.0
      %2565 = vmatpush1.msra.mxu0 0.0
      %2566 = vmatprep.subr.mxu0 0.0
      %2567 = vmatpush1.msra.mxu0 0.0
      %2568 = vmatprep.subr.mxu0 0.0
      %2569 = vmatpush1.msra.mxu0 0.0
      %2570 = vmatprep.subr.mxu0 0.0
      %2571 = vmatpush1.msra.mxu0 0.0
      %2572 = vmatprep.subr.mxu0 0.0
      %2573 = vmatpush1.msra.mxu0 0.0
      %2574 = vmatprep.subr.mxu0 0.0
      %2575 = vmatpush1.msra.mxu0 0.0
      %2576 = vmatprep.subr.mxu0 0.0
      %2577 = vmatpush1.msra.mxu0 0.0
      %2578 = vmatprep.subr.mxu0 0.0
      %2579 = vmatpush1.msra.mxu0 0.0
      %2580 = vmatprep.subr.mxu0 0.0
      %2581 = vmatpush1.msra.mxu0 0.0
      %2582 = vmatprep.subr.mxu0 0.0
      %2583 = vmatpush1.msra.mxu0 0.0
      %2584 = vmatprep.subr.mxu0 0.0
      %2585 = vmatpush1.msra.mxu0 0.0
      %2586 = vmatprep.subr.mxu0 0.0
      %2587 = vmatpush1.msra.mxu0 0.0
      %2588 = vmatprep.subr.mxu0 0.0
      %2589 = vmatpush1.msra.mxu0 0.0
      %2590 = vmatprep.subr.mxu0 0.0
      %2591 = vmatpush1.msra.mxu0 0.0
      %2592 = vmatprep.subr.mxu0 0.0
      %2593 = vmatpush1.msra.mxu0 0.0
      %2594 = vmatprep.subr.mxu0 0.0
      %2595 = vmatpush1.msra.mxu0 0.0
      %2596 = vmatprep.subr.mxu0 0.0
      %2597 = vmatpush1.msra.mxu0 0.0
      %2598 = vmatprep.subr.mxu0 0.0
      %2599 = vmatpush1.msra.mxu0 0.0
      %2600 = vmatprep.subr.mxu0 0.0
      %2601 = vmatpush1.msra.mxu0 0.0
      %2602 = vmatprep.subr.mxu0 0.0
      %2603 = vmatpush1.msra.mxu0 0.0
      %2604 = vmatprep.subr.mxu0 0.0
      %2605 = vmatpush1.msra.mxu0 0.0
      %2606 = vmatprep.subr.mxu0 0.0
      %2607 = vmatpush1.msra.mxu0 0.0
      %2608 = vmatprep.mubr.f32.mxu0 0.0
      %2609 = vmatmul.mubr.f32.gmra.mrb[0].mxu0 %v2539
      %v2610 = vpop.f32.mrb[0].mxu0
      %v2611 = vadd.f32 %v2536, %v2610
      %v2612 = vpop.f32.mrb[0].mxu0
      %2613 = vmatprep.mubr.f32.mxu0 0.0
      %2614 = vmatmul.mubr.f32.gmra.mrb[0].mxu0 %v2542
      %v2615 = vpop.f32.mrb[0].mxu0
      %v2616 = vadd.f32 %v2536, %v2615
      %v2617 = vpop.f32.mrb[0].mxu0
      %2618 = vdwg.mxu0
      %v2619 = vmul.f32 %v2611, 0.5
      %v2620 = vmul.f32 %v2616, 0.5
      %v2621 = vmul.f32 %v2611, 0.044715
      %v2622 = vmul.f32 %v2616, 0.044715
      %v2623 = vmul.f32 %v2621, %v2611
      %v2624 = vmul.f32 %v2622, %v2616
      %v2625 = vmul.f32 %v2623, %v2611
      %v2626 = vmul.f32 %v2624, %v2616
      %v2627 = vadd.f32 %v2611, %v2625
      %v2628 = vadd.f32 %v2616, %v2626
      %v2629 = vmul.f32 %v2627, 0.7978846
      %v2630 = vmul.f32 %v2628, 0.7978846
      %v2631 = vtanh.pop %v2629
      %v2632 = vtanh.pop %v2630
      %v2633 = vadd.f32 %v2631, 1.0
      %v2634 = vadd.f32 %v2632, 1.0
      %v2635 = vmul.f32 %v2619, %v2633
      %v2636 = vmul.f32 %v2620, %v2634
      %v2637 = vld [vmem:[%s9] sm:$0xff]
      %v2638 = vld [vmem:[%s9 + $0x8] sm:$0xff]
      %v2639 = vld [vmem:[%s9 + $0x10] sm:$0xff]
      %v2640 = vld [vmem:[%s9 + $0x18] sm:$0xff]
      %v2641 = vld [vmem:[%s9 + $0x20] sm:$0xff]
      %v2642 = vld [vmem:[%s9 + $0x28] sm:$0xff]
      %v2643 = vld [vmem:[%s9 + $0x30] sm:$0xff]
      %v2644 = vld [vmem:[%s9 + $0x38] sm:$0xff]
      %v2645 = vld [vmem:[%s9 + $0x40] sm:$0xff]
      %v2646 = vld [vmem:[%s9 + $0x48] sm:$0xff]
      %v2647 = vld [vmem:[%s9 + $0x50] sm:$0xff]
      %v2648 = vld [vmem:[%s9 + $0x58] sm:$0xff]
      %v2649 = vld [vmem:[%s9 + $0x60] sm:$0xff]
      %v2650 = vld [vmem:[%s9 + $0x68] sm:$0xff]
      %v2651 = vld [vmem:[%s9 + $0x70] sm:$0xff]
      %v2652 = vld [vmem:[%s9 + $0x78] sm:$0xff]
      %v2653 = vld [vmem:[%s10] sm:$0x1]
      %v2655 = vlaneseq
      %v2656 = vshrl.u32 %v2655, 7
      %v2657 = vsub.s32 0, %v2656
      %v2658 = vrot.slane %v2653, %v2657
      %2660 = vmatprep.subr.mxu0 0.0
      %2661 = vmatpush1.msra.mxu0 %v2637
      %2662 = vmatprep.subr.mxu0 0.0
      %2663 = vmatpush1.msra.mxu0 %v2638
      %2664 = vmatprep.subr.mxu0 0.0
      %2665 = vmatpush1.msra.mxu0 %v2639
      %2666 = vmatprep.subr.mxu0 0.0
      %2667 = vmatpush1.msra.mxu0 %v2640
      %2668 = vmatprep.subr.mxu0 0.0
      %2669 = vmatpush1.msra.mxu0 %v2641
      %2670 = vmatprep.subr.mxu0 0.0
      %2671 = vmatpush1.msra.mxu0 %v2642
      %2672 = vmatprep.subr.mxu0 0.0
      %2673 = vmatpush1.msra.mxu0 %v2643
      %2674 = vmatprep.subr.mxu0 0.0
      %2675 = vmatpush1.msra.mxu0 %v2644
      %2676 = vmatprep.subr.mxu0 0.0
      %2677 = vmatpush1.msra.mxu0 %v2645
      %2678 = vmatprep.subr.mxu0 0.0
      %2679 = vmatpush1.msra.mxu0 %v2646
      %2680 = vmatprep.subr.mxu0 0.0
      %2681 = vmatpush1.msra.mxu0 %v2647
      %2682 = vmatprep.subr.mxu0 0.0
      %2683 = vmatpush1.msra.mxu0 %v2648
      %2684 = vmatprep.subr.mxu0 0.0
      %2685 = vmatpush1.msra.mxu0 %v2649
      %2686 = vmatprep.subr.mxu0 0.0
      %2687 = vmatpush1.msra.mxu0 %v2650
      %2688 = vmatprep.subr.mxu0 0.0
      %2689 = vmatpush1.msra.mxu0 %v2651
      %2690 = vmatprep.subr.mxu0 0.0
      %2691 = vmatpush1.msra.mxu0 %v2652
      %2692 = vmatprep.subr.mxu0 0.0
      %2693 = vmatpush1.msra.mxu0 0.0
      %2694 = vmatprep.subr.mxu0 0.0
      %2695 = vmatpush1.msra.mxu0 0.0
      %2696 = vmatprep.subr.mxu0 0.0
      %2697 = vmatpush1.msra.mxu0 0.0
      %2698 = vmatprep.subr.mxu0 0.0
      %2699 = vmatpush1.msra.mxu0 0.0
      %2700 = vmatprep.subr.mxu0 0.0
      %2701 = vmatpush1.msra.mxu0 0.0
      %2702 = vmatprep.subr.mxu0 0.0
      %2703 = vmatpush1.msra.mxu0 0.0
      %2704 = vmatprep.subr.mxu0 0.0
      %2705 = vmatpush1.msra.mxu0 0.0
      %2706 = vmatprep.subr.mxu0 0.0
      %2707 = vmatpush1.msra.mxu0 0.0
      %2708 = vmatprep.subr.mxu0 0.0
      %2709 = vmatpush1.msra.mxu0 0.0
      %2710 = vmatprep.subr.mxu0 0.0
      %2711 = vmatpush1.msra.mxu0 0.0
      %2712 = vmatprep.subr.mxu0 0.0
      %2713 = vmatpush1.msra.mxu0 0.0
      %2714 = vmatprep.subr.mxu0 0.0
      %2715 = vmatpush1.msra.mxu0 0.0
      %2716 = vmatprep.subr.mxu0 0.0
      %2717 = vmatpush1.msra.mxu0 0.0
      %2718 = vmatprep.subr.mxu0 0.0
      %2719 = vmatpush1.msra.mxu0 0.0
      %2720 = vmatprep.subr.mxu0 0.0
      %2721 = vmatpush1.msra.mxu0 0.0
      %2722 = vmatprep.subr.mxu0 0.0
      %2723 = vmatpush1.msra.mxu0 0.0
      %2724 = vmatprep.mubr.f32.mxu0 0.0
      %2725 = vmatmul.mubr.f32.gmra.mrb[0].mxu0 %v2635
      %v2726 = vpop.f32.mrb[0].mxu0
      %v2727 = vadd.f32 %v2658, %v2726
      %v2728 = vpop.f32.mrb[0].mxu0
      %2729 = vmatprep.mubr.f32.mxu0 0.0
      %2730 = vmatmul.mubr.f32.gmra.mrb[0].mxu0 %v2636
      %v2731 = vpop.f32.mrb[0].mxu0
      %v2732 = vadd.f32 %v2658, %v2731
      %v2733 = vpop.f32.mrb[0].mxu0
      %2734 = vdwg.mxu0
      %v2735 = vadd.f32 %v2525, %v2727
      %v2736 = vadd.f32 %v2526, %v2732
      %v2737 = vld [vmem:[%s11] sm:$0x1]
      %v2738 = vld [vmem:[%s12] sm:$0x1]
      %v2739 = vsel %vm507, %v2735, 0.0
      %2740 = vadd.xlane.f32.xlu0 %v2739
      %v2741 = vpop.xlane.xlu0 %2740
      %v2742 = vsel %vm507, %v2736, 0.0
      %2743 = vadd.xlane.f32.xlu0 %v2742
      %v2744 = vpop.xlane.xlu0 %2743
      %v2745 = vmul.f32 %v2741, %v2490
      %v2746 = vmul.f32 %v2744, %v2490
      %v2747 = vsub.f32 %v2735, %v2745
      %v2748 = vsub.f32 %v2736, %v2746
      %v2749 = vmul.f32 %v2747, %v2747
      %v2750 = vmul.f32 %v2748, %v2748
      %v2751 = vsel %vm507, %v2749, 0.0
      %2752 = vadd.xlane.f32.xlu0 %v2751
      %v2753 = vpop.xlane.xlu0 %2752
      %v2754 = vsel %vm507, %v2750, 0.0
      %2755 = vadd.xlane.f32.xlu0 %v2754
      %v2756 = vpop.xlane.xlu0 %2755
      %v2757 = vmul.f32 %v2753, %v2490
      %v2758 = vmul.f32 %v2756, %v2490
      %v2759 = vadd.f32 %v2757, 1e-05
      %v2760 = vadd.f32 %v2758, 1e-05
      %v2761 = vrsqrt.pop %v2759
      %v2762 = vrsqrt.pop %v2760
      %v2763 = vmul.f32 %v2747, %v2761
      %v2764 = vmul.f32 %v2748, %v2762
      %v2766 = vlaneseq
      %v2767 = vshrl.u32 %v2766, 7
      %v2768 = vsub.s32 0, %v2767
      %v2769 = vrot.slane %v2737, %v2768
      %v2771 = vmul.f32 %v2763, %v2769
      %v2772 = vmul.f32 %v2764, %v2769
      %v2774 = vlaneseq
      %v2775 = vshrl.u32 %v2774, 7
      %v2776 = vsub.s32 0, %v2775
      %v2777 = vrot.slane %v2738, %v2776
      %v2779 = vadd.f32 %v2771, %v2777
      %v2780 = vadd.f32 %v2772, %v2777
      %2781 = vst.msk [vmem:[%s478] sm:$0xff] %vm507, %v2779
      %2782 = vst.msk [vmem:[%s478 + $0x8] sm:$0xff] %vm507, %v2780
      %s2783 = smul.u32 2, %s29
      %p2784 = scmp.lt.s32.totalorder %s28, 1
      %s2785 = scalar_select %p2784, %s28, 1
      %p2786 = scmp.lt.s32.totalorder %s2783, 7
      %s2787 = scalar_select %p2786, %s2783, 7
      %s2788 = smul.addr %s2785, 8
      %s2789 = sadd.s32 %s2787, %s2788
      %s2790 = smul.addr %s2789, 8
      %s2791 = scalar_lea.vmem %s13, %s2790
      // Predicated region
      $region77: #{tpu_custom_call.1} parent=71 // pred_check
        %p2792 = pneg %p336
      $region78: #{tpu_custom_call.1} parent=71 // pred_check_branch
        %2794 = sbr.rel (%p2792) target = $region80
      $region79: #{tpu_custom_call.1} parent=71 // pred_region
        %s2795 = smul.u32 2, %s29
      $region80: #{tpu_custom_call.1} parent=71 // pred_fallthru
        _
    $region72: #{tpu_custom_call.1} parent=5 // pred_fallthru
      _
    %p2796 = scmp.le.s32.totalorder 2, %s19
    // Predicated region
    $region81: #{tpu_custom_call.1} parent=5 // pred_check
      %p2797 = pneg %p2796
    $region82: #{tpu_custom_call.1} parent=5 // pred_check_branch
      %2799 = sbr.rel (%p2797) target = $region84
    $region83: #{tpu_custom_call.1} parent=5 // pred_region
      %s2800 = ssub.s32 %s19, 2
      // Predicated region
      $region85: #{tpu_custom_call.1} parent=83 // pred_check
        %p2801 = pneg %p342
      $region86: #{tpu_custom_call.1} parent=83 // pred_check_branch
        %2803 = sbr.rel (%p2801) target = $region88
      $region87: #{tpu_custom_call.1} parent=83 // pred_region
        %s2804 = smul.u32 2, %s31
        %p2805 = scmp.lt.s32.totalorder %s30, 1
        %s2806 = scalar_select %p2805, %s30, 1
        %p2807 = scmp.lt.s32.totalorder %s2804, 7
        %s2808 = scalar_select %p2807, %s2804, 7
        %s2809 = smul.addr %s2806, 8
        %s2810 = sadd.s32 %s2808, %s2809
        %s2811 = smul.addr %s2810, 8
        %s2812 = scalar_lea.vmem %s13, %s2811
      $region88: #{tpu_custom_call.1} parent=83 // pred_fallthru
        _
    $region84: #{tpu_custom_call.1} parent=5 // pred_fallthru
      _
  $region6: #{tpu_custom_call.1} parent=0 // loop_footer
    %s23 = sadd.s32 1, %s19
  $region7: #{tpu_custom_call.1} parent=0 // loop_footer_branch
    %18 = sbr.rel target = $region3
  $region8: #{tpu_custom_call.1} parent=0 // loop_exit
    _

</llo_original>
